<compile_context>
chip_gen: v7x
topology: tpu7x:2x2x1
jax: 0.10.0
libtpu: 0.0.40
codegen_flags: <defaults>
</compile_context>

<pallas_src>
import jax
import jax.numpy as jnp
from jax import lax
from jax.experimental import pallas as pl
from jax.experimental.pallas import tpu as pltpu


_VMEM_LIMIT_BYTES = 48 * 1024 * 1024   # explicit scoped-VMEM limit (<= v7x 64 MiB physical)
_VMEM_BUDGET_BYTES = 40 * 1024 * 1024  # tile-selection budget (pipeline blocks double-buffer)


def _round_up(x, m):
    return ((x + m - 1) // m) * m


# ----------------------------------------------------------------------------
# Pallas kernel: fused ResidualBlock (conv1 + downsample conv, conv2, add, relu)
# ----------------------------------------------------------------------------
def _resblock_kernel(x_ref, wf_ref, w2f_ref, bnb_ref, o_ref):
    # x_ref  : (1, TH+4, Wpad, Cin)   bf16  padded-x rows [t*TH-2, t*TH+TH+2)
    # wf_ref : (3, Cin, 3*2*Cout)     bf16  conv1+downsample, dy-major, dx folded into N,
    #                                       [wd_scaled | w1] inside each dx group
    # w2f_ref: (3, Cout, 3*Cout)      bf16  conv2, dx folded into N
    # bnb_ref: (1, Cout)              f32   downsample-path BN bias (eval mode)
    # o_ref  : (1, TH, W*Cout)        bf16  lane-dense output block
    _, _, Wpad, Cin = x_ref.shape
    _, TH, WC = o_ref.shape
    Cout = bnb_ref.shape[1]
    W = WC // Cout
    Wc = Wpad - 8            # h1 band width (multiple of 8, >= W + 2)
    R1 = TH + 2              # rows of the h1 band consumed by conv2
    CO2 = 2 * Cout

    t = pl.program_id(1)
    Himg = pl.num_programs(1) * TH

    x = x_ref[0]             # (TH+4, Wpad, Cin) bf16

    # ---- conv1 + downsample conv, fused on the output channels, dx folded ----
    # 3 MXU matmuls (one per dy) with N = 3*2*Cout instead of 18 narrow taps.
    acc = None
    for dy in range(3):
        m = x[dy:dy + R1].reshape(R1 * Wpad, Cin)      # Wpad % 8 == 0 -> trivial merge
        p = jnp.dot(m, wf_ref[dy], preferred_element_type=jnp.float32)
        acc = p if acc is None else acc + p
    A = acc.reshape(R1, Wpad, 3 * CO2)
    # recombine the three dx groups with 0/1/2-column sublane shifts + adds (XLU slot)
    fused = (A[:, 0:Wc, 0 * CO2:1 * CO2]
             + A[:, 1:Wc + 1, 1 * CO2:2 * CO2]
             + A[:, 2:Wc + 2, 2 * CO2:3 * CO2])        # (R1, Wc, 2*Cout)

    # [wd | w1] group order keeps the residual on the lane-prefix slice.
    res = fused[1:TH + 1, 1:W + 1, :Cout]              # downsample at output rows/cols
    h1 = fused[:, :, Cout:]                            # conv1 band (R1, Wc, Cout)

    # conv2 has padding=1: h1 outside the image must act as zeros.  Masks are built at
    # width 1 in the lane dim; the row test is only live on the first/last H tile, so
    # interior tiles effectively apply just the static column mask.
    row_g = t * TH - 1 + lax.broadcasted_iota(jnp.int32, (R1, Wc, 1), 0)
    col_g = lax.broadcasted_iota(jnp.int32, (R1, Wc, 1), 1)
    valid = (row_g >= 0) & (row_g < Himg) & (col_g >= 1) & (col_g <= W)
    h1m = jnp.where(valid, h1, 0.0).astype(jnp.bfloat16)   # (R1, Wc, Cout)

    # ---- conv2, dx folded (3 matmuls, N = 3*Cout) ----
    acc2 = None
    for dy in range(3):
        m = h1m[dy:dy + TH].reshape(TH * Wc, Cout)     # Wc % 8 == 0 -> trivial merge
        p = jnp.dot(m, w2f_ref[dy], preferred_element_type=jnp.float32)
        acc2 = p if acc2 is None else acc2 + p
    B = acc2.reshape(TH, Wc, 3 * Cout)
    h2 = (B[:, 0:W, 0 * Cout:1 * Cout]
          + B[:, 1:W + 1, 1 * Cout:2 * Cout]
          + B[:, 2:W + 2, 2 * Cout:3 * Cout])          # (TH, W, Cout)

    out = jnp.maximum(h2 + res + bnb_ref[...].reshape(1, 1, Cout), 0.0)
    # flatten (W, Cout) so the stored block is lane-dense (unmasked vst, bf16)
    o_ref[0] = out.reshape(TH, W * Cout).astype(o_ref.dtype)


def _pick_tile_h(N, H, W, Cin, Cout):
    """Largest H tile whose pipeline blocks + live f32 intermediates fit the VMEM budget."""
    Wc = _round_up(W + 2, 8)   # h1 band width
    Wpad = Wc + 8              # x band width (keeps the matmul M merge 8-sublane aligned)

    def vmem_estimate(TH):
        R1 = TH + 2
        blocks = (TH + 4) * Wpad * Cin * 2 + TH * W * Cout * 2            # bf16 in/out blocks
        weights = (3 * Cin * 6 * Cout + 3 * Cout * 3 * Cout) * 2 + 4 * Cout
        live = (R1 * Wpad * 6 * Cout * 4          # fused-conv f32 accumulator (largest term)
                + R1 * Wc * 2 * Cout * 4          # recombined conv1+downsample band
                + R1 * Wc * Cout * 2              # h1m (bf16)
                + TH * Wc * 3 * Cout * 4          # conv2 accumulator
                + TH * W * Cout * 4)              # h2 / out
        return 2 * (blocks + weights) + live + (2 << 20)   # 2x: double-buffered blocks + slack

    cands = sorted({d for d in range(8, H + 1, 8) if H % d == 0} | {H})
    cands = [d for d in cands if vmem_estimate(d) <= _VMEM_BUDGET_BYTES]
    if not cands:
        raise NotImplementedError(
            "no H tile fits the VMEM budget for this shape; "
            "TODO(synk): M-chunk the conv accumulation (lax.fori_loop + VMEM scratch)")
    best = max(cands)
    # v7x: 2 TensorCores share the parallel grid -- keep the step count >= 2 and even
    # when that costs at most half the tile.
    even = [d for d in cands if N * (H // d) >= 2 and (N * (H // d)) % 2 == 0]
    if even and 2 * max(even) >= best:
        best = max(even)
    return best, Wc, Wpad


def residual_block(x_nhwc, w1, w2, wd_scaled, bn_bias):
    """Fused ResidualBlock: conv1 -> conv2, downsample conv + BN bias, add, ReLU (NHWC)."""
    N, H, W, Cin = x_nhwc.shape
    Cout = w1.shape[-1]
    TH, Wc, Wpad = _pick_tile_h(N, H, W, Cin, Cout)
    T = H // TH

    # Spatial zero padding + bf16 cast done once; overlapping (TH+4)-row bands are
    # materialized wrapper-side (4/TH duplication), so the kernel needs no in-kernel
    # band concat and only one pipelined x stream.
    x_pad = jnp.pad(x_nhwc, ((0, 0), (2, 2), (2, Wpad - 2 - W), (0, 0))).astype(jnp.bfloat16)
    row_idx = jnp.arange(T)[:, None] * TH + jnp.arange(TH + 4)[None, :]      # (T, TH+4)
    x_band = x_pad[:, row_idx].reshape(N * T, TH + 4, Wpad, Cin)

    # Fused conv1 + downsample weight: dy-major, dx folded into the MXU N dim,
    # [wd_scaled | w1] inside each dx group (residual = lane-prefix slice).
    wpair = jnp.concatenate([wd_scaled, w1], axis=-1)                        # (3,3,Cin,2*Cout)
    wf = jnp.transpose(wpair, (0, 2, 1, 3)).reshape(3, Cin, 6 * Cout).astype(jnp.bfloat16)
    w2f = jnp.transpose(w2, (0, 2, 1, 3)).reshape(3, Cout, 3 * Cout).astype(jnp.bfloat16)
    bnb = jnp.asarray(bn_bias, jnp.float32).reshape(1, Cout)

    grid_spec = pltpu.PrefetchScalarGridSpec(
        num_scalar_prefetch=0,
        grid=(N, T),
        in_specs=[
            pl.BlockSpec((1, TH + 4, Wpad, Cin), lambda n, t: (n * T + t, 0, 0, 0)),
            # Grid-constant weights/bias (re-fetch is skipped since the block index never
            # changes).  NOTE(v7x): at production channel widths, single-buffer these
            # (pipeline_mode=pl.Buffered(1) or a one-shot DMA) so they are not held twice.
            pl.BlockSpec((3, Cin, 6 * Cout), lambda n, t: (0, 0, 0)),
            pl.BlockSpec((3, Cout, 3 * Cout), lambda n, t: (0, 0, 0)),
            pl.BlockSpec((1, Cout), lambda n, t: (0, 0)),
        ],
        out_specs=pl.BlockSpec((1, TH, W * Cout), lambda n, t: (n, t, 0)),
    )
    out_flat = pl.pallas_call(
        _resblock_kernel,
        out_shape=jax.ShapeDtypeStruct((N, H, W * Cout), jnp.bfloat16),
        grid_spec=grid_spec,
        compiler_params=pltpu.CompilerParams(
            dimension_semantics=("parallel", "parallel"),
            vmem_limit_bytes=_VMEM_LIMIT_BYTES,
        ),
    )(x_band, wf, w2f, bnb)
    return out_flat.reshape(N, H, W, Cout)


# ----------------------------------------------------------------------------
# Plain-JAX glue: bilinear x2 upsample (align_corners=True), pad, concat
# ----------------------------------------------------------------------------
def upsample_bilinear_x2_align_corners(x):  # NHWC
    N, H, W, C = x.shape

    def lerp_axis(arr, axis, s_in, s_out):
        if s_in == 1:
            return jnp.repeat(arr, s_out, axis=axis)
        src = jnp.arange(s_out, dtype=jnp.float32) * (s_in - 1) / (s_out - 1)
        i0 = jnp.clip(jnp.floor(src).astype(jnp.int32), 0, s_in - 2)
        frac = src - i0.astype(jnp.float32)
        a = jnp.take(arr, i0, axis=axis)
        b = jnp.take(arr, i0 + 1, axis=axis)
        shape = [1] * arr.ndim
        shape[axis] = s_out
        return a * (1.0 - frac.reshape(shape)) + b * frac.reshape(shape)

    x = lerp_axis(x, 1, H, 2 * H)
    x = lerp_axis(x, 2, W, 2 * W)
    return x


def _pad_and_concat(x1_nchw, x2_nchw):
    # NCHW -> NHWC
    x1 = jnp.transpose(x1_nchw, (0, 2, 3, 1))
    x2 = jnp.transpose(x2_nchw, (0, 2, 3, 1))
    x1 = upsample_bilinear_x2_align_corners(x1)
    # F.pad(x2, (diffX//2, diffX//2, diffY//2, diffY//2)) -- torch's own axis quirk kept:
    # diffX (H difference) pads the W axis, diffY (W difference) pads the H axis.
    diffX = x1.shape[1] - x2.shape[1]
    diffY = x1.shape[2] - x2.shape[2]
    x2 = jnp.pad(x2, ((0, 0), (diffY // 2, diffY // 2), (diffX // 2, diffX // 2), (0, 0)))
    return jnp.concatenate([x2, x1], axis=-1)   # torch.cat([x2, x1], dim=1)


def up_residual_forward(x1_nchw, x2_nchw, params):
    x = _pad_and_concat(x1_nchw, x2_nchw)
    # TODO(synk): fuse upsample/pad/concat into the kernel via split-Cin weight halves.
    out = residual_block(x, params["w1"], params["w2"],
                         params["wd_scaled"], params["bn_bias"])
    return jnp.transpose(out, (0, 3, 1, 2)).astype(jnp.float32)   # back to NCHW, f32


# ----------------------------------------------------------------------------
# Deterministic parameter init + pure-JAX reference (bf16-MXU precision matched)
# ----------------------------------------------------------------------------
def init_params(key, in_ch, out_ch):
    kw1, kw2, kwd = jax.random.split(key, 3)

    def mkw(k, ci, co):
        return jax.random.normal(k, (3, 3, ci, co), jnp.float32) / jnp.sqrt(9.0 * ci)

    w1 = mkw(kw1, in_ch, out_ch)
    w2 = mkw(kw2, out_ch, out_ch)
    wd = mkw(kwd, in_ch, out_ch)

    # downsample BatchNorm2d, eval mode, default init (gamma=1, beta=0, mean=0, var=1)
    eps = 1e-5
    gamma = jnp.ones((out_ch,), jnp.float32)
    beta = jnp.zeros((out_ch,), jnp.float32)
    mean = jnp.zeros((out_ch,), jnp.float32)
    var = jnp.ones((out_ch,), jnp.float32)
    scale = gamma / jnp.sqrt(var + eps)
    bias = beta - mean * scale
    return dict(w1=w1, w2=w2, wd_scaled=wd * scale, bn_bias=bias)


def _conv3x3_ref(x, w):
    # bf16 inputs / f32 accumulation to match the kernel's MXU precision.
    return lax.conv_general_dilated(
        x.astype(jnp.bfloat16), w.astype(jnp.bfloat16),
        window_strides=(1, 1), padding=((1, 1), (1, 1)),
        dimension_numbers=("NHWC", "HWIO", "NHWC"),
        preferred_element_type=jnp.float32)


def up_residual_ref(x1_nchw, x2_nchw, params):
    x = _pad_and_concat(x1_nchw, x2_nchw)
    h1 = _conv3x3_ref(x, params["w1"])
    h2 = _conv3x3_ref(h1, params["w2"])
    res = _conv3x3_ref(x, params["wd_scaled"]) + params["bn_bias"]
    out = jnp.maximum(h2 + res, 0.0)
    return jnp.transpose(out, (0, 3, 1, 2))


if __name__ == "__main__":
    key = jax.random.PRNGKey(0)
    kx1, kx2, kp = jax.random.split(key, 3)

    # small shapes: x1 is the deep (coarse) feature map, x2 the skip connection
    N = 2
    C1, H1, W1 = 16, 8, 8     # x1: upsampled to 16x16
    C2, H2, W2 = 16, 14, 14   # x2: padded to 16x16
    in_ch, out_ch = C1 + C2, 16

    x1 = jax.random.normal(kx1, (N, C1, H1, W1), jnp.float32)   # NCHW
    x2 = jax.random.normal(kx2, (N, C2, H2, W2), jnp.float32)   # NCHW
    params = init_params(kp, in_ch, out_ch)

    out = jax.block_until_ready(up_residual_forward(x1, x2, params))
    assert out.shape == (N, out_ch, 2 * H1, 2 * W1), out.shape

    # correctness check vs. a precision-matched (bf16 MXU, f32 accumulate) reference;
    # the kernel additionally rounds its output to bf16 (inference precision contract).
    ref = jax.block_until_ready(up_residual_ref(x1, x2, params))
    max_diff = float(jnp.max(jnp.abs(out - ref)))
    assert max_diff < 5e-2, f"max abs diff vs reference: {max_diff}"

    print("KERNEL_OK")
</pallas_src>

<mosaic_0001>
module attributes {stable_mosaic.version = 11 : i64} {
  func.func @_resblock_kernel(%arg0: i32, %arg1: i32, %arg2: memref<1x20x32x32xbf16, #tpu.memory_space<vmem>>, %arg3: memref<3x32x96xbf16, #tpu.memory_space<vmem>>, %arg4: memref<3x16x48xbf16, #tpu.memory_space<vmem>>, %arg5: memref<1x16xf32, #tpu.memory_space<vmem>>, %arg6: memref<1x16x256xbf16, #tpu.memory_space<vmem>>) attributes {dimension_semantics = [#tpu.dimension_semantics<parallel>, #tpu.dimension_semantics<parallel>], iteration_bounds = array<i64: 2, 1>, scalar_prefetch = 0 : i64, scratch_operands = 0 : i64, tpu.core_type = #tpu.core_type<tc>, window_params = [{transform_indices = @transform_0, window_bounds = array<i64: 1, 20, 32, 32>}, {pipeline_mode = #tpu.pipeline_mode<synchronous>, transform_indices = @transform_1, window_bounds = array<i64: 3, 32, 96>}, {pipeline_mode = #tpu.pipeline_mode<synchronous>, transform_indices = @transform_2, window_bounds = array<i64: 3, 16, 48>}, {pipeline_mode = #tpu.pipeline_mode<synchronous>, transform_indices = @transform_3, window_bounds = array<i64: 1, 16>}, {transform_indices = @transform_4, window_bounds = array<i64: 1, 16, 256>}]} {
    %c0 = arith.constant 0 : index
    %c0_0 = arith.constant 0 : index
    %c0_1 = arith.constant 0 : index
    %c0_2 = arith.constant 0 : index
    %0 = vector.load %arg2[%c0, %c0_0, %c0_1, %c0_2] : memref<1x20x32x32xbf16, #tpu.memory_space<vmem>>, vector<1x20x32x32xbf16>
    %1 = vector.shape_cast %0 : vector<1x20x32x32xbf16> to vector<20x32x32xbf16>
    %2 = vector.extract_strided_slice %1 {offsets = [0, 0, 0], sizes = [18, 32, 32], strides = [1, 1, 1]} : vector<20x32x32xbf16> to vector<18x32x32xbf16>
    %3 = vector.shape_cast %2 : vector<18x32x32xbf16> to vector<576x32xbf16>
    %c0_3 = arith.constant 0 : index
    %c0_4 = arith.constant 0 : index
    %c0_5 = arith.constant 0 : index
    %4 = vector.load %arg3[%c0_3, %c0_4, %c0_5] : memref<3x32x96xbf16, #tpu.memory_space<vmem>>, vector<1x32x96xbf16>
    %5 = vector.shape_cast %4 : vector<1x32x96xbf16> to vector<32x96xbf16>
    %cst = arith.constant dense<0.000000e+00> : vector<576x96xf32>
    %6 = tpu.matmul %3, %5, %cst {dimension_numbers = #tpu.dot_dimension_numbers<[1], [0], [0], [1], [0, 0, 1, 1], [], []>} : vector<576x32xbf16>, vector<32x96xbf16>, vector<576x96xf32> -> vector<576x96xf32>
    %7 = vector.extract_strided_slice %1 {offsets = [1, 0, 0], sizes = [18, 32, 32], strides = [1, 1, 1]} : vector<20x32x32xbf16> to vector<18x32x32xbf16>
    %8 = vector.shape_cast %7 : vector<18x32x32xbf16> to vector<576x32xbf16>
    %c1 = arith.constant 1 : index
    %c0_6 = arith.constant 0 : index
    %c0_7 = arith.constant 0 : index
    %9 = vector.load %arg3[%c1, %c0_6, %c0_7] : memref<3x32x96xbf16, #tpu.memory_space<vmem>>, vector<1x32x96xbf16>
    %10 = vector.shape_cast %9 : vector<1x32x96xbf16> to vector<32x96xbf16>
    %cst_8 = arith.constant dense<0.000000e+00> : vector<576x96xf32>
    %11 = tpu.matmul %8, %10, %cst_8 {dimension_numbers = #tpu.dot_dimension_numbers<[1], [0], [0], [1], [0, 0, 1, 1], [], []>} : vector<576x32xbf16>, vector<32x96xbf16>, vector<576x96xf32> -> vector<576x96xf32>
    %12 = arith.addf %6, %11 : vector<576x96xf32>
    %13 = vector.extract_strided_slice %1 {offsets = [2, 0, 0], sizes = [18, 32, 32], strides = [1, 1, 1]} : vector<20x32x32xbf16> to vector<18x32x32xbf16>
    %14 = vector.shape_cast %13 : vector<18x32x32xbf16> to vector<576x32xbf16>
    %c2 = arith.constant 2 : index
    %c0_9 = arith.constant 0 : index
    %c0_10 = arith.constant 0 : index
    %15 = vector.load %arg3[%c2, %c0_9, %c0_10] : memref<3x32x96xbf16, #tpu.memory_space<vmem>>, vector<1x32x96xbf16>
    %16 = vector.shape_cast %15 : vector<1x32x96xbf16> to vector<32x96xbf16>
    %cst_11 = arith.constant dense<0.000000e+00> : vector<576x96xf32>
    %17 = tpu.matmul %14, %16, %cst_11 {dimension_numbers = #tpu.dot_dimension_numbers<[1], [0], [0], [1], [0, 0, 1, 1], [], []>} : vector<576x32xbf16>, vector<32x96xbf16>, vector<576x96xf32> -> vector<576x96xf32>
    %18 = arith.addf %12, %17 : vector<576x96xf32>
    %19 = vector.shape_cast %18 : vector<576x96xf32> to vector<18x32x96xf32>
    %20 = vector.extract_strided_slice %19 {offsets = [0, 0, 0], sizes = [18, 24, 32], strides = [1, 1, 1]} : vector<18x32x96xf32> to vector<18x24x32xf32>
    %21 = vector.extract_strided_slice %19 {offsets = [0, 1, 32], sizes = [18, 24, 32], strides = [1, 1, 1]} : vector<18x32x96xf32> to vector<18x24x32xf32>
    %22 = arith.addf %20, %21 : vector<18x24x32xf32>
    %23 = vector.extract_strided_slice %19 {offsets = [0, 2, 64], sizes = [18, 24, 32], strides = [1, 1, 1]} : vector<18x32x96xf32> to vector<18x24x32xf32>
    %24 = arith.addf %22, %23 : vector<18x24x32xf32>
    %25 = vector.extract_strided_slice %24 {offsets = [1, 1, 0], sizes = [16, 16, 16], strides = [1, 1, 1]} : vector<18x24x32xf32> to vector<16x16x16xf32>
    %26 = vector.extract_strided_slice %24 {offsets = [0, 0, 16], sizes = [18, 24, 16], strides = [1, 1, 1]} : vector<18x24x32xf32> to vector<18x24x16xf32>
    %c16_i32 = arith.constant 16 : i32
    %27 = arith.muli %arg1, %c16_i32 : i32
    %c1_i32 = arith.constant 1 : i32
    %28 = arith.subi %27, %c1_i32 : i32
    %29 = tpu.iota {dimensions = array<i32: 0>} : vector<18x24x1xi32>
    %30 = vector.broadcast %28 : i32 to vector<18x24x1xi32>
    %31 = arith.addi %30, %29 : vector<18x24x1xi32>
    %32 = tpu.iota {dimensions = array<i32: 1>} : vector<18x24x1xi32>
    %c0_i32 = arith.constant 0 : i32
    %33 = vector.broadcast %c0_i32 : i32 to vector<18x24x1xi32>
    %34 = arith.cmpi sge, %31, %33 : vector<18x24x1xi32>
    %c16_i32_12 = arith.constant 16 : i32
    %35 = vector.broadcast %c16_i32_12 : i32 to vector<18x24x1xi32>
    %36 = arith.cmpi slt, %31, %35 : vector<18x24x1xi32>
    %37 = arith.andi %34, %36 : vector<18x24x1xi1>
    %c1_i32_13 = arith.constant 1 : i32
    %38 = vector.broadcast %c1_i32_13 : i32 to vector<18x24x1xi32>
    %39 = arith.cmpi sge, %32, %38 : vector<18x24x1xi32>
    %40 = arith.andi %37, %39 : vector<18x24x1xi1>
    %c16_i32_14 = arith.constant 16 : i32
    %41 = vector.broadcast %c16_i32_14 : i32 to vector<18x24x1xi32>
    %42 = arith.cmpi sle, %32, %41 : vector<18x24x1xi32>
    %43 = arith.andi %40, %42 : vector<18x24x1xi1>
    %cst_15 = arith.constant 0.000000e+00 : f32
    %44 = vector.shape_cast %43 : vector<18x24x1xi1> to vector<18x24x1xi1>
    %45 = vector.broadcast %44 : vector<18x24x1xi1> to vector<18x24x16xi1>
    %46 = vector.broadcast %cst_15 : f32 to vector<18x24x16xf32>
    %47 = arith.select %45, %26, %46 : vector<18x24x16xi1>, vector<18x24x16xf32>
    %48 = arith.truncf %47 : vector<18x24x16xf32> to vector<18x24x16xbf16>
    %49 = vector.extract_strided_slice %48 {offsets = [0, 0, 0], sizes = [16, 24, 16], strides = [1, 1, 1]} : vector<18x24x16xbf16> to vector<16x24x16xbf16>
    %50 = vector.shape_cast %49 : vector<16x24x16xbf16> to vector<384x16xbf16>
    %c0_16 = arith.constant 0 : index
    %c0_17 = arith.constant 0 : index
    %c0_18 = arith.constant 0 : index
    %51 = vector.load %arg4[%c0_16, %c0_17, %c0_18] : memref<3x16x48xbf16, #tpu.memory_space<vmem>>, vector<1x16x48xbf16>
    %52 = vector.shape_cast %51 : vector<1x16x48xbf16> to vector<16x48xbf16>
    %cst_19 = arith.constant dense<0.000000e+00> : vector<384x48xf32>
    %53 = tpu.matmul %50, %52, %cst_19 {dimension_numbers = #tpu.dot_dimension_numbers<[1], [0], [0], [1], [0, 0, 1, 1], [], []>} : vector<384x16xbf16>, vector<16x48xbf16>, vector<384x48xf32> -> vector<384x48xf32>
    %54 = vector.extract_strided_slice %48 {offsets = [1, 0, 0], sizes = [16, 24, 16], strides = [1, 1, 1]} : vector<18x24x16xbf16> to vector<16x24x16xbf16>
    %55 = vector.shape_cast %54 : vector<16x24x16xbf16> to vector<384x16xbf16>
    %c1_20 = arith.constant 1 : index
    %c0_21 = arith.constant 0 : index
    %c0_22 = arith.constant 0 : index
    %56 = vector.load %arg4[%c1_20, %c0_21, %c0_22] : memref<3x16x48xbf16, #tpu.memory_space<vmem>>, vector<1x16x48xbf16>
    %57 = vector.shape_cast %56 : vector<1x16x48xbf16> to vector<16x48xbf16>
    %cst_23 = arith.constant dense<0.000000e+00> : vector<384x48xf32>
    %58 = tpu.matmul %55, %57, %cst_23 {dimension_numbers = #tpu.dot_dimension_numbers<[1], [0], [0], [1], [0, 0, 1, 1], [], []>} : vector<384x16xbf16>, vector<16x48xbf16>, vector<384x48xf32> -> vector<384x48xf32>
    %59 = arith.addf %53, %58 : vector<384x48xf32>
    %60 = vector.extract_strided_slice %48 {offsets = [2, 0, 0], sizes = [16, 24, 16], strides = [1, 1, 1]} : vector<18x24x16xbf16> to vector<16x24x16xbf16>
    %61 = vector.shape_cast %60 : vector<16x24x16xbf16> to vector<384x16xbf16>
    %c2_24 = arith.constant 2 : index
    %c0_25 = arith.constant 0 : index
    %c0_26 = arith.constant 0 : index
    %62 = vector.load %arg4[%c2_24, %c0_25, %c0_26] : memref<3x16x48xbf16, #tpu.memory_space<vmem>>, vector<1x16x48xbf16>
    %63 = vector.shape_cast %62 : vector<1x16x48xbf16> to vector<16x48xbf16>
    %cst_27 = arith.constant dense<0.000000e+00> : vector<384x48xf32>
    %64 = tpu.matmul %61, %63, %cst_27 {dimension_numbers = #tpu.dot_dimension_numbers<[1], [0], [0], [1], [0, 0, 1, 1], [], []>} : vector<384x16xbf16>, vector<16x48xbf16>, vector<384x48xf32> -> vector<384x48xf32>
    %65 = arith.addf %59, %64 : vector<384x48xf32>
    %66 = vector.shape_cast %65 : vector<384x48xf32> to vector<16x24x48xf32>
    %67 = vector.extract_strided_slice %66 {offsets = [0, 0, 0], sizes = [16, 16, 16], strides = [1, 1, 1]} : vector<16x24x48xf32> to vector<16x16x16xf32>
    %68 = vector.extract_strided_slice %66 {offsets = [0, 1, 16], sizes = [16, 16, 16], strides = [1, 1, 1]} : vector<16x24x48xf32> to vector<16x16x16xf32>
    %69 = arith.addf %67, %68 : vector<16x16x16xf32>
    %70 = vector.extract_strided_slice %66 {offsets = [0, 2, 32], sizes = [16, 16, 16], strides = [1, 1, 1]} : vector<16x24x48xf32> to vector<16x16x16xf32>
    %71 = arith.addf %69, %70 : vector<16x16x16xf32>
    %72 = arith.addf %71, %25 : vector<16x16x16xf32>
    %c0_28 = arith.constant 0 : index
    %c0_29 = arith.constant 0 : index
    %73 = vector.load %arg5[%c0_28, %c0_29] : memref<1x16xf32, #tpu.memory_space<vmem>>, vector<1x16xf32>
    %74 = vector.shape_cast %73 : vector<1x16xf32> to vector<1x1x16xf32>
    %75 = vector.broadcast %74 : vector<1x1x16xf32> to vector<16x16x16xf32>
    %76 = arith.addf %72, %75 : vector<16x16x16xf32>
    %cst_30 = arith.constant 0.000000e+00 : f32
    %77 = vector.broadcast %cst_30 : f32 to vector<16x16x16xf32>
    %78 = arith.maximumf %76, %77 : vector<16x16x16xf32>
    %79 = vector.shape_cast %78 : vector<16x16x16xf32> to vector<16x256xf32>
    %80 = arith.truncf %79 : vector<16x256xf32> to vector<16x256xbf16>
    %c0_31 = arith.constant 0 : index
    %c0_32 = arith.constant 0 : index
    %c0_33 = arith.constant 0 : index
    %81 = vector.load %arg6[%c0_31, %c0_32, %c0_33] : memref<1x16x256xbf16, #tpu.memory_space<vmem>>, vector<1x16x256xbf16>
    %82 = vector.shape_cast %81 : vector<1x16x256xbf16> to vector<16x256xbf16>
    %83 = vector.shape_cast %80 : vector<16x256xbf16> to vector<1x16x256xbf16>
    tpu.vector_store %arg6[%c0_31, %c0_32, %c0_33], %83 {strides = array<i32>} : memref<1x16x256xbf16, #tpu.memory_space<vmem>>, vector<1x16x256xbf16>,
    return
  }
  func.func @transform_0(%arg0: i32, %arg1: i32) -> (i32, i32, i32, i32) {
    %c1_i32 = arith.constant 1 : i32
    %0 = arith.muli %arg0, %c1_i32 : i32
    %1 = arith.addi %0, %arg1 : i32
    %c0_i32 = arith.constant 0 : i32
    %c0_i32_0 = arith.constant 0 : i32
    %c0_i32_1 = arith.constant 0 : i32
    %c0_i32_2 = arith.constant 0 : i32
    return %1, %c0_i32, %c0_i32_0, %c0_i32_1 : i32, i32, i32, i32
  }
  func.func @transform_1(%arg0: i32, %arg1: i32) -> (i32, i32, i32) {
    %c0_i32 = arith.constant 0 : i32
    %c0_i32_0 = arith.constant 0 : i32
    %c0_i32_1 = arith.constant 0 : i32
    %c0_i32_2 = arith.constant 0 : i32
    return %c0_i32, %c0_i32_0, %c0_i32_1 : i32, i32, i32
  }
  func.func @transform_2(%arg0: i32, %arg1: i32) -> (i32, i32, i32) {
    %c0_i32 = arith.constant 0 : i32
    %c0_i32_0 = arith.constant 0 : i32
    %c0_i32_1 = arith.constant 0 : i32
    %c0_i32_2 = arith.constant 0 : i32
    return %c0_i32, %c0_i32_0, %c0_i32_1 : i32, i32, i32
  }
  func.func @transform_3(%arg0: i32, %arg1: i32) -> (i32, i32) {
    %c0_i32 = arith.constant 0 : i32
    %c0_i32_0 = arith.constant 0 : i32
    %c0_i32_1 = arith.constant 0 : i32
    return %c0_i32, %c0_i32_0 : i32, i32
  }
  func.func @transform_4(%arg0: i32, %arg1: i32) -> (i32, i32, i32) {
    %c0_i32 = arith.constant 0 : i32
    %c0_i32_0 = arith.constant 0 : i32
    return %arg0, %arg1, %c0_i32 : i32, i32, i32
  }
}

</mosaic_0001>

<llo_original>
// kernel: tpu_custom_call.1
$region0: #{tpu_custom_call.1}
  #allocation0 [shape = 'u32[]', space=smem, size = 0x4, offset = 0x4, fixed_abs, tag = 'smem constant byte address 0x4 - core index']
  #allocation1 [shape = 'u32[144,128]{1,0:T(1,128)}', space=vmem, size = 0x12000, scoped, tag = 'internal scratch']
  %s0 = inlined_call_operand.hbm [shape: bf16[2,20,32,32], index: 0, kind: input, shape index: {}]
  %s1 = inlined_call_operand.hbm [shape: bf16[3,32,96], index: 1, kind: input, shape index: {}]
  %s2 = inlined_call_operand.hbm [shape: bf16[3,16,48], index: 2, kind: input, shape index: {}]
  %s3 = inlined_call_operand.vmem [shape: f32[1,16], index: 3, kind: input, shape index: {}]
  %s4 = inlined_call_operand.hbm [shape: bf16[2,16,256], index: 4, kind: output, shape index: {}]
  %s5 = sld [smem:[#allocation0]]
  $region61: #{tpu_custom_call.1} parent=0
    _
  %s7 = ssub.s32 1, %s5
  %s8 = scalar_select 0, %s7, %s5
  $region1: #{tpu_custom_call.1} parent=0
    #allocation2 [shape = 'u8[327680]{0}', space=vmem, size = 0x50000, scoped, tag = 'input window, operand 0']
    #allocation3 [shape = 's32[2]{0}', space=sflag, size = 0x8, scoped, tag = 'scoped memory for tpu_custom_call.1']
    #allocation4 [shape = 's32[2]{0}', space=sflag, size = 0x8, scoped, tag = 'scoped memory for tpu_custom_call.1']
    #allocation5 [shape = 'u8[24576]{0}', space=vmem, size = 0x6000, scoped, tag = 'input window, operand 1, single buffered']
    #allocation6 [shape = 's32[1]{0}', space=sflag, size = 0x4, scoped, tag = 'scoped memory for tpu_custom_call.1']
    #allocation7 [shape = 'u8[12288]{0}', space=vmem, size = 0x3000, scoped, tag = 'input window, operand 2, single buffered']
    #allocation8 [shape = 'u8[16384]{0}', space=vmem, size = 0x4000, scoped, tag = 'output window, operand 0']
    %9 = vsyncpa [#allocation3], 0
    %s10 = scalar_lea.sflag [#allocation3], 1
    %11 = vsyncpa %s10, 0
    %12 = vsyncpa [#allocation6], 0
    %13 = vsyncpa [#allocation4], 0
    %s14 = scalar_lea.sflag [#allocation4], 1
    %15 = vsyncpa %s14, 0
    loop: start=0, step=1, limit=4
    $region2: #{tpu_custom_call.1} parent=1 // loop_pre_header
      _
    $region3: #{tpu_custom_call.1} parent=1 // loop_header
      %s17 = sphi 0, %s21
      %p18 = scmp.ge.s32.totalorder %s17, 4
      %s24 = sphi 0, %s36
      %s25 = sphi 0, %s32
      %s26 = sphi 0, %s24
      %s27 = sphi 0, %s25
      %s28 = sphi 0, %s26
      %s29 = sphi 0, %s27
      %s41 = sphi 0, %s43
      %s44 = sphi 0, %s41
      %s45 = sphi 0, %s44
      %s61 = sphi 0, %s45
      %s65 = sphi 0, %s65
      %s67 = sphi 0, %s65
      %s68 = sphi 0, %s67
      %s82 = sphi 0, %s68
      %s86 = sphi 0, %s86
      %s88 = sphi 0, %s86
      %s89 = sphi 0, %s88
      %s103 = sphi 0, %s89
      %s107 = sphi 0, %s107
      %s109 = sphi 0, %s107
      %s110 = sphi 0, %s109
      %s124 = sphi 0, %s110
      %s132 = sphi 0, %s134
      %s135 = sphi 0, %s132
      %s136 = sphi 0, %s135
      %s152 = sphi 0, %s136
    $region4: #{tpu_custom_call.1} parent=1 // loop_header_branch
      %20 = sbr.rel (%p18) target = $region8
    $region5: #{tpu_custom_call.1} parent=1 // loop_body
      %s22 = ssub.s32 %s17, 1
      %s23 = ssub.s32 %s17, 2
      %s30 = sadd.s32 1, %s25
      %p31 = scmp.ge.s32.totalorder %s30, 1
      %s32 = scalar_select %p31, 0, %s30
      %s33 = sadd.s32 1, %s24
      %s34 = scalar_select %p31, %s33, %s24
      %p35 = scmp.ge.s32.totalorder %s34, 2
      %s36 = scalar_select %p35, 0, %s34
      %s37 = sadd.s32 %s24, %s25
      %s38 = sadd.s32 %s36, %s32
      %s39 = ssub.s32 %s37, %s38
      %p40 = scmp.eq.s32.totalorder %s39, 0
      %s42 = sadd.s32 %s41, 1
      %s43 = scalar_select %p40, %s41, %s42
      %p46 = pneg %p40
      %p47 = scmp.eq.s32.totalorder %s17, 1
      %p48 = por %p46, %p47
      %p49 = scmp.ne.s32.totalorder %s41, %s44
      %p50 = scmp.eq.s32.totalorder %s17, 0
      %p51 = por %p49, %p50
      %p52 = scmp.ne.s32.totalorder %s41, %s44
      %p53 = scmp.eq.s32.totalorder %s22, 1
      %p54 = por %p52, %p53
      %p55 = scmp.ne.s32.totalorder %s44, %s45
      %p56 = scmp.eq.s32.totalorder %s22, 0
      %p57 = por %p55, %p56
      %p58 = scmp.ne.s32.totalorder %s44, %s45
      %p59 = scmp.eq.s32.totalorder %s23, 1
      %p60 = por %p58, %p59
      %p62 = scmp.ne.s32.totalorder %s45, %s61
      %p63 = scmp.eq.s32.totalorder %s23, 0
      %p64 = por %p62, %p63
      %s66 = sadd.s32 %s65, 1
      %p69 = scmp.eq.s32.totalorder %s17, 1
      %p70 = scmp.ne.s32.totalorder %s65, %s67
      %p71 = scmp.eq.s32.totalorder %s17, 0
      %p72 = por %p70, %p71
      %p73 = scmp.ne.s32.totalorder %s65, %s67
      %p74 = scmp.eq.s32.totalorder %s22, 1
      %p75 = por %p73, %p74
      %p76 = scmp.ne.s32.totalorder %s67, %s68
      %p77 = scmp.eq.s32.totalorder %s22, 0
      %p78 = por %p76, %p77
      %p79 = scmp.ne.s32.totalorder %s67, %s68
      %p80 = scmp.eq.s32.totalorder %s23, 1
      %p81 = por %p79, %p80
      %p83 = scmp.ne.s32.totalorder %s68, %s82
      %p84 = scmp.eq.s32.totalorder %s23, 0
      %p85 = por %p83, %p84
      %s87 = sadd.s32 %s86, 1
      %p90 = scmp.eq.s32.totalorder %s17, 1
      %p91 = scmp.ne.s32.totalorder %s86, %s88
      %p92 = scmp.eq.s32.totalorder %s17, 0
      %p93 = por %p91, %p92
      %p94 = scmp.ne.s32.totalorder %s86, %s88
      %p95 = scmp.eq.s32.totalorder %s22, 1
      %p96 = por %p94, %p95
      %p97 = scmp.ne.s32.totalorder %s88, %s89
      %p98 = scmp.eq.s32.totalorder %s22, 0
      %p99 = por %p97, %p98
      %p100 = scmp.ne.s32.totalorder %s88, %s89
      %p101 = scmp.eq.s32.totalorder %s23, 1
      %p102 = por %p100, %p101
      %p104 = scmp.ne.s32.totalorder %s89, %s103
      %p105 = scmp.eq.s32.totalorder %s23, 0
      %p106 = por %p104, %p105
      %s108 = sadd.s32 %s107, 1
      %p111 = scmp.eq.s32.totalorder %s17, 1
      %p112 = scmp.ne.s32.totalorder %s107, %s109
      %p113 = scmp.eq.s32.totalorder %s17, 0
      %p114 = por %p112, %p113
      %p115 = scmp.ne.s32.totalorder %s107, %s109
      %p116 = scmp.eq.s32.totalorder %s22, 1
      %p117 = por %p115, %p116
      %p118 = scmp.ne.s32.totalorder %s109, %s110
      %p119 = scmp.eq.s32.totalorder %s22, 0
      %p120 = por %p118, %p119
      %p121 = scmp.ne.s32.totalorder %s109, %s110
      %p122 = scmp.eq.s32.totalorder %s23, 1
      %p123 = por %p121, %p122
      %p125 = scmp.ne.s32.totalorder %s110, %s124
      %p126 = scmp.eq.s32.totalorder %s23, 0
      %p127 = por %p125, %p126
      %s128 = ssub.s32 %s24, %s36
      %s129 = ssub.s32 %s25, %s32
      %s130 = sor.u32 %s128, %s129
      %p131 = scmp.eq.s32.totalorder %s130, 0
      %s133 = sadd.s32 %s132, 1
      %s134 = scalar_select %p131, %s132, %s133
      %p137 = pneg %p131
      %p138 = scmp.eq.s32.totalorder %s17, 1
      %p139 = por %p137, %p138
      %p140 = scmp.ne.s32.totalorder %s132, %s135
      %p141 = scmp.eq.s32.totalorder %s17, 0
      %p142 = por %p140, %p141
      %p143 = scmp.ne.s32.totalorder %s132, %s135
      %p144 = scmp.eq.s32.totalorder %s22, 1
      %p145 = por %p143, %p144
      %p146 = scmp.ne.s32.totalorder %s135, %s136
      %p147 = scmp.eq.s32.totalorder %s22, 0
      %p148 = por %p146, %p147
      %p149 = scmp.ne.s32.totalorder %s135, %s136
      %p150 = scmp.eq.s32.totalorder %s23, 1
      %p151 = por %p149, %p150
      %p153 = scmp.ne.s32.totalorder %s136, %s152
      %p154 = scmp.eq.s32.totalorder %s23, 0
      %p155 = por %p153, %p154
      %p156 = scmp.le.s32.totalorder 1, %s17
      %p157 = scmp.lt.s32.totalorder %s17, 3
      %p158 = pnand %p156, %p157
      %p159 = pneg %p158
      // Predicated region
      $region9: #{tpu_custom_call.1} parent=5 // pred_check
        _
      $region10: #{tpu_custom_call.1} parent=5 // pred_check_branch
        %161 = sbr.rel (%p158) target = $region12
      $region11: #{tpu_custom_call.1} parent=5 // pred_region
        %s162 = ssub.s32 %s17, 1
        // Predicated region
        $region13: #{tpu_custom_call.1} parent=11 // pred_check
          %p163 = pneg %p78
        $region14: #{tpu_custom_call.1} parent=11 // pred_check_branch
          %165 = sbr.rel (%p163) target = $region16
        $region15: #{tpu_custom_call.1} parent=11 // pred_region
          %s167 = ssub.s32 768, 768
          %168 = vsyncadd [#allocation6], %s167
          %s169 = sshll.u32 [#allocation5], 4
          %s170 = int_to_ptr.vmem [resolvable:$true] %s169
          %175 = dma.hbm_to_vmem [thread:$0]  %s1, 768, %s170, [#allocation6], 64, 64, 4
        $region16: #{tpu_custom_call.1} parent=11 // pred_fallthru
          _
        // Predicated region
        $region17: #{tpu_custom_call.1} parent=11 // pred_check
          %p176 = pneg %p99
        $region18: #{tpu_custom_call.1} parent=11 // pred_check_branch
          %178 = sbr.rel (%p176) target = $region20
        $region19: #{tpu_custom_call.1} parent=11 // pred_region
          %s180 = ssub.s32 384, 384
          %181 = vsyncadd [#allocation6], %s180
          %s182 = sshll.u32 [#allocation7], 4
          %s183 = int_to_ptr.vmem [resolvable:$true] %s182
          %188 = dma.hbm_to_vmem [thread:$0]  %s2, 384, %s183, [#allocation6], 64, 64, 4
        $region20: #{tpu_custom_call.1} parent=11 // pred_fallthru
          _
        // Predicated region
        $region21: #{tpu_custom_call.1} parent=11 // pred_check
          %p189 = pneg %p120
        $region22: #{tpu_custom_call.1} parent=11 // pred_check_branch
          %191 = sbr.rel (%p189) target = $region24
        $region23: #{tpu_custom_call.1} parent=11 // pred_region
          _
        $region24: #{tpu_custom_call.1} parent=11 // pred_fallthru
          _
      $region12: #{tpu_custom_call.1} parent=5 // pred_fallthru
        _
      %p192 = scmp.lt.s32.totalorder %s17, 2
      // Predicated region
      $region25: #{tpu_custom_call.1} parent=5 // pred_check
        %p193 = pneg %p192
      $region26: #{tpu_custom_call.1} parent=5 // pred_check_branch
        %195 = sbr.rel (%p193) target = $region28
      $region27: #{tpu_custom_call.1} parent=5 // pred_region
        // Predicated region
        $region29: #{tpu_custom_call.1} parent=27 // pred_check
          %p196 = pneg %p51
        $region30: #{tpu_custom_call.1} parent=27 // pred_check_branch
          %198 = sbr.rel (%p196) target = $region32
        $region31: #{tpu_custom_call.1} parent=27 // pred_region
          %s199 = sand.u32 %s41, 1
          %s200 = scalar_lea.sflag [#allocation3], %s199
          %s201 = sand.u32 %s41, 1
          %s202 = smul.addr %s201, 320
          %s203 = scalar_lea.vmem [#allocation2], %s202
          %s204 = sadd.s32 %s24, %s25
          %s206 = ssub.s32 5120, 5120
          %207 = vsyncadd %s200, %s206
          %s208 = smul.addr %s204, 80
          %s209 = smul.addr %s208, 64
          %s210 = scalar_lea.hbm %s0, %s209
          %s211 = sshll.u32 %s203, 4
          %s212 = int_to_ptr.vmem [resolvable:$true] %s211
          %217 = dma.hbm_to_vmem [thread:$0]  %s210, 5120, %s212, %s200, 64, 64, 4
        $region32: #{tpu_custom_call.1} parent=27 // pred_fallthru
          _
      $region28: #{tpu_custom_call.1} parent=5 // pred_fallthru
        _
      %p218 = scmp.le.s32.totalorder 1, %s17
      %p219 = scmp.lt.s32.totalorder %s17, 3
      %p220 = pnand %p218, %p219
      %p221 = pneg %p220
      // Predicated region
      $region33: #{tpu_custom_call.1} parent=5 // pred_check
        _
      $region34: #{tpu_custom_call.1} parent=5 // pred_check_branch
        %223 = sbr.rel (%p220) target = $region36
      $region35: #{tpu_custom_call.1} parent=5 // pred_region
        %s224 = ssub.s32 %s17, 1
        %s225 = sand.u32 %s44, 1
        %s226 = scalar_lea.sflag [#allocation3], %s225
        %s227 = sand.u32 %s44, 1
        %s228 = smul.addr %s227, 320
        %s229 = scalar_lea.vmem [#allocation2], %s228
        // Predicated region
        $region37: #{tpu_custom_call.1} parent=35 // pred_check
          %p230 = pneg %p57
        $region38: #{tpu_custom_call.1} parent=35 // pred_check_branch
          %232 = sbr.rel (%p230) target = $region40
        $region39: #{tpu_custom_call.1} parent=35 // pred_region
          %233 = dma.done %s226, 5120
        $region40: #{tpu_custom_call.1} parent=35 // pred_fallthru
          _
        // Predicated region
        $region41: #{tpu_custom_call.1} parent=35 // pred_check
          %p234 = pneg %p78
        $region42: #{tpu_custom_call.1} parent=35 // pred_check_branch
          %236 = sbr.rel (%p234) target = $region44
        $region43: #{tpu_custom_call.1} parent=35 // pred_region
          %237 = dma.done [#allocation6], 768
        $region44: #{tpu_custom_call.1} parent=35 // pred_fallthru
          _
        // Predicated region
        $region45: #{tpu_custom_call.1} parent=35 // pred_check
          %p238 = pneg %p99
        $region46: #{tpu_custom_call.1} parent=35 // pred_check_branch
          %240 = sbr.rel (%p238) target = $region48
        $region47: #{tpu_custom_call.1} parent=35 // pred_region
          %241 = dma.done [#allocation6], 384
        $region48: #{tpu_custom_call.1} parent=35 // pred_fallthru
          _
        %s242 = sand.u32 %s44, 1
        %s243 = scalar_lea.sflag [#allocation3], %s242
        %s244 = sand.u32 %s44, 1
        %s245 = smul.addr %s244, 320
        %s246 = scalar_lea.vmem [#allocation2], %s245
        %p247 = pneg %p57
        %p248 = pneg %p54
        %p249 = pneg %p78
        %p250 = pneg %p75
        %p251 = pneg %p99
        %p252 = pneg %p96
        %p253 = pneg %p120
        %p254 = pneg %p117
        %p255 = pneg %p148
        %p256 = pneg %p145
        %s257 = sand.u32 %s135, 1
        %s258 = scalar_lea.sflag [#allocation4], %s257
        %s259 = sand.u32 %s135, 1
        %s260 = smul.addr %s259, 16
        %s261 = scalar_lea.vmem [#allocation8], %s260
        %s262 = sadd.s32 %s26, %s27
        %s263 = smul.u32 2, %s27
        %v265 = vld [vmem:[%s229] sm:$0xf]
        %v266 = vld [vmem:[%s229 + $0x4] sm:$0xf]
        %v267 = vld [vmem:[%s229 + $0x8] sm:$0xf]
        %v268 = vld [vmem:[%s229 + $0xc] sm:$0xf]
        %v269 = vld [vmem:[%s229 + $0x10] sm:$0xf]
        %v270 = vld [vmem:[%s229 + $0x14] sm:$0xf]
        %v271 = vld [vmem:[%s229 + $0x18] sm:$0xf]
        %v272 = vld [vmem:[%s229 + $0x1c] sm:$0xf]
        %v273 = vld [vmem:[%s229 + $0x20] sm:$0xf]
        %v274 = vld [vmem:[%s229 + $0x24] sm:$0xf]
        %v275 = vld [vmem:[%s229 + $0x28] sm:$0xf]
        %v276 = vld [vmem:[%s229 + $0x2c] sm:$0xf]
        %v277 = vld [vmem:[%s229 + $0x30] sm:$0xf]
        %v278 = vld [vmem:[%s229 + $0x34] sm:$0xf]
        %v279 = vld [vmem:[%s229 + $0x38] sm:$0xf]
        %v280 = vld [vmem:[%s229 + $0x3c] sm:$0xf]
        %v281 = vld [vmem:[%s229 + $0x40] sm:$0xf]
        %v282 = vld [vmem:[%s229 + $0x44] sm:$0xf]
        %v283 = vld [vmem:[%s229 + $0x48] sm:$0xf]
        %v284 = vld [vmem:[%s229 + $0x4c] sm:$0xf]
        %v285 = vld [vmem:[%s229 + $0x50] sm:$0xf]
        %v286 = vld [vmem:[%s229 + $0x54] sm:$0xf]
        %v287 = vld [vmem:[%s229 + $0x58] sm:$0xf]
        %v288 = vld [vmem:[%s229 + $0x5c] sm:$0xf]
        %v289 = vld [vmem:[%s229 + $0x60] sm:$0xf]
        %v290 = vld [vmem:[%s229 + $0x64] sm:$0xf]
        %v291 = vld [vmem:[%s229 + $0x68] sm:$0xf]
        %v292 = vld [vmem:[%s229 + $0x6c] sm:$0xf]
        %v293 = vld [vmem:[%s229 + $0x70] sm:$0xf]
        %v294 = vld [vmem:[%s229 + $0x74] sm:$0xf]
        %v295 = vld [vmem:[%s229 + $0x78] sm:$0xf]
        %v296 = vld [vmem:[%s229 + $0x7c] sm:$0xf]
        %v297 = vld [vmem:[%s229 + $0x80] sm:$0xf]
        %v298 = vld [vmem:[%s229 + $0x84] sm:$0xf]
        %v299 = vld [vmem:[%s229 + $0x88] sm:$0xf]
        %v300 = vld [vmem:[%s229 + $0x8c] sm:$0xf]
        %v301 = vld [vmem:[%s229 + $0x90] sm:$0xf]
        %v302 = vld [vmem:[%s229 + $0x94] sm:$0xf]
        %v303 = vld [vmem:[%s229 + $0x98] sm:$0xf]
        %v304 = vld [vmem:[%s229 + $0x9c] sm:$0xf]
        %v305 = vld [vmem:[%s229 + $0xa0] sm:$0xf]
        %v306 = vld [vmem:[%s229 + $0xa4] sm:$0xf]
        %v307 = vld [vmem:[%s229 + $0xa8] sm:$0xf]
        %v308 = vld [vmem:[%s229 + $0xac] sm:$0xf]
        %v309 = vld [vmem:[%s229 + $0xb0] sm:$0xf]
        %v310 = vld [vmem:[%s229 + $0xb4] sm:$0xf]
        %v311 = vld [vmem:[%s229 + $0xb8] sm:$0xf]
        %v312 = vld [vmem:[%s229 + $0xbc] sm:$0xf]
        %v313 = vld [vmem:[%s229 + $0xc0] sm:$0xf]
        %v314 = vld [vmem:[%s229 + $0xc4] sm:$0xf]
        %v315 = vld [vmem:[%s229 + $0xc8] sm:$0xf]
        %v316 = vld [vmem:[%s229 + $0xcc] sm:$0xf]
        %v317 = vld [vmem:[%s229 + $0xd0] sm:$0xf]
        %v318 = vld [vmem:[%s229 + $0xd4] sm:$0xf]
        %v319 = vld [vmem:[%s229 + $0xd8] sm:$0xf]
        %v320 = vld [vmem:[%s229 + $0xdc] sm:$0xf]
        %v321 = vld [vmem:[%s229 + $0xe0] sm:$0xf]
        %v322 = vld [vmem:[%s229 + $0xe4] sm:$0xf]
        %v323 = vld [vmem:[%s229 + $0xe8] sm:$0xf]
        %v324 = vld [vmem:[%s229 + $0xec] sm:$0xf]
        %v325 = vld [vmem:[%s229 + $0xf0] sm:$0xf]
        %v326 = vld [vmem:[%s229 + $0xf4] sm:$0xf]
        %v327 = vld [vmem:[%s229 + $0xf8] sm:$0xf]
        %v328 = vld [vmem:[%s229 + $0xfc] sm:$0xf]
        %v329 = vld [vmem:[%s229 + $0x100] sm:$0xf]
        %v330 = vld [vmem:[%s229 + $0x104] sm:$0xf]
        %v331 = vld [vmem:[%s229 + $0x108] sm:$0xf]
        %v332 = vld [vmem:[%s229 + $0x10c] sm:$0xf]
        %v333 = vld [vmem:[%s229 + $0x110] sm:$0xf]
        %v334 = vld [vmem:[%s229 + $0x114] sm:$0xf]
        %v335 = vld [vmem:[%s229 + $0x118] sm:$0xf]
        %v336 = vld [vmem:[%s229 + $0x11c] sm:$0xf]
        %v337 = vld [vmem:[%s229 + $0x120] sm:$0xf]
        %v338 = vld [vmem:[%s229 + $0x124] sm:$0xf]
        %v339 = vld [vmem:[%s229 + $0x128] sm:$0xf]
        %v340 = vld [vmem:[%s229 + $0x12c] sm:$0xf]
        %v341 = vld [vmem:[%s229 + $0x130] sm:$0xf]
        %v342 = vld [vmem:[%s229 + $0x134] sm:$0xf]
        %v343 = vld [vmem:[%s229 + $0x138] sm:$0xf]
        %v344 = vld [vmem:[%s229 + $0x13c] sm:$0xf]
        %v345 = vld [vmem:[#allocation5] sm:$0xf]
        %v346 = vld [vmem:[#allocation5 + $0x4] sm:$0xf]
        %v347 = vld [vmem:[#allocation5 + $0x8] sm:$0xf]
        %v348 = vld [vmem:[#allocation5 + $0xc] sm:$0xf]
        %s349 = scalar_lea.vmem [#allocation5], 16
        %v350 = vld [vmem:[%s349] sm:$0xf]
        %v351 = vld [vmem:[%s349 + $0x4] sm:$0xf]
        %v352 = vld [vmem:[%s349 + $0x8] sm:$0xf]
        %v353 = vld [vmem:[%s349 + $0xc] sm:$0xf]
        %v426 = vunpack.c.l.b16 %v269
        %v427 = vunpack.c.l.b16 %v270
        %v428 = vunpack.c.l.b16 %v271
        %v429 = vunpack.c.l.b16 %v272
        %v430 = vunpack.c.l.b16 %v273
        %v431 = vunpack.c.l.b16 %v274
        %v432 = vunpack.c.l.b16 %v275
        %v433 = vunpack.c.l.b16 %v276
        %v434 = vunpack.c.l.b16 %v277
        %v435 = vunpack.c.l.b16 %v278
        %v436 = vunpack.c.l.b16 %v279
        %v437 = vunpack.c.l.b16 %v280
        %v438 = vunpack.c.l.b16 %v281
        %v439 = vunpack.c.l.b16 %v282
        %v440 = vunpack.c.l.b16 %v283
        %v441 = vunpack.c.l.b16 %v284
        %v442 = vunpack.c.l.b16 %v285
        %v443 = vunpack.c.l.b16 %v286
        %v444 = vunpack.c.l.b16 %v287
        %v445 = vunpack.c.l.b16 %v288
        %v446 = vunpack.c.l.b16 %v289
        %v447 = vunpack.c.l.b16 %v290
        %v448 = vunpack.c.l.b16 %v291
        %v449 = vunpack.c.l.b16 %v292
        %v450 = vunpack.c.l.b16 %v293
        %v451 = vunpack.c.l.b16 %v294
        %v452 = vunpack.c.l.b16 %v295
        %v453 = vunpack.c.l.b16 %v296
        %v454 = vunpack.c.l.b16 %v297
        %v455 = vunpack.c.l.b16 %v298
        %v456 = vunpack.c.l.b16 %v299
        %v457 = vunpack.c.l.b16 %v300
        %v458 = vunpack.c.l.b16 %v301
        %v459 = vunpack.c.l.b16 %v302
        %v460 = vunpack.c.l.b16 %v303
        %v461 = vunpack.c.l.b16 %v304
        %v462 = vunpack.c.l.b16 %v305
        %v463 = vunpack.c.l.b16 %v306
        %v464 = vunpack.c.l.b16 %v307
        %v465 = vunpack.c.l.b16 %v308
        %v466 = vunpack.c.l.b16 %v309
        %v467 = vunpack.c.l.b16 %v310
        %v468 = vunpack.c.l.b16 %v311
        %v469 = vunpack.c.l.b16 %v312
        %v470 = vunpack.c.l.b16 %v313
        %v471 = vunpack.c.l.b16 %v314
        %v472 = vunpack.c.l.b16 %v315
        %v473 = vunpack.c.l.b16 %v316
        %v474 = vunpack.c.l.b16 %v317
        %v475 = vunpack.c.l.b16 %v318
        %v476 = vunpack.c.l.b16 %v319
        %v477 = vunpack.c.l.b16 %v320
        %v478 = vunpack.c.l.b16 %v321
        %v479 = vunpack.c.l.b16 %v322
        %v480 = vunpack.c.l.b16 %v323
        %v481 = vunpack.c.l.b16 %v324
        %v482 = vunpack.c.l.b16 %v325
        %v483 = vunpack.c.l.b16 %v326
        %v484 = vunpack.c.l.b16 %v327
        %v485 = vunpack.c.l.b16 %v328
        %v486 = vunpack.c.l.b16 %v329
        %v487 = vunpack.c.l.b16 %v330
        %v488 = vunpack.c.l.b16 %v331
        %v489 = vunpack.c.l.b16 %v332
        %v490 = vunpack.c.l.b16 %v333
        %v491 = vunpack.c.l.b16 %v334
        %v492 = vunpack.c.l.b16 %v335
        %v493 = vunpack.c.l.b16 %v336
        %v494 = vunpack.c.l.b16 %v337
        %v495 = vunpack.c.l.b16 %v338
        %v496 = vunpack.c.l.b16 %v339
        %v497 = vunpack.c.l.b16 %v340
        %v498 = vpack.c.b16 %v427, %v426
        %v499 = vpack.c.b16 %v429, %v428
        %v500 = vpack.c.b16 %v431, %v430
        %v501 = vpack.c.b16 %v433, %v432
        %v502 = vpack.c.b16 %v435, %v434
        %v503 = vpack.c.b16 %v437, %v436
        %v504 = vpack.c.b16 %v439, %v438
        %v505 = vpack.c.b16 %v441, %v440
        %v506 = vpack.c.b16 %v443, %v442
        %v507 = vpack.c.b16 %v445, %v444
        %v508 = vpack.c.b16 %v447, %v446
        %v509 = vpack.c.b16 %v449, %v448
        %v510 = vpack.c.b16 %v451, %v450
        %v511 = vpack.c.b16 %v453, %v452
        %v512 = vpack.c.b16 %v455, %v454
        %v513 = vpack.c.b16 %v457, %v456
        %v514 = vpack.c.b16 %v459, %v458
        %v515 = vpack.c.b16 %v461, %v460
        %v516 = vpack.c.b16 %v463, %v462
        %v517 = vpack.c.b16 %v465, %v464
        %v518 = vpack.c.b16 %v467, %v466
        %v519 = vpack.c.b16 %v469, %v468
        %v520 = vpack.c.b16 %v471, %v470
        %v521 = vpack.c.b16 %v473, %v472
        %v522 = vpack.c.b16 %v475, %v474
        %v523 = vpack.c.b16 %v477, %v476
        %v524 = vpack.c.b16 %v479, %v478
        %v525 = vpack.c.b16 %v481, %v480
        %v526 = vpack.c.b16 %v483, %v482
        %v527 = vpack.c.b16 %v485, %v484
        %v528 = vpack.c.b16 %v487, %v486
        %v529 = vpack.c.b16 %v489, %v488
        %v530 = vpack.c.b16 %v491, %v490
        %v531 = vpack.c.b16 %v493, %v492
        %v532 = vpack.c.b16 %v495, %v494
        %v533 = vpack.c.b16 %v497, %v496
        %v538 = vunpack.c.l.b16 %v350
        %v539 = vunpack.c.l.b16 %v351
        %v540 = vunpack.c.l.b16 %v352
        %v541 = vunpack.c.l.b16 %v353
        %v542 = vpack.c.b16 %v539, %v538
        %v543 = vpack.c.b16 %v541, %v540
        %vm546 = vcmask 261120
        %v548 = vsel %vm546, %v498, 0
        %v551 = vsel %vm546, %v499, 0
        %v554 = vsel %vm546, %v500, 0
        %v557 = vsel %vm546, %v501, 0
        %v560 = vsel %vm546, %v502, 0
        %v563 = vsel %vm546, %v503, 0
        %v566 = vsel %vm546, %v504, 0
        %v569 = vsel %vm546, %v505, 0
        %v572 = vsel %vm546, %v506, 0
        %v575 = vsel %vm546, %v507, 0
        %v578 = vsel %vm546, %v508, 0
        %v581 = vsel %vm546, %v509, 0
        %v584 = vsel %vm546, %v510, 0
        %v587 = vsel %vm546, %v511, 0
        %v590 = vsel %vm546, %v512, 0
        %v593 = vsel %vm546, %v513, 0
        %v596 = vsel %vm546, %v514, 0
        %v599 = vsel %vm546, %v515, 0
        %v602 = vsel %vm546, %v516, 0
        %v605 = vsel %vm546, %v517, 0
        %v608 = vsel %vm546, %v518, 0
        %v611 = vsel %vm546, %v519, 0
        %v614 = vsel %vm546, %v520, 0
        %v617 = vsel %vm546, %v521, 0
        %v620 = vsel %vm546, %v522, 0
        %v623 = vsel %vm546, %v523, 0
        %v626 = vsel %vm546, %v524, 0
        %v629 = vsel %vm546, %v525, 0
        %v632 = vsel %vm546, %v526, 0
        %v635 = vsel %vm546, %v527, 0
        %v638 = vsel %vm546, %v528, 0
        %v641 = vsel %vm546, %v529, 0
        %v644 = vsel %vm546, %v530, 0
        %v647 = vsel %vm546, %v531, 0
        %v650 = vsel %vm546, %v532, 0
        %v653 = vsel %vm546, %v533, 0
        %655 = vmatprep.subr.bf16.mxu0 0
        %656 = vmatpush1.bf16.msra.mxu0 %v542
        %657 = vmatprep.subr.bf16.mxu0 0
        %658 = vmatpush1.bf16.msra.mxu0 %v543
        %659 = vmatprep.subr.bf16.mxu0 0
        %660 = vmatpush1.bf16.msra.mxu0 0
        %661 = vmatprep.subr.bf16.mxu0 0
        %662 = vmatpush1.bf16.msra.mxu0 0
        %663 = vmatprep.subr.bf16.mxu0 0
        %664 = vmatpush1.bf16.msra.mxu0 0
        %665 = vmatprep.subr.bf16.mxu0 0
        %666 = vmatpush1.bf16.msra.mxu0 0
        %667 = vmatprep.subr.bf16.mxu0 0
        %668 = vmatpush1.bf16.msra.mxu0 0
        %669 = vmatprep.subr.bf16.mxu0 0
        %670 = vmatpush1.bf16.msra.mxu0 0
        %671 = vmatprep.subr.bf16.mxu0 0
        %672 = vmatpush1.bf16.msra.mxu0 0
        %673 = vmatprep.subr.bf16.mxu0 0
        %674 = vmatpush1.bf16.msra.mxu0 0
        %675 = vmatprep.subr.bf16.mxu0 0
        %676 = vmatpush1.bf16.msra.mxu0 0
        %677 = vmatprep.subr.bf16.mxu0 0
        %678 = vmatpush1.bf16.msra.mxu0 0
        %679 = vmatprep.subr.bf16.mxu0 0
        %680 = vmatpush1.bf16.msra.mxu0 0
        %681 = vmatprep.subr.bf16.mxu0 0
        %682 = vmatpush1.bf16.msra.mxu0 0
        %683 = vmatprep.subr.bf16.mxu0 0
        %684 = vmatpush1.bf16.msra.mxu0 0
        %685 = vmatprep.subr.bf16.mxu0 0
        %686 = vmatpush1.bf16.msra.mxu0 0
        %687 = vmatprep.mubr.bf16.mxu0 0
        %688 = vmatmul.mubr.bf16.gmra.mrb[0].mxu0 %v548
        %v689 = vpop.f32.mrb[0].mxu0
        %v690 = vadd.f32 0.0, %v689
        %v691 = vpop.f32.mrb[0].mxu0
        %v692 = vpop.f32.mrb[0].mxu0
        %v693 = vadd.f32 0.0, %v692
        %v694 = vpop.f32.mrb[0].mxu0
        %695 = vmatprep.mubr.bf16.mxu0 0
        %696 = vmatmul.mubr.bf16.gmra.mrb[0].mxu0 %v551
        %v697 = vpop.f32.mrb[0].mxu0
        %v698 = vadd.f32 0.0, %v697
        %v699 = vpop.f32.mrb[0].mxu0
        %v700 = vpop.f32.mrb[0].mxu0
        %v701 = vadd.f32 0.0, %v700
        %v702 = vpop.f32.mrb[0].mxu0
        %703 = vmatprep.mubr.bf16.mxu0 0
        %704 = vmatmul.mubr.bf16.gmra.mrb[0].mxu0 %v554
        %v705 = vpop.f32.mrb[0].mxu0
        %v706 = vadd.f32 0.0, %v705
        %v707 = vpop.f32.mrb[0].mxu0
        %v708 = vpop.f32.mrb[0].mxu0
        %v709 = vadd.f32 0.0, %v708
        %v710 = vpop.f32.mrb[0].mxu0
        %711 = vmatprep.mubr.bf16.mxu0 0
        %712 = vmatmul.mubr.bf16.gmra.mrb[0].mxu0 %v557
        %v713 = vpop.f32.mrb[0].mxu0
        %v714 = vadd.f32 0.0, %v713
        %v715 = vpop.f32.mrb[0].mxu0
        %v716 = vpop.f32.mrb[0].mxu0
        %v717 = vadd.f32 0.0, %v716
        %v718 = vpop.f32.mrb[0].mxu0
        %719 = vmatprep.mubr.bf16.mxu0 0
        %720 = vmatmul.mubr.bf16.gmra.mrb[0].mxu0 %v560
        %v721 = vpop.f32.mrb[0].mxu0
        %v722 = vadd.f32 0.0, %v721
        %v723 = vpop.f32.mrb[0].mxu0
        %v724 = vpop.f32.mrb[0].mxu0
        %v725 = vadd.f32 0.0, %v724
        %v726 = vpop.f32.mrb[0].mxu0
        %727 = vmatprep.mubr.bf16.mxu0 0
        %728 = vmatmul.mubr.bf16.gmra.mrb[0].mxu0 %v563
        %v729 = vpop.f32.mrb[0].mxu0
        %v730 = vadd.f32 0.0, %v729
        %v731 = vpop.f32.mrb[0].mxu0
        %v732 = vpop.f32.mrb[0].mxu0
        %v733 = vadd.f32 0.0, %v732
        %v734 = vpop.f32.mrb[0].mxu0
        %735 = vmatprep.mubr.bf16.mxu0 0
        %736 = vmatmul.mubr.bf16.gmra.mrb[0].mxu0 %v566
        %v737 = vpop.f32.mrb[0].mxu0
        %v738 = vadd.f32 0.0, %v737
        %v739 = vpop.f32.mrb[0].mxu0
        %v740 = vpop.f32.mrb[0].mxu0
        %v741 = vadd.f32 0.0, %v740
        %v742 = vpop.f32.mrb[0].mxu0
        %743 = vmatprep.mubr.bf16.mxu0 0
        %744 = vmatmul.mubr.bf16.gmra.mrb[0].mxu0 %v569
        %v745 = vpop.f32.mrb[0].mxu0
        %v746 = vadd.f32 0.0, %v745
        %v747 = vpop.f32.mrb[0].mxu0
        %v748 = vpop.f32.mrb[0].mxu0
        %v749 = vadd.f32 0.0, %v748
        %v750 = vpop.f32.mrb[0].mxu0
        %751 = vmatprep.mubr.bf16.mxu0 0
        %752 = vmatmul.mubr.bf16.gmra.mrb[0].mxu0 %v572
        %v753 = vpop.f32.mrb[0].mxu0
        %v754 = vadd.f32 0.0, %v753
        %v755 = vpop.f32.mrb[0].mxu0
        %v756 = vpop.f32.mrb[0].mxu0
        %v757 = vadd.f32 0.0, %v756
        %v758 = vpop.f32.mrb[0].mxu0
        %759 = vmatprep.mubr.bf16.mxu0 0
        %760 = vmatmul.mubr.bf16.gmra.mrb[0].mxu0 %v575
        %v761 = vpop.f32.mrb[0].mxu0
        %v762 = vadd.f32 0.0, %v761
        %v763 = vpop.f32.mrb[0].mxu0
        %v764 = vpop.f32.mrb[0].mxu0
        %v765 = vadd.f32 0.0, %v764
        %v766 = vpop.f32.mrb[0].mxu0
        %767 = vmatprep.mubr.bf16.mxu0 0
        %768 = vmatmul.mubr.bf16.gmra.mrb[0].mxu0 %v578
        %v769 = vpop.f32.mrb[0].mxu0
        %v770 = vadd.f32 0.0, %v769
        %v771 = vpop.f32.mrb[0].mxu0
        %v772 = vpop.f32.mrb[0].mxu0
        %v773 = vadd.f32 0.0, %v772
        %v774 = vpop.f32.mrb[0].mxu0
        %775 = vmatprep.mubr.bf16.mxu0 0
        %776 = vmatmul.mubr.bf16.gmra.mrb[0].mxu0 %v581
        %v777 = vpop.f32.mrb[0].mxu0
        %v778 = vadd.f32 0.0, %v777
        %v779 = vpop.f32.mrb[0].mxu0
        %v780 = vpop.f32.mrb[0].mxu0
        %v781 = vadd.f32 0.0, %v780
        %v782 = vpop.f32.mrb[0].mxu0
        %783 = vmatprep.mubr.bf16.mxu0 0
        %784 = vmatmul.mubr.bf16.gmra.mrb[0].mxu0 %v584
        %v785 = vpop.f32.mrb[0].mxu0
        %v786 = vadd.f32 0.0, %v785
        %v787 = vpop.f32.mrb[0].mxu0
        %v788 = vpop.f32.mrb[0].mxu0
        %v789 = vadd.f32 0.0, %v788
        %v790 = vpop.f32.mrb[0].mxu0
        %791 = vmatprep.mubr.bf16.mxu0 0
        %792 = vmatmul.mubr.bf16.gmra.mrb[0].mxu0 %v587
        %v793 = vpop.f32.mrb[0].mxu0
        %v794 = vadd.f32 0.0, %v793
        %v795 = vpop.f32.mrb[0].mxu0
        %v796 = vpop.f32.mrb[0].mxu0
        %v797 = vadd.f32 0.0, %v796
        %v798 = vpop.f32.mrb[0].mxu0
        %799 = vmatprep.mubr.bf16.mxu0 0
        %800 = vmatmul.mubr.bf16.gmra.mrb[0].mxu0 %v590
        %v801 = vpop.f32.mrb[0].mxu0
        %v802 = vadd.f32 0.0, %v801
        %v803 = vpop.f32.mrb[0].mxu0
        %v804 = vpop.f32.mrb[0].mxu0
        %v805 = vadd.f32 0.0, %v804
        %v806 = vpop.f32.mrb[0].mxu0
        %807 = vmatprep.mubr.bf16.mxu0 0
        %808 = vmatmul.mubr.bf16.gmra.mrb[0].mxu0 %v593
        %v809 = vpop.f32.mrb[0].mxu0
        %v810 = vadd.f32 0.0, %v809
        %v811 = vpop.f32.mrb[0].mxu0
        %v812 = vpop.f32.mrb[0].mxu0
        %v813 = vadd.f32 0.0, %v812
        %v814 = vpop.f32.mrb[0].mxu0
        %815 = vmatprep.mubr.bf16.mxu0 0
        %816 = vmatmul.mubr.bf16.gmra.mrb[0].mxu0 %v596
        %v817 = vpop.f32.mrb[0].mxu0
        %v818 = vadd.f32 0.0, %v817
        %v819 = vpop.f32.mrb[0].mxu0
        %v820 = vpop.f32.mrb[0].mxu0
        %v821 = vadd.f32 0.0, %v820
        %v822 = vpop.f32.mrb[0].mxu0
        %823 = vmatprep.mubr.bf16.mxu0 0
        %824 = vmatmul.mubr.bf16.gmra.mrb[0].mxu0 %v599
        %v825 = vpop.f32.mrb[0].mxu0
        %v826 = vadd.f32 0.0, %v825
        %v827 = vpop.f32.mrb[0].mxu0
        %v828 = vpop.f32.mrb[0].mxu0
        %v829 = vadd.f32 0.0, %v828
        %v830 = vpop.f32.mrb[0].mxu0
        %831 = vmatprep.mubr.bf16.mxu0 0
        %832 = vmatmul.mubr.bf16.gmra.mrb[0].mxu0 %v602
        %v833 = vpop.f32.mrb[0].mxu0
        %v834 = vadd.f32 0.0, %v833
        %v835 = vpop.f32.mrb[0].mxu0
        %v836 = vpop.f32.mrb[0].mxu0
        %v837 = vadd.f32 0.0, %v836
        %v838 = vpop.f32.mrb[0].mxu0
        %839 = vmatprep.mubr.bf16.mxu0 0
        %840 = vmatmul.mubr.bf16.gmra.mrb[0].mxu0 %v605
        %v841 = vpop.f32.mrb[0].mxu0
        %v842 = vadd.f32 0.0, %v841
        %v843 = vpop.f32.mrb[0].mxu0
        %v844 = vpop.f32.mrb[0].mxu0
        %v845 = vadd.f32 0.0, %v844
        %v846 = vpop.f32.mrb[0].mxu0
        %847 = vmatprep.mubr.bf16.mxu0 0
        %848 = vmatmul.mubr.bf16.gmra.mrb[0].mxu0 %v608
        %v849 = vpop.f32.mrb[0].mxu0
        %v850 = vadd.f32 0.0, %v849
        %v851 = vpop.f32.mrb[0].mxu0
        %v852 = vpop.f32.mrb[0].mxu0
        %v853 = vadd.f32 0.0, %v852
        %v854 = vpop.f32.mrb[0].mxu0
        %855 = vmatprep.mubr.bf16.mxu0 0
        %856 = vmatmul.mubr.bf16.gmra.mrb[0].mxu0 %v611
        %v857 = vpop.f32.mrb[0].mxu0
        %v858 = vadd.f32 0.0, %v857
        %v859 = vpop.f32.mrb[0].mxu0
        %v860 = vpop.f32.mrb[0].mxu0
        %v861 = vadd.f32 0.0, %v860
        %v862 = vpop.f32.mrb[0].mxu0
        %863 = vmatprep.mubr.bf16.mxu0 0
        %864 = vmatmul.mubr.bf16.gmra.mrb[0].mxu0 %v614
        %v865 = vpop.f32.mrb[0].mxu0
        %v866 = vadd.f32 0.0, %v865
        %v867 = vpop.f32.mrb[0].mxu0
        %v868 = vpop.f32.mrb[0].mxu0
        %v869 = vadd.f32 0.0, %v868
        %v870 = vpop.f32.mrb[0].mxu0
        %871 = vmatprep.mubr.bf16.mxu0 0
        %872 = vmatmul.mubr.bf16.gmra.mrb[0].mxu0 %v617
        %v873 = vpop.f32.mrb[0].mxu0
        %v874 = vadd.f32 0.0, %v873
        %v875 = vpop.f32.mrb[0].mxu0
        %v876 = vpop.f32.mrb[0].mxu0
        %v877 = vadd.f32 0.0, %v876
        %v878 = vpop.f32.mrb[0].mxu0
        %879 = vmatprep.mubr.bf16.mxu0 0
        %880 = vmatmul.mubr.bf16.gmra.mrb[0].mxu0 %v620
        %v881 = vpop.f32.mrb[0].mxu0
        %v882 = vadd.f32 0.0, %v881
        %v883 = vpop.f32.mrb[0].mxu0
        %v884 = vpop.f32.mrb[0].mxu0
        %v885 = vadd.f32 0.0, %v884
        %v886 = vpop.f32.mrb[0].mxu0
        %887 = vmatprep.mubr.bf16.mxu0 0
        %888 = vmatmul.mubr.bf16.gmra.mrb[0].mxu0 %v623
        %v889 = vpop.f32.mrb[0].mxu0
        %v890 = vadd.f32 0.0, %v889
        %v891 = vpop.f32.mrb[0].mxu0
        %v892 = vpop.f32.mrb[0].mxu0
        %v893 = vadd.f32 0.0, %v892
        %v894 = vpop.f32.mrb[0].mxu0
        %895 = vmatprep.mubr.bf16.mxu0 0
        %896 = vmatmul.mubr.bf16.gmra.mrb[0].mxu0 %v626
        %v897 = vpop.f32.mrb[0].mxu0
        %v898 = vadd.f32 0.0, %v897
        %v899 = vpop.f32.mrb[0].mxu0
        %v900 = vpop.f32.mrb[0].mxu0
        %v901 = vadd.f32 0.0, %v900
        %v902 = vpop.f32.mrb[0].mxu0
        %903 = vmatprep.mubr.bf16.mxu0 0
        %904 = vmatmul.mubr.bf16.gmra.mrb[0].mxu0 %v629
        %v905 = vpop.f32.mrb[0].mxu0
        %v906 = vadd.f32 0.0, %v905
        %v907 = vpop.f32.mrb[0].mxu0
        %v908 = vpop.f32.mrb[0].mxu0
        %v909 = vadd.f32 0.0, %v908
        %v910 = vpop.f32.mrb[0].mxu0
        %911 = vmatprep.mubr.bf16.mxu0 0
        %912 = vmatmul.mubr.bf16.gmra.mrb[0].mxu0 %v632
        %v913 = vpop.f32.mrb[0].mxu0
        %v914 = vadd.f32 0.0, %v913
        %v915 = vpop.f32.mrb[0].mxu0
        %v916 = vpop.f32.mrb[0].mxu0
        %v917 = vadd.f32 0.0, %v916
        %v918 = vpop.f32.mrb[0].mxu0
        %919 = vmatprep.mubr.bf16.mxu0 0
        %920 = vmatmul.mubr.bf16.gmra.mrb[0].mxu0 %v635
        %v921 = vpop.f32.mrb[0].mxu0
        %v922 = vadd.f32 0.0, %v921
        %v923 = vpop.f32.mrb[0].mxu0
        %v924 = vpop.f32.mrb[0].mxu0
        %v925 = vadd.f32 0.0, %v924
        %v926 = vpop.f32.mrb[0].mxu0
        %927 = vmatprep.mubr.bf16.mxu0 0
        %928 = vmatmul.mubr.bf16.gmra.mrb[0].mxu0 %v638
        %v929 = vpop.f32.mrb[0].mxu0
        %v930 = vadd.f32 0.0, %v929
        %v931 = vpop.f32.mrb[0].mxu0
        %v932 = vpop.f32.mrb[0].mxu0
        %v933 = vadd.f32 0.0, %v932
        %v934 = vpop.f32.mrb[0].mxu0
        %935 = vmatprep.mubr.bf16.mxu0 0
        %936 = vmatmul.mubr.bf16.gmra.mrb[0].mxu0 %v641
        %v937 = vpop.f32.mrb[0].mxu0
        %v938 = vadd.f32 0.0, %v937
        %v939 = vpop.f32.mrb[0].mxu0
        %v940 = vpop.f32.mrb[0].mxu0
        %v941 = vadd.f32 0.0, %v940
        %v942 = vpop.f32.mrb[0].mxu0
        %943 = vmatprep.mubr.bf16.mxu0 0
        %944 = vmatmul.mubr.bf16.gmra.mrb[0].mxu0 %v644
        %v945 = vpop.f32.mrb[0].mxu0
        %v946 = vadd.f32 0.0, %v945
        %v947 = vpop.f32.mrb[0].mxu0
        %v948 = vpop.f32.mrb[0].mxu0
        %v949 = vadd.f32 0.0, %v948
        %v950 = vpop.f32.mrb[0].mxu0
        %951 = vmatprep.mubr.bf16.mxu0 0
        %952 = vmatmul.mubr.bf16.gmra.mrb[0].mxu0 %v647
        %v953 = vpop.f32.mrb[0].mxu0
        %v954 = vadd.f32 0.0, %v953
        %v955 = vpop.f32.mrb[0].mxu0
        %v956 = vpop.f32.mrb[0].mxu0
        %v957 = vadd.f32 0.0, %v956
        %v958 = vpop.f32.mrb[0].mxu0
        %959 = vmatprep.mubr.bf16.mxu0 0
        %960 = vmatmul.mubr.bf16.gmra.mrb[0].mxu0 %v650
        %v961 = vpop.f32.mrb[0].mxu0
        %v962 = vadd.f32 0.0, %v961
        %v963 = vpop.f32.mrb[0].mxu0
        %v964 = vpop.f32.mrb[0].mxu0
        %v965 = vadd.f32 0.0, %v964
        %v966 = vpop.f32.mrb[0].mxu0
        %967 = vmatprep.mubr.bf16.mxu0 0
        %968 = vmatmul.mubr.bf16.gmra.mrb[0].mxu0 %v653
        %v969 = vpop.f32.mrb[0].mxu0
        %v970 = vadd.f32 0.0, %v969
        %v971 = vpop.f32.mrb[0].mxu0
        %v972 = vpop.f32.mrb[0].mxu0
        %v973 = vadd.f32 0.0, %v972
        %v974 = vpop.f32.mrb[0].mxu0
        %975 = vdwg.mxu0
        %v980 = vunpack.c.l.b16 %v265
        %v981 = vunpack.c.l.b16 %v266
        %v982 = vunpack.c.l.b16 %v267
        %v983 = vunpack.c.l.b16 %v268
        %v984 = vpack.c.b16 %v981, %v980
        %v985 = vpack.c.b16 %v983, %v982
        %v990 = vunpack.c.l.b16 %v345
        %v991 = vunpack.c.l.b16 %v346
        %v992 = vunpack.c.l.b16 %v347
        %v993 = vunpack.c.l.b16 %v348
        %v994 = vpack.c.b16 %v991, %v990
        %v995 = vpack.c.b16 %v993, %v992
        %v999 = vsel %vm546, %v984, 0
        %v1002 = vsel %vm546, %v985, 0
        %1004 = vmatprep.subr.bf16.mxu0 0
        %1005 = vmatpush1.bf16.msra.mxu0 %v994
        %1006 = vmatprep.subr.bf16.mxu0 0
        %1007 = vmatpush1.bf16.msra.mxu0 %v995
        %1008 = vmatprep.subr.bf16.mxu0 0
        %1009 = vmatpush1.bf16.msra.mxu0 0
        %1010 = vmatprep.subr.bf16.mxu0 0
        %1011 = vmatpush1.bf16.msra.mxu0 0
        %1012 = vmatprep.subr.bf16.mxu0 0
        %1013 = vmatpush1.bf16.msra.mxu0 0
        %1014 = vmatprep.subr.bf16.mxu0 0
        %1015 = vmatpush1.bf16.msra.mxu0 0
        %1016 = vmatprep.subr.bf16.mxu0 0
        %1017 = vmatpush1.bf16.msra.mxu0 0
        %1018 = vmatprep.subr.bf16.mxu0 0
        %1019 = vmatpush1.bf16.msra.mxu0 0
        %1020 = vmatprep.subr.bf16.mxu0 0
        %1021 = vmatpush1.bf16.msra.mxu0 0
        %1022 = vmatprep.subr.bf16.mxu0 0
        %1023 = vmatpush1.bf16.msra.mxu0 0
        %1024 = vmatprep.subr.bf16.mxu0 0
        %1025 = vmatpush1.bf16.msra.mxu0 0
        %1026 = vmatprep.subr.bf16.mxu0 0
        %1027 = vmatpush1.bf16.msra.mxu0 0
        %1028 = vmatprep.subr.bf16.mxu0 0
        %1029 = vmatpush1.bf16.msra.mxu0 0
        %1030 = vmatprep.subr.bf16.mxu0 0
        %1031 = vmatpush1.bf16.msra.mxu0 0
        %1032 = vmatprep.subr.bf16.mxu0 0
        %1033 = vmatpush1.bf16.msra.mxu0 0
        %1034 = vmatprep.subr.bf16.mxu0 0
        %1035 = vmatpush1.bf16.msra.mxu0 0
        %1036 = vmatprep.mubr.bf16.mxu0 0
        %1037 = vmatmul.mubr.bf16.gmra.mrb[0].mxu0 %v999
        %v1038 = vpop.f32.mrb[0].mxu0
        %v1039 = vadd.f32 %v690, %v1038
        %v1040 = vpop.f32.mrb[0].mxu0
        %v1041 = vpop.f32.mrb[0].mxu0
        %v1042 = vadd.f32 %v693, %v1041
        %v1043 = vpop.f32.mrb[0].mxu0
        %1044 = vmatprep.mubr.bf16.mxu0 0
        %1045 = vmatmul.mubr.bf16.gmra.mrb[0].mxu0 %v1002
        %v1046 = vpop.f32.mrb[0].mxu0
        %v1047 = vadd.f32 %v698, %v1046
        %v1048 = vpop.f32.mrb[0].mxu0
        %v1049 = vpop.f32.mrb[0].mxu0
        %v1050 = vadd.f32 %v701, %v1049
        %v1051 = vpop.f32.mrb[0].mxu0
        %1052 = vmatprep.mubr.bf16.mxu0 0
        %1053 = vmatmul.mubr.bf16.gmra.mrb[0].mxu0 %v548
        %v1054 = vpop.f32.mrb[0].mxu0
        %v1055 = vadd.f32 %v706, %v1054
        %v1056 = vpop.f32.mrb[0].mxu0
        %v1057 = vpop.f32.mrb[0].mxu0
        %v1058 = vadd.f32 %v709, %v1057
        %v1059 = vpop.f32.mrb[0].mxu0
        %1060 = vmatprep.mubr.bf16.mxu0 0
        %1061 = vmatmul.mubr.bf16.gmra.mrb[0].mxu0 %v551
        %v1062 = vpop.f32.mrb[0].mxu0
        %v1063 = vadd.f32 %v714, %v1062
        %v1064 = vpop.f32.mrb[0].mxu0
        %v1065 = vpop.f32.mrb[0].mxu0
        %v1066 = vadd.f32 %v717, %v1065
        %v1067 = vpop.f32.mrb[0].mxu0
        %1068 = vmatprep.mubr.bf16.mxu0 0
        %1069 = vmatmul.mubr.bf16.gmra.mrb[0].mxu0 %v554
        %v1070 = vpop.f32.mrb[0].mxu0
        %v1071 = vadd.f32 %v722, %v1070
        %v1072 = vpop.f32.mrb[0].mxu0
        %v1073 = vpop.f32.mrb[0].mxu0
        %v1074 = vadd.f32 %v725, %v1073
        %v1075 = vpop.f32.mrb[0].mxu0
        %1076 = vmatprep.mubr.bf16.mxu0 0
        %1077 = vmatmul.mubr.bf16.gmra.mrb[0].mxu0 %v557
        %v1078 = vpop.f32.mrb[0].mxu0
        %v1079 = vadd.f32 %v730, %v1078
        %v1080 = vpop.f32.mrb[0].mxu0
        %v1081 = vpop.f32.mrb[0].mxu0
        %v1082 = vadd.f32 %v733, %v1081
        %v1083 = vpop.f32.mrb[0].mxu0
        %1084 = vmatprep.mubr.bf16.mxu0 0
        %1085 = vmatmul.mubr.bf16.gmra.mrb[0].mxu0 %v560
        %v1086 = vpop.f32.mrb[0].mxu0
        %v1087 = vadd.f32 %v738, %v1086
        %v1088 = vpop.f32.mrb[0].mxu0
        %v1089 = vpop.f32.mrb[0].mxu0
        %v1090 = vadd.f32 %v741, %v1089
        %v1091 = vpop.f32.mrb[0].mxu0
        %1092 = vmatprep.mubr.bf16.mxu0 0
        %1093 = vmatmul.mubr.bf16.gmra.mrb[0].mxu0 %v563
        %v1094 = vpop.f32.mrb[0].mxu0
        %v1095 = vadd.f32 %v746, %v1094
        %v1096 = vpop.f32.mrb[0].mxu0
        %v1097 = vpop.f32.mrb[0].mxu0
        %v1098 = vadd.f32 %v749, %v1097
        %v1099 = vpop.f32.mrb[0].mxu0
        %1100 = vmatprep.mubr.bf16.mxu0 0
        %1101 = vmatmul.mubr.bf16.gmra.mrb[0].mxu0 %v566
        %v1102 = vpop.f32.mrb[0].mxu0
        %v1103 = vadd.f32 %v754, %v1102
        %v1104 = vpop.f32.mrb[0].mxu0
        %v1105 = vpop.f32.mrb[0].mxu0
        %v1106 = vadd.f32 %v757, %v1105
        %v1107 = vpop.f32.mrb[0].mxu0
        %1108 = vmatprep.mubr.bf16.mxu0 0
        %1109 = vmatmul.mubr.bf16.gmra.mrb[0].mxu0 %v569
        %v1110 = vpop.f32.mrb[0].mxu0
        %v1111 = vadd.f32 %v762, %v1110
        %v1112 = vpop.f32.mrb[0].mxu0
        %v1113 = vpop.f32.mrb[0].mxu0
        %v1114 = vadd.f32 %v765, %v1113
        %v1115 = vpop.f32.mrb[0].mxu0
        %1116 = vmatprep.mubr.bf16.mxu0 0
        %1117 = vmatmul.mubr.bf16.gmra.mrb[0].mxu0 %v572
        %v1118 = vpop.f32.mrb[0].mxu0
        %v1119 = vadd.f32 %v770, %v1118
        %v1120 = vpop.f32.mrb[0].mxu0
        %v1121 = vpop.f32.mrb[0].mxu0
        %v1122 = vadd.f32 %v773, %v1121
        %v1123 = vpop.f32.mrb[0].mxu0
        %1124 = vmatprep.mubr.bf16.mxu0 0
        %1125 = vmatmul.mubr.bf16.gmra.mrb[0].mxu0 %v575
        %v1126 = vpop.f32.mrb[0].mxu0
        %v1127 = vadd.f32 %v778, %v1126
        %v1128 = vpop.f32.mrb[0].mxu0
        %v1129 = vpop.f32.mrb[0].mxu0
        %v1130 = vadd.f32 %v781, %v1129
        %v1131 = vpop.f32.mrb[0].mxu0
        %1132 = vmatprep.mubr.bf16.mxu0 0
        %1133 = vmatmul.mubr.bf16.gmra.mrb[0].mxu0 %v578
        %v1134 = vpop.f32.mrb[0].mxu0
        %v1135 = vadd.f32 %v786, %v1134
        %v1136 = vpop.f32.mrb[0].mxu0
        %v1137 = vpop.f32.mrb[0].mxu0
        %v1138 = vadd.f32 %v789, %v1137
        %v1139 = vpop.f32.mrb[0].mxu0
        %1140 = vmatprep.mubr.bf16.mxu0 0
        %1141 = vmatmul.mubr.bf16.gmra.mrb[0].mxu0 %v581
        %v1142 = vpop.f32.mrb[0].mxu0
        %v1143 = vadd.f32 %v794, %v1142
        %v1144 = vpop.f32.mrb[0].mxu0
        %v1145 = vpop.f32.mrb[0].mxu0
        %v1146 = vadd.f32 %v797, %v1145
        %v1147 = vpop.f32.mrb[0].mxu0
        %1148 = vmatprep.mubr.bf16.mxu0 0
        %1149 = vmatmul.mubr.bf16.gmra.mrb[0].mxu0 %v584
        %v1150 = vpop.f32.mrb[0].mxu0
        %v1151 = vadd.f32 %v802, %v1150
        %v1152 = vpop.f32.mrb[0].mxu0
        %v1153 = vpop.f32.mrb[0].mxu0
        %v1154 = vadd.f32 %v805, %v1153
        %v1155 = vpop.f32.mrb[0].mxu0
        %1156 = vmatprep.mubr.bf16.mxu0 0
        %1157 = vmatmul.mubr.bf16.gmra.mrb[0].mxu0 %v587
        %v1158 = vpop.f32.mrb[0].mxu0
        %v1159 = vadd.f32 %v810, %v1158
        %v1160 = vpop.f32.mrb[0].mxu0
        %v1161 = vpop.f32.mrb[0].mxu0
        %v1162 = vadd.f32 %v813, %v1161
        %v1163 = vpop.f32.mrb[0].mxu0
        %1164 = vmatprep.mubr.bf16.mxu0 0
        %1165 = vmatmul.mubr.bf16.gmra.mrb[0].mxu0 %v590
        %v1166 = vpop.f32.mrb[0].mxu0
        %v1167 = vadd.f32 %v818, %v1166
        %v1168 = vpop.f32.mrb[0].mxu0
        %v1169 = vpop.f32.mrb[0].mxu0
        %v1170 = vadd.f32 %v821, %v1169
        %v1171 = vpop.f32.mrb[0].mxu0
        %1172 = vmatprep.mubr.bf16.mxu0 0
        %1173 = vmatmul.mubr.bf16.gmra.mrb[0].mxu0 %v593
        %v1174 = vpop.f32.mrb[0].mxu0
        %v1175 = vadd.f32 %v826, %v1174
        %v1176 = vpop.f32.mrb[0].mxu0
        %v1177 = vpop.f32.mrb[0].mxu0
        %v1178 = vadd.f32 %v829, %v1177
        %v1179 = vpop.f32.mrb[0].mxu0
        %1180 = vmatprep.mubr.bf16.mxu0 0
        %1181 = vmatmul.mubr.bf16.gmra.mrb[0].mxu0 %v596
        %v1182 = vpop.f32.mrb[0].mxu0
        %v1183 = vadd.f32 %v834, %v1182
        %v1184 = vpop.f32.mrb[0].mxu0
        %v1185 = vpop.f32.mrb[0].mxu0
        %v1186 = vadd.f32 %v837, %v1185
        %v1187 = vpop.f32.mrb[0].mxu0
        %1188 = vmatprep.mubr.bf16.mxu0 0
        %1189 = vmatmul.mubr.bf16.gmra.mrb[0].mxu0 %v599
        %v1190 = vpop.f32.mrb[0].mxu0
        %v1191 = vadd.f32 %v842, %v1190
        %v1192 = vpop.f32.mrb[0].mxu0
        %v1193 = vpop.f32.mrb[0].mxu0
        %v1194 = vadd.f32 %v845, %v1193
        %v1195 = vpop.f32.mrb[0].mxu0
        %1196 = vmatprep.mubr.bf16.mxu0 0
        %1197 = vmatmul.mubr.bf16.gmra.mrb[0].mxu0 %v602
        %v1198 = vpop.f32.mrb[0].mxu0
        %v1199 = vadd.f32 %v850, %v1198
        %v1200 = vpop.f32.mrb[0].mxu0
        %v1201 = vpop.f32.mrb[0].mxu0
        %v1202 = vadd.f32 %v853, %v1201
        %v1203 = vpop.f32.mrb[0].mxu0
        %1204 = vmatprep.mubr.bf16.mxu0 0
        %1205 = vmatmul.mubr.bf16.gmra.mrb[0].mxu0 %v605
        %v1206 = vpop.f32.mrb[0].mxu0
        %v1207 = vadd.f32 %v858, %v1206
        %v1208 = vpop.f32.mrb[0].mxu0
        %v1209 = vpop.f32.mrb[0].mxu0
        %v1210 = vadd.f32 %v861, %v1209
        %v1211 = vpop.f32.mrb[0].mxu0
        %1212 = vmatprep.mubr.bf16.mxu0 0
        %1213 = vmatmul.mubr.bf16.gmra.mrb[0].mxu0 %v608
        %v1214 = vpop.f32.mrb[0].mxu0
        %v1215 = vadd.f32 %v866, %v1214
        %v1216 = vpop.f32.mrb[0].mxu0
        %v1217 = vpop.f32.mrb[0].mxu0
        %v1218 = vadd.f32 %v869, %v1217
        %v1219 = vpop.f32.mrb[0].mxu0
        %1220 = vmatprep.mubr.bf16.mxu0 0
        %1221 = vmatmul.mubr.bf16.gmra.mrb[0].mxu0 %v611
        %v1222 = vpop.f32.mrb[0].mxu0
        %v1223 = vadd.f32 %v874, %v1222
        %v1224 = vpop.f32.mrb[0].mxu0
        %v1225 = vpop.f32.mrb[0].mxu0
        %v1226 = vadd.f32 %v877, %v1225
        %v1227 = vpop.f32.mrb[0].mxu0
        %1228 = vmatprep.mubr.bf16.mxu0 0
        %1229 = vmatmul.mubr.bf16.gmra.mrb[0].mxu0 %v614
        %v1230 = vpop.f32.mrb[0].mxu0
        %v1231 = vadd.f32 %v882, %v1230
        %v1232 = vpop.f32.mrb[0].mxu0
        %v1233 = vpop.f32.mrb[0].mxu0
        %v1234 = vadd.f32 %v885, %v1233
        %v1235 = vpop.f32.mrb[0].mxu0
        %1236 = vmatprep.mubr.bf16.mxu0 0
        %1237 = vmatmul.mubr.bf16.gmra.mrb[0].mxu0 %v617
        %v1238 = vpop.f32.mrb[0].mxu0
        %v1239 = vadd.f32 %v890, %v1238
        %v1240 = vpop.f32.mrb[0].mxu0
        %v1241 = vpop.f32.mrb[0].mxu0
        %v1242 = vadd.f32 %v893, %v1241
        %v1243 = vpop.f32.mrb[0].mxu0
        %1244 = vmatprep.mubr.bf16.mxu0 0
        %1245 = vmatmul.mubr.bf16.gmra.mrb[0].mxu0 %v620
        %v1246 = vpop.f32.mrb[0].mxu0
        %v1247 = vadd.f32 %v898, %v1246
        %v1248 = vpop.f32.mrb[0].mxu0
        %v1249 = vpop.f32.mrb[0].mxu0
        %v1250 = vadd.f32 %v901, %v1249
        %v1251 = vpop.f32.mrb[0].mxu0
        %1252 = vmatprep.mubr.bf16.mxu0 0
        %1253 = vmatmul.mubr.bf16.gmra.mrb[0].mxu0 %v623
        %v1254 = vpop.f32.mrb[0].mxu0
        %v1255 = vadd.f32 %v906, %v1254
        %v1256 = vpop.f32.mrb[0].mxu0
        %v1257 = vpop.f32.mrb[0].mxu0
        %v1258 = vadd.f32 %v909, %v1257
        %v1259 = vpop.f32.mrb[0].mxu0
        %1260 = vmatprep.mubr.bf16.mxu0 0
        %1261 = vmatmul.mubr.bf16.gmra.mrb[0].mxu0 %v626
        %v1262 = vpop.f32.mrb[0].mxu0
        %v1263 = vadd.f32 %v914, %v1262
        %v1264 = vpop.f32.mrb[0].mxu0
        %v1265 = vpop.f32.mrb[0].mxu0
        %v1266 = vadd.f32 %v917, %v1265
        %v1267 = vpop.f32.mrb[0].mxu0
        %1268 = vmatprep.mubr.bf16.mxu0 0
        %1269 = vmatmul.mubr.bf16.gmra.mrb[0].mxu0 %v629
        %v1270 = vpop.f32.mrb[0].mxu0
        %v1271 = vadd.f32 %v922, %v1270
        %v1272 = vpop.f32.mrb[0].mxu0
        %v1273 = vpop.f32.mrb[0].mxu0
        %v1274 = vadd.f32 %v925, %v1273
        %v1275 = vpop.f32.mrb[0].mxu0
        %1276 = vmatprep.mubr.bf16.mxu0 0
        %1277 = vmatmul.mubr.bf16.gmra.mrb[0].mxu0 %v632
        %v1278 = vpop.f32.mrb[0].mxu0
        %v1279 = vadd.f32 %v930, %v1278
        %v1280 = vpop.f32.mrb[0].mxu0
        %v1281 = vpop.f32.mrb[0].mxu0
        %v1282 = vadd.f32 %v933, %v1281
        %v1283 = vpop.f32.mrb[0].mxu0
        %1284 = vmatprep.mubr.bf16.mxu0 0
        %1285 = vmatmul.mubr.bf16.gmra.mrb[0].mxu0 %v635
        %v1286 = vpop.f32.mrb[0].mxu0
        %v1287 = vadd.f32 %v938, %v1286
        %v1288 = vpop.f32.mrb[0].mxu0
        %v1289 = vpop.f32.mrb[0].mxu0
        %v1290 = vadd.f32 %v941, %v1289
        %v1291 = vpop.f32.mrb[0].mxu0
        %1292 = vmatprep.mubr.bf16.mxu0 0
        %1293 = vmatmul.mubr.bf16.gmra.mrb[0].mxu0 %v638
        %v1294 = vpop.f32.mrb[0].mxu0
        %v1295 = vadd.f32 %v946, %v1294
        %v1296 = vpop.f32.mrb[0].mxu0
        %v1297 = vpop.f32.mrb[0].mxu0
        %v1298 = vadd.f32 %v949, %v1297
        %v1299 = vpop.f32.mrb[0].mxu0
        %1300 = vmatprep.mubr.bf16.mxu0 0
        %1301 = vmatmul.mubr.bf16.gmra.mrb[0].mxu0 %v641
        %v1302 = vpop.f32.mrb[0].mxu0
        %v1303 = vadd.f32 %v954, %v1302
        %v1304 = vpop.f32.mrb[0].mxu0
        %v1305 = vpop.f32.mrb[0].mxu0
        %v1306 = vadd.f32 %v957, %v1305
        %v1307 = vpop.f32.mrb[0].mxu0
        %1308 = vmatprep.mubr.bf16.mxu0 0
        %1309 = vmatmul.mubr.bf16.gmra.mrb[0].mxu0 %v644
        %v1310 = vpop.f32.mrb[0].mxu0
        %v1311 = vadd.f32 %v962, %v1310
        %v1312 = vpop.f32.mrb[0].mxu0
        %v1313 = vpop.f32.mrb[0].mxu0
        %v1314 = vadd.f32 %v965, %v1313
        %v1315 = vpop.f32.mrb[0].mxu0
        %1316 = vmatprep.mubr.bf16.mxu0 0
        %1317 = vmatmul.mubr.bf16.gmra.mrb[0].mxu0 %v647
        %v1318 = vpop.f32.mrb[0].mxu0
        %v1319 = vadd.f32 %v970, %v1318
        %v1320 = vpop.f32.mrb[0].mxu0
        %v1321 = vpop.f32.mrb[0].mxu0
        %v1322 = vadd.f32 %v973, %v1321
        %v1323 = vpop.f32.mrb[0].mxu0
        %1324 = vdwg.mxu0
        %s1325 = scalar_lea.vmem [#allocation5], 32
        %v1326 = vld [vmem:[%s1325] sm:$0xf]
        %v1327 = vld [vmem:[%s1325 + $0x4] sm:$0xf]
        %v1328 = vld [vmem:[%s1325 + $0x8] sm:$0xf]
        %v1329 = vld [vmem:[%s1325 + $0xc] sm:$0xf]
        %v1334 = vunpack.c.l.b16 %v341
        %v1335 = vunpack.c.l.b16 %v342
        %v1336 = vunpack.c.l.b16 %v343
        %v1337 = vunpack.c.l.b16 %v344
        %v1338 = vpack.c.b16 %v1335, %v1334
        %v1339 = vpack.c.b16 %v1337, %v1336
        %v1344 = vunpack.c.l.b16 %v1326
        %v1345 = vunpack.c.l.b16 %v1327
        %v1346 = vunpack.c.l.b16 %v1328
        %v1347 = vunpack.c.l.b16 %v1329
        %v1348 = vpack.c.b16 %v1345, %v1344
        %v1349 = vpack.c.b16 %v1347, %v1346
        %v1353 = vsel %vm546, %v1338, 0
        %v1356 = vsel %vm546, %v1339, 0
        %1358 = vmatprep.subr.bf16.mxu0 0
        %1359 = vmatpush1.bf16.msra.mxu0 %v1348
        %1360 = vmatprep.subr.bf16.mxu0 0
        %1361 = vmatpush1.bf16.msra.mxu0 %v1349
        %1362 = vmatprep.subr.bf16.mxu0 0
        %1363 = vmatpush1.bf16.msra.mxu0 0
        %1364 = vmatprep.subr.bf16.mxu0 0
        %1365 = vmatpush1.bf16.msra.mxu0 0
        %1366 = vmatprep.subr.bf16.mxu0 0
        %1367 = vmatpush1.bf16.msra.mxu0 0
        %1368 = vmatprep.subr.bf16.mxu0 0
        %1369 = vmatpush1.bf16.msra.mxu0 0
        %1370 = vmatprep.subr.bf16.mxu0 0
        %1371 = vmatpush1.bf16.msra.mxu0 0
        %1372 = vmatprep.subr.bf16.mxu0 0
        %1373 = vmatpush1.bf16.msra.mxu0 0
        %1374 = vmatprep.subr.bf16.mxu0 0
        %1375 = vmatpush1.bf16.msra.mxu0 0
        %1376 = vmatprep.subr.bf16.mxu0 0
        %1377 = vmatpush1.bf16.msra.mxu0 0
        %1378 = vmatprep.subr.bf16.mxu0 0
        %1379 = vmatpush1.bf16.msra.mxu0 0
        %1380 = vmatprep.subr.bf16.mxu0 0
        %1381 = vmatpush1.bf16.msra.mxu0 0
        %1382 = vmatprep.subr.bf16.mxu0 0
        %1383 = vmatpush1.bf16.msra.mxu0 0
        %1384 = vmatprep.subr.bf16.mxu0 0
        %1385 = vmatpush1.bf16.msra.mxu0 0
        %1386 = vmatprep.subr.bf16.mxu0 0
        %1387 = vmatpush1.bf16.msra.mxu0 0
        %1388 = vmatprep.subr.bf16.mxu0 0
        %1389 = vmatpush1.bf16.msra.mxu0 0
        %1390 = vmatprep.mubr.bf16.mxu0 0
        %1391 = vmatmul.mubr.bf16.gmra.mrb[0].mxu0 %v554
        %v1392 = vpop.f32.mrb[0].mxu0
        %v1393 = vadd.f32 0.0, %v1392
        %v1394 = vpop.f32.mrb[0].mxu0
        %v1395 = vpop.f32.mrb[0].mxu0
        %v1396 = vadd.f32 0.0, %v1395
        %v1397 = vpop.f32.mrb[0].mxu0
        %1398 = vmatprep.mubr.bf16.mxu0 0
        %1399 = vmatmul.mubr.bf16.gmra.mrb[0].mxu0 %v557
        %v1400 = vpop.f32.mrb[0].mxu0
        %v1401 = vadd.f32 0.0, %v1400
        %v1402 = vpop.f32.mrb[0].mxu0
        %v1403 = vpop.f32.mrb[0].mxu0
        %v1404 = vadd.f32 0.0, %v1403
        %v1405 = vpop.f32.mrb[0].mxu0
        %1406 = vmatprep.mubr.bf16.mxu0 0
        %1407 = vmatmul.mubr.bf16.gmra.mrb[0].mxu0 %v560
        %v1408 = vpop.f32.mrb[0].mxu0
        %v1409 = vadd.f32 0.0, %v1408
        %v1410 = vpop.f32.mrb[0].mxu0
        %v1411 = vpop.f32.mrb[0].mxu0
        %v1412 = vadd.f32 0.0, %v1411
        %v1413 = vpop.f32.mrb[0].mxu0
        %1414 = vmatprep.mubr.bf16.mxu0 0
        %1415 = vmatmul.mubr.bf16.gmra.mrb[0].mxu0 %v563
        %v1416 = vpop.f32.mrb[0].mxu0
        %v1417 = vadd.f32 0.0, %v1416
        %v1418 = vpop.f32.mrb[0].mxu0
        %v1419 = vpop.f32.mrb[0].mxu0
        %v1420 = vadd.f32 0.0, %v1419
        %v1421 = vpop.f32.mrb[0].mxu0
        %1422 = vmatprep.mubr.bf16.mxu0 0
        %1423 = vmatmul.mubr.bf16.gmra.mrb[0].mxu0 %v566
        %v1424 = vpop.f32.mrb[0].mxu0
        %v1425 = vadd.f32 0.0, %v1424
        %v1426 = vpop.f32.mrb[0].mxu0
        %v1427 = vpop.f32.mrb[0].mxu0
        %v1428 = vadd.f32 0.0, %v1427
        %v1429 = vpop.f32.mrb[0].mxu0
        %1430 = vmatprep.mubr.bf16.mxu0 0
        %1431 = vmatmul.mubr.bf16.gmra.mrb[0].mxu0 %v569
        %v1432 = vpop.f32.mrb[0].mxu0
        %v1433 = vadd.f32 0.0, %v1432
        %v1434 = vpop.f32.mrb[0].mxu0
        %v1435 = vpop.f32.mrb[0].mxu0
        %v1436 = vadd.f32 0.0, %v1435
        %v1437 = vpop.f32.mrb[0].mxu0
        %1438 = vmatprep.mubr.bf16.mxu0 0
        %1439 = vmatmul.mubr.bf16.gmra.mrb[0].mxu0 %v572
        %v1440 = vpop.f32.mrb[0].mxu0
        %v1441 = vadd.f32 0.0, %v1440
        %v1442 = vpop.f32.mrb[0].mxu0
        %v1443 = vpop.f32.mrb[0].mxu0
        %v1444 = vadd.f32 0.0, %v1443
        %v1445 = vpop.f32.mrb[0].mxu0
        %1446 = vmatprep.mubr.bf16.mxu0 0
        %1447 = vmatmul.mubr.bf16.gmra.mrb[0].mxu0 %v575
        %v1448 = vpop.f32.mrb[0].mxu0
        %v1449 = vadd.f32 0.0, %v1448
        %v1450 = vpop.f32.mrb[0].mxu0
        %v1451 = vpop.f32.mrb[0].mxu0
        %v1452 = vadd.f32 0.0, %v1451
        %v1453 = vpop.f32.mrb[0].mxu0
        %1454 = vmatprep.mubr.bf16.mxu0 0
        %1455 = vmatmul.mubr.bf16.gmra.mrb[0].mxu0 %v578
        %v1456 = vpop.f32.mrb[0].mxu0
        %v1457 = vadd.f32 0.0, %v1456
        %v1458 = vpop.f32.mrb[0].mxu0
        %v1459 = vpop.f32.mrb[0].mxu0
        %v1460 = vadd.f32 0.0, %v1459
        %v1461 = vpop.f32.mrb[0].mxu0
        %1462 = vmatprep.mubr.bf16.mxu0 0
        %1463 = vmatmul.mubr.bf16.gmra.mrb[0].mxu0 %v581
        %v1464 = vpop.f32.mrb[0].mxu0
        %v1465 = vadd.f32 0.0, %v1464
        %v1466 = vpop.f32.mrb[0].mxu0
        %v1467 = vpop.f32.mrb[0].mxu0
        %v1468 = vadd.f32 0.0, %v1467
        %v1469 = vpop.f32.mrb[0].mxu0
        %1470 = vmatprep.mubr.bf16.mxu0 0
        %1471 = vmatmul.mubr.bf16.gmra.mrb[0].mxu0 %v584
        %v1472 = vpop.f32.mrb[0].mxu0
        %v1473 = vadd.f32 0.0, %v1472
        %v1474 = vpop.f32.mrb[0].mxu0
        %v1475 = vpop.f32.mrb[0].mxu0
        %v1476 = vadd.f32 0.0, %v1475
        %v1477 = vpop.f32.mrb[0].mxu0
        %1478 = vmatprep.mubr.bf16.mxu0 0
        %1479 = vmatmul.mubr.bf16.gmra.mrb[0].mxu0 %v587
        %v1480 = vpop.f32.mrb[0].mxu0
        %v1481 = vadd.f32 0.0, %v1480
        %v1482 = vpop.f32.mrb[0].mxu0
        %v1483 = vpop.f32.mrb[0].mxu0
        %v1484 = vadd.f32 0.0, %v1483
        %v1485 = vpop.f32.mrb[0].mxu0
        %1486 = vmatprep.mubr.bf16.mxu0 0
        %1487 = vmatmul.mubr.bf16.gmra.mrb[0].mxu0 %v590
        %v1488 = vpop.f32.mrb[0].mxu0
        %v1489 = vadd.f32 0.0, %v1488
        %v1490 = vpop.f32.mrb[0].mxu0
        %v1491 = vpop.f32.mrb[0].mxu0
        %v1492 = vadd.f32 0.0, %v1491
        %v1493 = vpop.f32.mrb[0].mxu0
        %1494 = vmatprep.mubr.bf16.mxu0 0
        %1495 = vmatmul.mubr.bf16.gmra.mrb[0].mxu0 %v593
        %v1496 = vpop.f32.mrb[0].mxu0
        %v1497 = vadd.f32 0.0, %v1496
        %v1498 = vpop.f32.mrb[0].mxu0
        %v1499 = vpop.f32.mrb[0].mxu0
        %v1500 = vadd.f32 0.0, %v1499
        %v1501 = vpop.f32.mrb[0].mxu0
        %1502 = vmatprep.mubr.bf16.mxu0 0
        %1503 = vmatmul.mubr.bf16.gmra.mrb[0].mxu0 %v596
        %v1504 = vpop.f32.mrb[0].mxu0
        %v1505 = vadd.f32 0.0, %v1504
        %v1506 = vpop.f32.mrb[0].mxu0
        %v1507 = vpop.f32.mrb[0].mxu0
        %v1508 = vadd.f32 0.0, %v1507
        %v1509 = vpop.f32.mrb[0].mxu0
        %1510 = vmatprep.mubr.bf16.mxu0 0
        %1511 = vmatmul.mubr.bf16.gmra.mrb[0].mxu0 %v599
        %v1512 = vpop.f32.mrb[0].mxu0
        %v1513 = vadd.f32 0.0, %v1512
        %v1514 = vpop.f32.mrb[0].mxu0
        %v1515 = vpop.f32.mrb[0].mxu0
        %v1516 = vadd.f32 0.0, %v1515
        %v1517 = vpop.f32.mrb[0].mxu0
        %1518 = vmatprep.mubr.bf16.mxu0 0
        %1519 = vmatmul.mubr.bf16.gmra.mrb[0].mxu0 %v602
        %v1520 = vpop.f32.mrb[0].mxu0
        %v1521 = vadd.f32 0.0, %v1520
        %v1522 = vpop.f32.mrb[0].mxu0
        %v1523 = vpop.f32.mrb[0].mxu0
        %v1524 = vadd.f32 0.0, %v1523
        %v1525 = vpop.f32.mrb[0].mxu0
        %1526 = vmatprep.mubr.bf16.mxu0 0
        %1527 = vmatmul.mubr.bf16.gmra.mrb[0].mxu0 %v605
        %v1528 = vpop.f32.mrb[0].mxu0
        %v1529 = vadd.f32 0.0, %v1528
        %v1530 = vpop.f32.mrb[0].mxu0
        %v1531 = vpop.f32.mrb[0].mxu0
        %v1532 = vadd.f32 0.0, %v1531
        %v1533 = vpop.f32.mrb[0].mxu0
        %1534 = vmatprep.mubr.bf16.mxu0 0
        %1535 = vmatmul.mubr.bf16.gmra.mrb[0].mxu0 %v608
        %v1536 = vpop.f32.mrb[0].mxu0
        %v1537 = vadd.f32 0.0, %v1536
        %v1538 = vpop.f32.mrb[0].mxu0
        %v1539 = vpop.f32.mrb[0].mxu0
        %v1540 = vadd.f32 0.0, %v1539
        %v1541 = vpop.f32.mrb[0].mxu0
        %1542 = vmatprep.mubr.bf16.mxu0 0
        %1543 = vmatmul.mubr.bf16.gmra.mrb[0].mxu0 %v611
        %v1544 = vpop.f32.mrb[0].mxu0
        %v1545 = vadd.f32 0.0, %v1544
        %v1546 = vpop.f32.mrb[0].mxu0
        %v1547 = vpop.f32.mrb[0].mxu0
        %v1548 = vadd.f32 0.0, %v1547
        %v1549 = vpop.f32.mrb[0].mxu0
        %1550 = vmatprep.mubr.bf16.mxu0 0
        %1551 = vmatmul.mubr.bf16.gmra.mrb[0].mxu0 %v614
        %v1552 = vpop.f32.mrb[0].mxu0
        %v1553 = vadd.f32 0.0, %v1552
        %v1554 = vpop.f32.mrb[0].mxu0
        %v1555 = vpop.f32.mrb[0].mxu0
        %v1556 = vadd.f32 0.0, %v1555
        %v1557 = vpop.f32.mrb[0].mxu0
        %1558 = vmatprep.mubr.bf16.mxu0 0
        %1559 = vmatmul.mubr.bf16.gmra.mrb[0].mxu0 %v617
        %v1560 = vpop.f32.mrb[0].mxu0
        %v1561 = vadd.f32 0.0, %v1560
        %v1562 = vpop.f32.mrb[0].mxu0
        %v1563 = vpop.f32.mrb[0].mxu0
        %v1564 = vadd.f32 0.0, %v1563
        %v1565 = vpop.f32.mrb[0].mxu0
        %1566 = vmatprep.mubr.bf16.mxu0 0
        %1567 = vmatmul.mubr.bf16.gmra.mrb[0].mxu0 %v620
        %v1568 = vpop.f32.mrb[0].mxu0
        %v1569 = vadd.f32 0.0, %v1568
        %v1570 = vpop.f32.mrb[0].mxu0
        %v1571 = vpop.f32.mrb[0].mxu0
        %v1572 = vadd.f32 0.0, %v1571
        %v1573 = vpop.f32.mrb[0].mxu0
        %1574 = vmatprep.mubr.bf16.mxu0 0
        %1575 = vmatmul.mubr.bf16.gmra.mrb[0].mxu0 %v623
        %v1576 = vpop.f32.mrb[0].mxu0
        %v1577 = vadd.f32 0.0, %v1576
        %v1578 = vpop.f32.mrb[0].mxu0
        %v1579 = vpop.f32.mrb[0].mxu0
        %v1580 = vadd.f32 0.0, %v1579
        %v1581 = vpop.f32.mrb[0].mxu0
        %1582 = vmatprep.mubr.bf16.mxu0 0
        %1583 = vmatmul.mubr.bf16.gmra.mrb[0].mxu0 %v626
        %v1584 = vpop.f32.mrb[0].mxu0
        %v1585 = vadd.f32 0.0, %v1584
        %v1586 = vpop.f32.mrb[0].mxu0
        %v1587 = vpop.f32.mrb[0].mxu0
        %v1588 = vadd.f32 0.0, %v1587
        %v1589 = vpop.f32.mrb[0].mxu0
        %1590 = vmatprep.mubr.bf16.mxu0 0
        %1591 = vmatmul.mubr.bf16.gmra.mrb[0].mxu0 %v629
        %v1592 = vpop.f32.mrb[0].mxu0
        %v1593 = vadd.f32 0.0, %v1592
        %v1594 = vpop.f32.mrb[0].mxu0
        %v1595 = vpop.f32.mrb[0].mxu0
        %v1596 = vadd.f32 0.0, %v1595
        %v1597 = vpop.f32.mrb[0].mxu0
        %1598 = vmatprep.mubr.bf16.mxu0 0
        %1599 = vmatmul.mubr.bf16.gmra.mrb[0].mxu0 %v632
        %v1600 = vpop.f32.mrb[0].mxu0
        %v1601 = vadd.f32 0.0, %v1600
        %v1602 = vpop.f32.mrb[0].mxu0
        %v1603 = vpop.f32.mrb[0].mxu0
        %v1604 = vadd.f32 0.0, %v1603
        %v1605 = vpop.f32.mrb[0].mxu0
        %1606 = vmatprep.mubr.bf16.mxu0 0
        %1607 = vmatmul.mubr.bf16.gmra.mrb[0].mxu0 %v635
        %v1608 = vpop.f32.mrb[0].mxu0
        %v1609 = vadd.f32 0.0, %v1608
        %v1610 = vpop.f32.mrb[0].mxu0
        %v1611 = vpop.f32.mrb[0].mxu0
        %v1612 = vadd.f32 0.0, %v1611
        %v1613 = vpop.f32.mrb[0].mxu0
        %1614 = vmatprep.mubr.bf16.mxu0 0
        %1615 = vmatmul.mubr.bf16.gmra.mrb[0].mxu0 %v638
        %v1616 = vpop.f32.mrb[0].mxu0
        %v1617 = vadd.f32 0.0, %v1616
        %v1618 = vpop.f32.mrb[0].mxu0
        %v1619 = vpop.f32.mrb[0].mxu0
        %v1620 = vadd.f32 0.0, %v1619
        %v1621 = vpop.f32.mrb[0].mxu0
        %1622 = vmatprep.mubr.bf16.mxu0 0
        %1623 = vmatmul.mubr.bf16.gmra.mrb[0].mxu0 %v641
        %v1624 = vpop.f32.mrb[0].mxu0
        %v1625 = vadd.f32 0.0, %v1624
        %v1626 = vpop.f32.mrb[0].mxu0
        %v1627 = vpop.f32.mrb[0].mxu0
        %v1628 = vadd.f32 0.0, %v1627
        %v1629 = vpop.f32.mrb[0].mxu0
        %1630 = vmatprep.mubr.bf16.mxu0 0
        %1631 = vmatmul.mubr.bf16.gmra.mrb[0].mxu0 %v644
        %v1632 = vpop.f32.mrb[0].mxu0
        %v1633 = vadd.f32 0.0, %v1632
        %v1634 = vpop.f32.mrb[0].mxu0
        %v1635 = vpop.f32.mrb[0].mxu0
        %v1636 = vadd.f32 0.0, %v1635
        %v1637 = vpop.f32.mrb[0].mxu0
        %1638 = vmatprep.mubr.bf16.mxu0 0
        %1639 = vmatmul.mubr.bf16.gmra.mrb[0].mxu0 %v647
        %v1640 = vpop.f32.mrb[0].mxu0
        %v1641 = vadd.f32 0.0, %v1640
        %v1642 = vpop.f32.mrb[0].mxu0
        %v1643 = vpop.f32.mrb[0].mxu0
        %v1644 = vadd.f32 0.0, %v1643
        %v1645 = vpop.f32.mrb[0].mxu0
        %1646 = vmatprep.mubr.bf16.mxu0 0
        %1647 = vmatmul.mubr.bf16.gmra.mrb[0].mxu0 %v650
        %v1648 = vpop.f32.mrb[0].mxu0
        %v1649 = vadd.f32 0.0, %v1648
        %v1650 = vpop.f32.mrb[0].mxu0
        %v1651 = vpop.f32.mrb[0].mxu0
        %v1652 = vadd.f32 0.0, %v1651
        %v1653 = vpop.f32.mrb[0].mxu0
        %1654 = vmatprep.mubr.bf16.mxu0 0
        %1655 = vmatmul.mubr.bf16.gmra.mrb[0].mxu0 %v653
        %v1656 = vpop.f32.mrb[0].mxu0
        %v1657 = vadd.f32 0.0, %v1656
        %v1658 = vpop.f32.mrb[0].mxu0
        %v1659 = vpop.f32.mrb[0].mxu0
        %v1660 = vadd.f32 0.0, %v1659
        %v1661 = vpop.f32.mrb[0].mxu0
        %1662 = vmatprep.mubr.bf16.mxu0 0
        %1663 = vmatmul.mubr.bf16.gmra.mrb[0].mxu0 %v1353
        %v1664 = vpop.f32.mrb[0].mxu0
        %v1665 = vadd.f32 0.0, %v1664
        %v1666 = vpop.f32.mrb[0].mxu0
        %v1667 = vpop.f32.mrb[0].mxu0
        %v1668 = vadd.f32 0.0, %v1667
        %v1669 = vpop.f32.mrb[0].mxu0
        %1670 = vmatprep.mubr.bf16.mxu0 0
        %1671 = vmatmul.mubr.bf16.gmra.mrb[0].mxu0 %v1356
        %v1672 = vpop.f32.mrb[0].mxu0
        %v1673 = vadd.f32 0.0, %v1672
        %v1674 = vpop.f32.mrb[0].mxu0
        %v1675 = vpop.f32.mrb[0].mxu0
        %v1676 = vadd.f32 0.0, %v1675
        %v1677 = vpop.f32.mrb[0].mxu0
        %1678 = vdwg.mxu0
        %v1679 = vadd.f32 %v1039, %v1393
        %v1680 = vadd.f32 %v1042, %v1396
        %v1681 = vadd.f32 %v1047, %v1401
        %v1682 = vadd.f32 %v1050, %v1404
        %v1683 = vadd.f32 %v1055, %v1409
        %v1684 = vadd.f32 %v1058, %v1412
        %v1685 = vadd.f32 %v1063, %v1417
        %v1686 = vadd.f32 %v1066, %v1420
        %v1687 = vadd.f32 %v1071, %v1425
        %v1688 = vadd.f32 %v1074, %v1428
        %v1689 = vadd.f32 %v1079, %v1433
        %v1690 = vadd.f32 %v1082, %v1436
        %v1691 = vadd.f32 %v1087, %v1441
        %v1692 = vadd.f32 %v1090, %v1444
        %v1693 = vadd.f32 %v1095, %v1449
        %v1694 = vadd.f32 %v1098, %v1452
        %v1695 = vadd.f32 %v1103, %v1457
        %v1696 = vadd.f32 %v1106, %v1460
        %v1697 = vadd.f32 %v1111, %v1465
        %v1698 = vadd.f32 %v1114, %v1468
        %v1699 = vadd.f32 %v1119, %v1473
        %v1700 = vadd.f32 %v1122, %v1476
        %v1701 = vadd.f32 %v1127, %v1481
        %v1702 = vadd.f32 %v1130, %v1484
        %v1703 = vadd.f32 %v1135, %v1489
        %v1704 = vadd.f32 %v1138, %v1492
        %v1705 = vadd.f32 %v1143, %v1497
        %v1706 = vadd.f32 %v1146, %v1500
        %v1707 = vadd.f32 %v1151, %v1505
        %v1708 = vadd.f32 %v1154, %v1508
        %v1709 = vadd.f32 %v1159, %v1513
        %v1710 = vadd.f32 %v1162, %v1516
        %v1711 = vadd.f32 %v1167, %v1521
        %v1712 = vadd.f32 %v1170, %v1524
        %v1713 = vadd.f32 %v1175, %v1529
        %v1714 = vadd.f32 %v1178, %v1532
        %v1715 = vadd.f32 %v1183, %v1537
        %v1716 = vadd.f32 %v1186, %v1540
        %v1717 = vadd.f32 %v1191, %v1545
        %v1718 = vadd.f32 %v1194, %v1548
        %v1719 = vadd.f32 %v1199, %v1553
        %v1720 = vadd.f32 %v1202, %v1556
        %v1721 = vadd.f32 %v1207, %v1561
        %v1722 = vadd.f32 %v1210, %v1564
        %v1723 = vadd.f32 %v1215, %v1569
        %v1724 = vadd.f32 %v1218, %v1572
        %v1725 = vadd.f32 %v1223, %v1577
        %v1726 = vadd.f32 %v1226, %v1580
        %v1727 = vadd.f32 %v1231, %v1585
        %v1728 = vadd.f32 %v1234, %v1588
        %v1729 = vadd.f32 %v1239, %v1593
        %v1730 = vadd.f32 %v1242, %v1596
        %v1731 = vadd.f32 %v1247, %v1601
        %v1732 = vadd.f32 %v1250, %v1604
        %v1733 = vadd.f32 %v1255, %v1609
        %v1734 = vadd.f32 %v1258, %v1612
        %v1735 = vadd.f32 %v1263, %v1617
        %v1736 = vadd.f32 %v1266, %v1620
        %v1737 = vadd.f32 %v1271, %v1625
        %v1738 = vadd.f32 %v1274, %v1628
        %v1739 = vadd.f32 %v1279, %v1633
        %v1740 = vadd.f32 %v1282, %v1636
        %v1741 = vadd.f32 %v1287, %v1641
        %v1742 = vadd.f32 %v1290, %v1644
        %v1743 = vadd.f32 %v1295, %v1649
        %v1744 = vadd.f32 %v1298, %v1652
        %v1745 = vadd.f32 %v1303, %v1657
        %v1746 = vadd.f32 %v1306, %v1660
        %v1747 = vadd.f32 %v1311, %v1665
        %v1748 = vadd.f32 %v1314, %v1668
        %v1749 = vadd.f32 %v1319, %v1673
        %v1750 = vadd.f32 %v1322, %v1676
        %vm1823 = vcmask 1046528
        %v1824 = vrot.slane %v1679, 1
        %v1825 = vrot.slane %v1680, 1
        %v1826 = vsel %vm1823, %v1824, %v1825
        %v1827 = vrot.slane %v1681, 1
        %v1828 = vsel %vm1823, %v1825, %v1827
        %v1829 = vrot.slane %v1682, 1
        %v1830 = vsel %vm1823, %v1827, %v1829
        %v1831 = vrot.slane %v1683, 1
        %v1832 = vrot.slane %v1684, 1
        %v1833 = vsel %vm1823, %v1831, %v1832
        %v1834 = vrot.slane %v1685, 1
        %v1835 = vsel %vm1823, %v1832, %v1834
        %v1836 = vrot.slane %v1686, 1
        %v1837 = vsel %vm1823, %v1834, %v1836
        %v1838 = vrot.slane %v1687, 1
        %v1839 = vrot.slane %v1688, 1
        %v1840 = vsel %vm1823, %v1838, %v1839
        %v1841 = vrot.slane %v1689, 1
        %v1842 = vsel %vm1823, %v1839, %v1841
        %v1843 = vrot.slane %v1690, 1
        %v1844 = vsel %vm1823, %v1841, %v1843
        %v1845 = vrot.slane %v1691, 1
        %v1846 = vrot.slane %v1692, 1
        %v1847 = vsel %vm1823, %v1845, %v1846
        %v1848 = vrot.slane %v1693, 1
        %v1849 = vsel %vm1823, %v1846, %v1848
        %v1850 = vrot.slane %v1694, 1
        %v1851 = vsel %vm1823, %v1848, %v1850
        %v1852 = vrot.slane %v1695, 1
        %v1853 = vrot.slane %v1696, 1
        %v1854 = vsel %vm1823, %v1852, %v1853
        %v1855 = vrot.slane %v1697, 1
        %v1856 = vsel %vm1823, %v1853, %v1855
        %v1857 = vrot.slane %v1698, 1
        %v1858 = vsel %vm1823, %v1855, %v1857
        %v1859 = vrot.slane %v1699, 1
        %v1860 = vrot.slane %v1700, 1
        %v1861 = vsel %vm1823, %v1859, %v1860
        %v1862 = vrot.slane %v1701, 1
        %v1863 = vsel %vm1823, %v1860, %v1862
        %v1864 = vrot.slane %v1702, 1
        %v1865 = vsel %vm1823, %v1862, %v1864
        %v1866 = vrot.slane %v1703, 1
        %v1867 = vrot.slane %v1704, 1
        %v1868 = vsel %vm1823, %v1866, %v1867
        %v1869 = vrot.slane %v1705, 1
        %v1870 = vsel %vm1823, %v1867, %v1869
        %v1871 = vrot.slane %v1706, 1
        %v1872 = vsel %vm1823, %v1869, %v1871
        %v1873 = vrot.slane %v1707, 1
        %v1874 = vrot.slane %v1708, 1
        %v1875 = vsel %vm1823, %v1873, %v1874
        %v1876 = vrot.slane %v1709, 1
        %v1877 = vsel %vm1823, %v1874, %v1876
        %v1878 = vrot.slane %v1710, 1
        %v1879 = vsel %vm1823, %v1876, %v1878
        %v1880 = vrot.slane %v1711, 1
        %v1881 = vrot.slane %v1712, 1
        %v1882 = vsel %vm1823, %v1880, %v1881
        %v1883 = vrot.slane %v1713, 1
        %v1884 = vsel %vm1823, %v1881, %v1883
        %v1885 = vrot.slane %v1714, 1
        %v1886 = vsel %vm1823, %v1883, %v1885
        %v1887 = vrot.slane %v1715, 1
        %v1888 = vrot.slane %v1716, 1
        %v1889 = vsel %vm1823, %v1887, %v1888
        %v1890 = vrot.slane %v1717, 1
        %v1891 = vsel %vm1823, %v1888, %v1890
        %v1892 = vrot.slane %v1718, 1
        %v1893 = vsel %vm1823, %v1890, %v1892
        %v1894 = vrot.slane %v1719, 1
        %v1895 = vrot.slane %v1720, 1
        %v1896 = vsel %vm1823, %v1894, %v1895
        %v1897 = vrot.slane %v1721, 1
        %v1898 = vsel %vm1823, %v1895, %v1897
        %v1899 = vrot.slane %v1722, 1
        %v1900 = vsel %vm1823, %v1897, %v1899
        %v1901 = vrot.slane %v1723, 1
        %v1902 = vrot.slane %v1724, 1
        %v1903 = vsel %vm1823, %v1901, %v1902
        %v1904 = vrot.slane %v1725, 1
        %v1905 = vsel %vm1823, %v1902, %v1904
        %v1906 = vrot.slane %v1726, 1
        %v1907 = vsel %vm1823, %v1904, %v1906
        %v1908 = vrot.slane %v1727, 1
        %v1909 = vrot.slane %v1728, 1
        %v1910 = vsel %vm1823, %v1908, %v1909
        %v1911 = vrot.slane %v1729, 1
        %v1912 = vsel %vm1823, %v1909, %v1911
        %v1913 = vrot.slane %v1730, 1
        %v1914 = vsel %vm1823, %v1911, %v1913
        %v1915 = vrot.slane %v1731, 1
        %v1916 = vrot.slane %v1732, 1
        %v1917 = vsel %vm1823, %v1915, %v1916
        %v1918 = vrot.slane %v1733, 1
        %v1919 = vsel %vm1823, %v1916, %v1918
        %v1920 = vrot.slane %v1734, 1
        %v1921 = vsel %vm1823, %v1918, %v1920
        %v1922 = vrot.slane %v1735, 1
        %v1923 = vrot.slane %v1736, 1
        %v1924 = vsel %vm1823, %v1922, %v1923
        %v1925 = vrot.slane %v1737, 1
        %v1926 = vsel %vm1823, %v1923, %v1925
        %v1927 = vrot.slane %v1738, 1
        %v1928 = vsel %vm1823, %v1925, %v1927
        %v1929 = vrot.slane %v1739, 1
        %v1930 = vrot.slane %v1740, 1
        %v1931 = vsel %vm1823, %v1929, %v1930
        %v1932 = vrot.slane %v1741, 1
        %v1933 = vsel %vm1823, %v1930, %v1932
        %v1934 = vrot.slane %v1742, 1
        %v1935 = vsel %vm1823, %v1932, %v1934
        %v1936 = vrot.slane %v1743, 1
        %v1937 = vrot.slane %v1744, 1
        %v1938 = vsel %vm1823, %v1936, %v1937
        %v1939 = vrot.slane %v1745, 1
        %v1940 = vsel %vm1823, %v1937, %v1939
        %v1941 = vrot.slane %v1746, 1
        %v1942 = vsel %vm1823, %v1939, %v1941
        %v1943 = vrot.slane %v1747, 1
        %v1944 = vrot.slane %v1748, 1
        %v1945 = vsel %vm1823, %v1943, %v1944
        %v1946 = vrot.slane %v1749, 1
        %v1947 = vsel %vm1823, %v1944, %v1946
        %v1948 = vrot.slane %v1750, 1
        %v1949 = vsel %vm1823, %v1946, %v1948
        %1950 = vrot.lane.b32.xlu0 %v1826, 96
        %v1951 = vpop.permute.xlu0 %1950
        %1952 = vrot.lane.b32.xlu0 %v1828, 96
        %v1953 = vpop.permute.xlu0 %1952
        %1954 = vrot.lane.b32.xlu0 %v1830, 96
        %v1955 = vpop.permute.xlu0 %1954
        %1956 = vrot.lane.b32.xlu0 %v1833, 96
        %v1957 = vpop.permute.xlu0 %1956
        %1958 = vrot.lane.b32.xlu0 %v1835, 96
        %v1959 = vpop.permute.xlu0 %1958
        %1960 = vrot.lane.b32.xlu0 %v1837, 96
        %v1961 = vpop.permute.xlu0 %1960
        %1962 = vrot.lane.b32.xlu0 %v1840, 96
        %v1963 = vpop.permute.xlu0 %1962
        %1964 = vrot.lane.b32.xlu0 %v1842, 96
        %v1965 = vpop.permute.xlu0 %1964
        %1966 = vrot.lane.b32.xlu0 %v1844, 96
        %v1967 = vpop.permute.xlu0 %1966
        %1968 = vrot.lane.b32.xlu0 %v1847, 96
        %v1969 = vpop.permute.xlu0 %1968
        %1970 = vrot.lane.b32.xlu0 %v1849, 96
        %v1971 = vpop.permute.xlu0 %1970
        %1972 = vrot.lane.b32.xlu0 %v1851, 96
        %v1973 = vpop.permute.xlu0 %1972
        %1974 = vrot.lane.b32.xlu0 %v1854, 96
        %v1975 = vpop.permute.xlu0 %1974
        %1976 = vrot.lane.b32.xlu0 %v1856, 96
        %v1977 = vpop.permute.xlu0 %1976
        %1978 = vrot.lane.b32.xlu0 %v1858, 96
        %v1979 = vpop.permute.xlu0 %1978
        %1980 = vrot.lane.b32.xlu0 %v1861, 96
        %v1981 = vpop.permute.xlu0 %1980
        %1982 = vrot.lane.b32.xlu0 %v1863, 96
        %v1983 = vpop.permute.xlu0 %1982
        %1984 = vrot.lane.b32.xlu0 %v1865, 96
        %v1985 = vpop.permute.xlu0 %1984
        %1986 = vrot.lane.b32.xlu0 %v1868, 96
        %v1987 = vpop.permute.xlu0 %1986
        %1988 = vrot.lane.b32.xlu0 %v1870, 96
        %v1989 = vpop.permute.xlu0 %1988
        %1990 = vrot.lane.b32.xlu0 %v1872, 96
        %v1991 = vpop.permute.xlu0 %1990
        %1992 = vrot.lane.b32.xlu0 %v1875, 96
        %v1993 = vpop.permute.xlu0 %1992
        %1994 = vrot.lane.b32.xlu0 %v1877, 96
        %v1995 = vpop.permute.xlu0 %1994
        %1996 = vrot.lane.b32.xlu0 %v1879, 96
        %v1997 = vpop.permute.xlu0 %1996
        %1998 = vrot.lane.b32.xlu0 %v1882, 96
        %v1999 = vpop.permute.xlu0 %1998
        %2000 = vrot.lane.b32.xlu0 %v1884, 96
        %v2001 = vpop.permute.xlu0 %2000
        %2002 = vrot.lane.b32.xlu0 %v1886, 96
        %v2003 = vpop.permute.xlu0 %2002
        %2004 = vrot.lane.b32.xlu0 %v1889, 96
        %v2005 = vpop.permute.xlu0 %2004
        %2006 = vrot.lane.b32.xlu0 %v1891, 96
        %v2007 = vpop.permute.xlu0 %2006
        %2008 = vrot.lane.b32.xlu0 %v1893, 96
        %v2009 = vpop.permute.xlu0 %2008
        %2010 = vrot.lane.b32.xlu0 %v1896, 96
        %v2011 = vpop.permute.xlu0 %2010
        %2012 = vrot.lane.b32.xlu0 %v1898, 96
        %v2013 = vpop.permute.xlu0 %2012
        %2014 = vrot.lane.b32.xlu0 %v1900, 96
        %v2015 = vpop.permute.xlu0 %2014
        %2016 = vrot.lane.b32.xlu0 %v1903, 96
        %v2017 = vpop.permute.xlu0 %2016
        %2018 = vrot.lane.b32.xlu0 %v1905, 96
        %v2019 = vpop.permute.xlu0 %2018
        %2020 = vrot.lane.b32.xlu0 %v1907, 96
        %v2021 = vpop.permute.xlu0 %2020
        %2022 = vrot.lane.b32.xlu0 %v1910, 96
        %v2023 = vpop.permute.xlu0 %2022
        %2024 = vrot.lane.b32.xlu0 %v1912, 96
        %v2025 = vpop.permute.xlu0 %2024
        %2026 = vrot.lane.b32.xlu0 %v1914, 96
        %v2027 = vpop.permute.xlu0 %2026
        %2028 = vrot.lane.b32.xlu0 %v1917, 96
        %v2029 = vpop.permute.xlu0 %2028
        %2030 = vrot.lane.b32.xlu0 %v1919, 96
        %v2031 = vpop.permute.xlu0 %2030
        %2032 = vrot.lane.b32.xlu0 %v1921, 96
        %v2033 = vpop.permute.xlu0 %2032
        %2034 = vrot.lane.b32.xlu0 %v1924, 96
        %v2035 = vpop.permute.xlu0 %2034
        %2036 = vrot.lane.b32.xlu0 %v1926, 96
        %v2037 = vpop.permute.xlu0 %2036
        %2038 = vrot.lane.b32.xlu0 %v1928, 96
        %v2039 = vpop.permute.xlu0 %2038
        %2040 = vrot.lane.b32.xlu0 %v1931, 96
        %v2041 = vpop.permute.xlu0 %2040
        %2042 = vrot.lane.b32.xlu0 %v1933, 96
        %v2043 = vpop.permute.xlu0 %2042
        %2044 = vrot.lane.b32.xlu0 %v1935, 96
        %v2045 = vpop.permute.xlu0 %2044
        %2046 = vrot.lane.b32.xlu0 %v1938, 96
        %v2047 = vpop.permute.xlu0 %2046
        %2048 = vrot.lane.b32.xlu0 %v1940, 96
        %v2049 = vpop.permute.xlu0 %2048
        %2050 = vrot.lane.b32.xlu0 %v1942, 96
        %v2051 = vpop.permute.xlu0 %2050
        %2052 = vrot.lane.b32.xlu0 %v1945, 96
        %v2053 = vpop.permute.xlu0 %2052
        %2054 = vrot.lane.b32.xlu0 %v1947, 96
        %v2055 = vpop.permute.xlu0 %2054
        %2056 = vrot.lane.b32.xlu0 %v1949, 96
        %v2057 = vpop.permute.xlu0 %2056
        %v2112 = vadd.f32 %v1679, %v1951
        %v2113 = vadd.f32 %v1680, %v1953
        %v2114 = vadd.f32 %v1681, %v1955
        %v2115 = vadd.f32 %v1683, %v1957
        %v2116 = vadd.f32 %v1684, %v1959
        %v2117 = vadd.f32 %v1685, %v1961
        %v2118 = vadd.f32 %v1687, %v1963
        %v2119 = vadd.f32 %v1688, %v1965
        %v2120 = vadd.f32 %v1689, %v1967
        %v2121 = vadd.f32 %v1691, %v1969
        %v2122 = vadd.f32 %v1692, %v1971
        %v2123 = vadd.f32 %v1693, %v1973
        %v2124 = vadd.f32 %v1695, %v1975
        %v2125 = vadd.f32 %v1696, %v1977
        %v2126 = vadd.f32 %v1697, %v1979
        %v2127 = vadd.f32 %v1699, %v1981
        %v2128 = vadd.f32 %v1700, %v1983
        %v2129 = vadd.f32 %v1701, %v1985
        %v2130 = vadd.f32 %v1703, %v1987
        %v2131 = vadd.f32 %v1704, %v1989
        %v2132 = vadd.f32 %v1705, %v1991
        %v2133 = vadd.f32 %v1707, %v1993
        %v2134 = vadd.f32 %v1708, %v1995
        %v2135 = vadd.f32 %v1709, %v1997
        %v2136 = vadd.f32 %v1711, %v1999
        %v2137 = vadd.f32 %v1712, %v2001
        %v2138 = vadd.f32 %v1713, %v2003
        %v2139 = vadd.f32 %v1715, %v2005
        %v2140 = vadd.f32 %v1716, %v2007
        %v2141 = vadd.f32 %v1717, %v2009
        %v2142 = vadd.f32 %v1719, %v2011
        %v2143 = vadd.f32 %v1720, %v2013
        %v2144 = vadd.f32 %v1721, %v2015
        %v2145 = vadd.f32 %v1723, %v2017
        %v2146 = vadd.f32 %v1724, %v2019
        %v2147 = vadd.f32 %v1725, %v2021
        %v2148 = vadd.f32 %v1727, %v2023
        %v2149 = vadd.f32 %v1728, %v2025
        %v2150 = vadd.f32 %v1729, %v2027
        %v2151 = vadd.f32 %v1731, %v2029
        %v2152 = vadd.f32 %v1732, %v2031
        %v2153 = vadd.f32 %v1733, %v2033
        %v2154 = vadd.f32 %v1735, %v2035
        %v2155 = vadd.f32 %v1736, %v2037
        %v2156 = vadd.f32 %v1737, %v2039
        %v2157 = vadd.f32 %v1739, %v2041
        %v2158 = vadd.f32 %v1740, %v2043
        %v2159 = vadd.f32 %v1741, %v2045
        %v2160 = vadd.f32 %v1743, %v2047
        %v2161 = vadd.f32 %v1744, %v2049
        %v2162 = vadd.f32 %v1745, %v2051
        %v2163 = vadd.f32 %v1747, %v2053
        %v2164 = vadd.f32 %v1748, %v2055
        %v2165 = vadd.f32 %v1749, %v2057
        %vm2166 = vcmask 1045504
        %v2167 = vrot.slane %v1679, 2
        %v2168 = vrot.slane %v1680, 2
        %v2169 = vsel %vm2166, %v2167, %v2168
        %v2170 = vrot.slane %v1681, 2
        %v2171 = vsel %vm2166, %v2168, %v2170
        %v2172 = vrot.slane %v1682, 2
        %v2173 = vsel %vm2166, %v2170, %v2172
        %v2174 = vrot.slane %v1683, 2
        %v2175 = vrot.slane %v1684, 2
        %v2176 = vsel %vm2166, %v2174, %v2175
        %v2177 = vrot.slane %v1685, 2
        %v2178 = vsel %vm2166, %v2175, %v2177
        %v2179 = vrot.slane %v1686, 2
        %v2180 = vsel %vm2166, %v2177, %v2179
        %v2181 = vrot.slane %v1687, 2
        %v2182 = vrot.slane %v1688, 2
        %v2183 = vsel %vm2166, %v2181, %v2182
        %v2184 = vrot.slane %v1689, 2
        %v2185 = vsel %vm2166, %v2182, %v2184
        %v2186 = vrot.slane %v1690, 2
        %v2187 = vsel %vm2166, %v2184, %v2186
        %v2188 = vrot.slane %v1691, 2
        %v2189 = vrot.slane %v1692, 2
        %v2190 = vsel %vm2166, %v2188, %v2189
        %v2191 = vrot.slane %v1693, 2
        %v2192 = vsel %vm2166, %v2189, %v2191
        %v2193 = vrot.slane %v1694, 2
        %v2194 = vsel %vm2166, %v2191, %v2193
        %v2195 = vrot.slane %v1695, 2
        %v2196 = vrot.slane %v1696, 2
        %v2197 = vsel %vm2166, %v2195, %v2196
        %v2198 = vrot.slane %v1697, 2
        %v2199 = vsel %vm2166, %v2196, %v2198
        %v2200 = vrot.slane %v1698, 2
        %v2201 = vsel %vm2166, %v2198, %v2200
        %v2202 = vrot.slane %v1699, 2
        %v2203 = vrot.slane %v1700, 2
        %v2204 = vsel %vm2166, %v2202, %v2203
        %v2205 = vrot.slane %v1701, 2
        %v2206 = vsel %vm2166, %v2203, %v2205
        %v2207 = vrot.slane %v1702, 2
        %v2208 = vsel %vm2166, %v2205, %v2207
        %v2209 = vrot.slane %v1703, 2
        %v2210 = vrot.slane %v1704, 2
        %v2211 = vsel %vm2166, %v2209, %v2210
        %v2212 = vrot.slane %v1705, 2
        %v2213 = vsel %vm2166, %v2210, %v2212
        %v2214 = vrot.slane %v1706, 2
        %v2215 = vsel %vm2166, %v2212, %v2214
        %v2216 = vrot.slane %v1707, 2
        %v2217 = vrot.slane %v1708, 2
        %v2218 = vsel %vm2166, %v2216, %v2217
        %v2219 = vrot.slane %v1709, 2
        %v2220 = vsel %vm2166, %v2217, %v2219
        %v2221 = vrot.slane %v1710, 2
        %v2222 = vsel %vm2166, %v2219, %v2221
        %v2223 = vrot.slane %v1711, 2
        %v2224 = vrot.slane %v1712, 2
        %v2225 = vsel %vm2166, %v2223, %v2224
        %v2226 = vrot.slane %v1713, 2
        %v2227 = vsel %vm2166, %v2224, %v2226
        %v2228 = vrot.slane %v1714, 2
        %v2229 = vsel %vm2166, %v2226, %v2228
        %v2230 = vrot.slane %v1715, 2
        %v2231 = vrot.slane %v1716, 2
        %v2232 = vsel %vm2166, %v2230, %v2231
        %v2233 = vrot.slane %v1717, 2
        %v2234 = vsel %vm2166, %v2231, %v2233
        %v2235 = vrot.slane %v1718, 2
        %v2236 = vsel %vm2166, %v2233, %v2235
        %v2237 = vrot.slane %v1719, 2
        %v2238 = vrot.slane %v1720, 2
        %v2239 = vsel %vm2166, %v2237, %v2238
        %v2240 = vrot.slane %v1721, 2
        %v2241 = vsel %vm2166, %v2238, %v2240
        %v2242 = vrot.slane %v1722, 2
        %v2243 = vsel %vm2166, %v2240, %v2242
        %v2244 = vrot.slane %v1723, 2
        %v2245 = vrot.slane %v1724, 2
        %v2246 = vsel %vm2166, %v2244, %v2245
        %v2247 = vrot.slane %v1725, 2
        %v2248 = vsel %vm2166, %v2245, %v2247
        %v2249 = vrot.slane %v1726, 2
        %v2250 = vsel %vm2166, %v2247, %v2249
        %v2251 = vrot.slane %v1727, 2
        %v2252 = vrot.slane %v1728, 2
        %v2253 = vsel %vm2166, %v2251, %v2252
        %v2254 = vrot.slane %v1729, 2
        %v2255 = vsel %vm2166, %v2252, %v2254
        %v2256 = vrot.slane %v1730, 2
        %v2257 = vsel %vm2166, %v2254, %v2256
        %v2258 = vrot.slane %v1731, 2
        %v2259 = vrot.slane %v1732, 2
        %v2260 = vsel %vm2166, %v2258, %v2259
        %v2261 = vrot.slane %v1733, 2
        %v2262 = vsel %vm2166, %v2259, %v2261
        %v2263 = vrot.slane %v1734, 2
        %v2264 = vsel %vm2166, %v2261, %v2263
        %v2265 = vrot.slane %v1735, 2
        %v2266 = vrot.slane %v1736, 2
        %v2267 = vsel %vm2166, %v2265, %v2266
        %v2268 = vrot.slane %v1737, 2
        %v2269 = vsel %vm2166, %v2266, %v2268
        %v2270 = vrot.slane %v1738, 2
        %v2271 = vsel %vm2166, %v2268, %v2270
        %v2272 = vrot.slane %v1739, 2
        %v2273 = vrot.slane %v1740, 2
        %v2274 = vsel %vm2166, %v2272, %v2273
        %v2275 = vrot.slane %v1741, 2
        %v2276 = vsel %vm2166, %v2273, %v2275
        %v2277 = vrot.slane %v1742, 2
        %v2278 = vsel %vm2166, %v2275, %v2277
        %v2279 = vrot.slane %v1743, 2
        %v2280 = vrot.slane %v1744, 2
        %v2281 = vsel %vm2166, %v2279, %v2280
        %v2282 = vrot.slane %v1745, 2
        %v2283 = vsel %vm2166, %v2280, %v2282
        %v2284 = vrot.slane %v1746, 2
        %v2285 = vsel %vm2166, %v2282, %v2284
        %v2286 = vrot.slane %v1747, 2
        %v2287 = vrot.slane %v1748, 2
        %v2288 = vsel %vm2166, %v2286, %v2287
        %v2289 = vrot.slane %v1749, 2
        %v2290 = vsel %vm2166, %v2287, %v2289
        %v2291 = vrot.slane %v1750, 2
        %v2292 = vsel %vm2166, %v2289, %v2291
        %2293 = vrot.lane.b32.xlu0 %v2169, 64
        %v2294 = vpop.permute.xlu0 %2293
        %2295 = vrot.lane.b32.xlu0 %v2171, 64
        %v2296 = vpop.permute.xlu0 %2295
        %2297 = vrot.lane.b32.xlu0 %v2173, 64
        %v2298 = vpop.permute.xlu0 %2297
        %2299 = vrot.lane.b32.xlu0 %v2176, 64
        %v2300 = vpop.permute.xlu0 %2299
        %2301 = vrot.lane.b32.xlu0 %v2178, 64
        %v2302 = vpop.permute.xlu0 %2301
        %2303 = vrot.lane.b32.xlu0 %v2180, 64
        %v2304 = vpop.permute.xlu0 %2303
        %2305 = vrot.lane.b32.xlu0 %v2183, 64
        %v2306 = vpop.permute.xlu0 %2305
        %2307 = vrot.lane.b32.xlu0 %v2185, 64
        %v2308 = vpop.permute.xlu0 %2307
        %2309 = vrot.lane.b32.xlu0 %v2187, 64
        %v2310 = vpop.permute.xlu0 %2309
        %2311 = vrot.lane.b32.xlu0 %v2190, 64
        %v2312 = vpop.permute.xlu0 %2311
        %2313 = vrot.lane.b32.xlu0 %v2192, 64
        %v2314 = vpop.permute.xlu0 %2313
        %2315 = vrot.lane.b32.xlu0 %v2194, 64
        %v2316 = vpop.permute.xlu0 %2315
        %2317 = vrot.lane.b32.xlu0 %v2197, 64
        %v2318 = vpop.permute.xlu0 %2317
        %2319 = vrot.lane.b32.xlu0 %v2199, 64
        %v2320 = vpop.permute.xlu0 %2319
        %2321 = vrot.lane.b32.xlu0 %v2201, 64
        %v2322 = vpop.permute.xlu0 %2321
        %2323 = vrot.lane.b32.xlu0 %v2204, 64
        %v2324 = vpop.permute.xlu0 %2323
        %2325 = vrot.lane.b32.xlu0 %v2206, 64
        %v2326 = vpop.permute.xlu0 %2325
        %2327 = vrot.lane.b32.xlu0 %v2208, 64
        %v2328 = vpop.permute.xlu0 %2327
        %2329 = vrot.lane.b32.xlu0 %v2211, 64
        %v2330 = vpop.permute.xlu0 %2329
        %2331 = vrot.lane.b32.xlu0 %v2213, 64
        %v2332 = vpop.permute.xlu0 %2331
        %2333 = vrot.lane.b32.xlu0 %v2215, 64
        %v2334 = vpop.permute.xlu0 %2333
        %2335 = vrot.lane.b32.xlu0 %v2218, 64
        %v2336 = vpop.permute.xlu0 %2335
        %2337 = vrot.lane.b32.xlu0 %v2220, 64
        %v2338 = vpop.permute.xlu0 %2337
        %2339 = vrot.lane.b32.xlu0 %v2222, 64
        %v2340 = vpop.permute.xlu0 %2339
        %2341 = vrot.lane.b32.xlu0 %v2225, 64
        %v2342 = vpop.permute.xlu0 %2341
        %2343 = vrot.lane.b32.xlu0 %v2227, 64
        %v2344 = vpop.permute.xlu0 %2343
        %2345 = vrot.lane.b32.xlu0 %v2229, 64
        %v2346 = vpop.permute.xlu0 %2345
        %2347 = vrot.lane.b32.xlu0 %v2232, 64
        %v2348 = vpop.permute.xlu0 %2347
        %2349 = vrot.lane.b32.xlu0 %v2234, 64
        %v2350 = vpop.permute.xlu0 %2349
        %2351 = vrot.lane.b32.xlu0 %v2236, 64
        %v2352 = vpop.permute.xlu0 %2351
        %2353 = vrot.lane.b32.xlu0 %v2239, 64
        %v2354 = vpop.permute.xlu0 %2353
        %2355 = vrot.lane.b32.xlu0 %v2241, 64
        %v2356 = vpop.permute.xlu0 %2355
        %2357 = vrot.lane.b32.xlu0 %v2243, 64
        %v2358 = vpop.permute.xlu0 %2357
        %2359 = vrot.lane.b32.xlu0 %v2246, 64
        %v2360 = vpop.permute.xlu0 %2359
        %2361 = vrot.lane.b32.xlu0 %v2248, 64
        %v2362 = vpop.permute.xlu0 %2361
        %2363 = vrot.lane.b32.xlu0 %v2250, 64
        %v2364 = vpop.permute.xlu0 %2363
        %2365 = vrot.lane.b32.xlu0 %v2253, 64
        %v2366 = vpop.permute.xlu0 %2365
        %2367 = vrot.lane.b32.xlu0 %v2255, 64
        %v2368 = vpop.permute.xlu0 %2367
        %2369 = vrot.lane.b32.xlu0 %v2257, 64
        %v2370 = vpop.permute.xlu0 %2369
        %2371 = vrot.lane.b32.xlu0 %v2260, 64
        %v2372 = vpop.permute.xlu0 %2371
        %2373 = vrot.lane.b32.xlu0 %v2262, 64
        %v2374 = vpop.permute.xlu0 %2373
        %2375 = vrot.lane.b32.xlu0 %v2264, 64
        %v2376 = vpop.permute.xlu0 %2375
        %2377 = vrot.lane.b32.xlu0 %v2267, 64
        %v2378 = vpop.permute.xlu0 %2377
        %2379 = vrot.lane.b32.xlu0 %v2269, 64
        %v2380 = vpop.permute.xlu0 %2379
        %2381 = vrot.lane.b32.xlu0 %v2271, 64
        %v2382 = vpop.permute.xlu0 %2381
        %2383 = vrot.lane.b32.xlu0 %v2274, 64
        %v2384 = vpop.permute.xlu0 %2383
        %2385 = vrot.lane.b32.xlu0 %v2276, 64
        %v2386 = vpop.permute.xlu0 %2385
        %2387 = vrot.lane.b32.xlu0 %v2278, 64
        %v2388 = vpop.permute.xlu0 %2387
        %2389 = vrot.lane.b32.xlu0 %v2281, 64
        %v2390 = vpop.permute.xlu0 %2389
        %2391 = vrot.lane.b32.xlu0 %v2283, 64
        %v2392 = vpop.permute.xlu0 %2391
        %2393 = vrot.lane.b32.xlu0 %v2285, 64
        %v2394 = vpop.permute.xlu0 %2393
        %2395 = vrot.lane.b32.xlu0 %v2288, 64
        %v2396 = vpop.permute.xlu0 %2395
        %2397 = vrot.lane.b32.xlu0 %v2290, 64
        %v2398 = vpop.permute.xlu0 %2397
        %2399 = vrot.lane.b32.xlu0 %v2292, 64
        %v2400 = vpop.permute.xlu0 %2399
        %v2455 = vadd.f32 %v2112, %v2294
        %v2456 = vadd.f32 %v2113, %v2296
        %v2457 = vadd.f32 %v2114, %v2298
        %v2458 = vadd.f32 %v2115, %v2300
        %v2459 = vadd.f32 %v2116, %v2302
        %v2460 = vadd.f32 %v2117, %v2304
        %v2461 = vadd.f32 %v2118, %v2306
        %v2462 = vadd.f32 %v2119, %v2308
        %v2463 = vadd.f32 %v2120, %v2310
        %v2464 = vadd.f32 %v2121, %v2312
        %v2465 = vadd.f32 %v2122, %v2314
        %v2466 = vadd.f32 %v2123, %v2316
        %v2467 = vadd.f32 %v2124, %v2318
        %v2468 = vadd.f32 %v2125, %v2320
        %v2469 = vadd.f32 %v2126, %v2322
        %v2470 = vadd.f32 %v2127, %v2324
        %v2471 = vadd.f32 %v2128, %v2326
        %v2472 = vadd.f32 %v2129, %v2328
        %v2473 = vadd.f32 %v2130, %v2330
        %v2474 = vadd.f32 %v2131, %v2332
        %v2475 = vadd.f32 %v2132, %v2334
        %v2476 = vadd.f32 %v2133, %v2336
        %v2477 = vadd.f32 %v2134, %v2338
        %v2478 = vadd.f32 %v2135, %v2340
        %v2479 = vadd.f32 %v2136, %v2342
        %v2480 = vadd.f32 %v2137, %v2344
        %v2481 = vadd.f32 %v2138, %v2346
        %v2482 = vadd.f32 %v2139, %v2348
        %v2483 = vadd.f32 %v2140, %v2350
        %v2484 = vadd.f32 %v2141, %v2352
        %v2485 = vadd.f32 %v2142, %v2354
        %v2486 = vadd.f32 %v2143, %v2356
        %v2487 = vadd.f32 %v2144, %v2358
        %v2488 = vadd.f32 %v2145, %v2360
        %v2489 = vadd.f32 %v2146, %v2362
        %v2490 = vadd.f32 %v2147, %v2364
        %v2491 = vadd.f32 %v2148, %v2366
        %v2492 = vadd.f32 %v2149, %v2368
        %v2493 = vadd.f32 %v2150, %v2370
        %v2494 = vadd.f32 %v2151, %v2372
        %v2495 = vadd.f32 %v2152, %v2374
        %v2496 = vadd.f32 %v2153, %v2376
        %v2497 = vadd.f32 %v2154, %v2378
        %v2498 = vadd.f32 %v2155, %v2380
        %v2499 = vadd.f32 %v2156, %v2382
        %v2500 = vadd.f32 %v2157, %v2384
        %v2501 = vadd.f32 %v2158, %v2386
        %v2502 = vadd.f32 %v2159, %v2388
        %v2503 = vadd.f32 %v2160, %v2390
        %v2504 = vadd.f32 %v2161, %v2392
        %v2505 = vadd.f32 %v2162, %v2394
        %v2506 = vadd.f32 %v2163, %v2396
        %v2507 = vadd.f32 %v2164, %v2398
        %v2508 = vadd.f32 %v2165, %v2400
        %s2509 = smul.u32 %s27, 16
        %s2510 = ssub.s32 %s2509, 1
        %v2511 = vstv %s2510
        %v2512 = vadd.s32 %v2511, 1
        %v2513 = vadd.s32 %v2511, 2
        %v2514 = vadd.s32 %v2511, 3
        %v2515 = vadd.s32 %v2511, 4
        %v2516 = vadd.s32 %v2511, 5
        %v2517 = vadd.s32 %v2511, 6
        %v2518 = vadd.s32 %v2511, 7
        %v2519 = vadd.s32 %v2511, 8
        %v2520 = vadd.s32 %v2511, 9
        %v2521 = vadd.s32 %v2511, 10
        %v2522 = vadd.s32 %v2511, 11
        %v2523 = vadd.s32 %v2511, 12
        %v2524 = vadd.s32 %v2511, 13
        %v2525 = vadd.s32 %v2511, 14
        %v2526 = vadd.s32 %v2511, 15
        %v2527 = vadd.s32 %v2511, 16
        %v2528 = vadd.s32 %v2511, 17
        %v2529 = vlaneseq
        %v2530 = vshrl.u32 %v2529, 7
        %v2531 = vadd.s32 %v2530, 8
        %v2532 = vadd.s32 %v2530, 16
        %vm2533 = vcmp.ge.s32.totalorder %v2511, 0
        %vm2534 = vcmp.ge.s32.totalorder %v2512, 0
        %vm2535 = vcmp.ge.s32.totalorder %v2513, 0
        %vm2536 = vcmp.ge.s32.totalorder %v2514, 0
        %vm2537 = vcmp.ge.s32.totalorder %v2515, 0
        %vm2538 = vcmp.ge.s32.totalorder %v2516, 0
        %vm2539 = vcmp.ge.s32.totalorder %v2517, 0
        %vm2540 = vcmp.ge.s32.totalorder %v2518, 0
        %vm2541 = vcmp.ge.s32.totalorder %v2519, 0
        %vm2542 = vcmp.ge.s32.totalorder %v2520, 0
        %vm2543 = vcmp.ge.s32.totalorder %v2521, 0
        %vm2544 = vcmp.ge.s32.totalorder %v2522, 0
        %vm2545 = vcmp.ge.s32.totalorder %v2523, 0
        %vm2546 = vcmp.ge.s32.totalorder %v2524, 0
        %vm2547 = vcmp.ge.s32.totalorder %v2525, 0
        %vm2548 = vcmp.ge.s32.totalorder %v2526, 0
        %vm2549 = vcmp.ge.s32.totalorder %v2527, 0
        %vm2550 = vcmp.ge.s32.totalorder %v2528, 0
        %vm2551 = vcmp.lt.s32.totalorder %v2511, 16
        %vm2552 = vcmp.lt.s32.totalorder %v2512, 16
        %vm2553 = vcmp.lt.s32.totalorder %v2513, 16
        %vm2554 = vcmp.lt.s32.totalorder %v2514, 16
        %vm2555 = vcmp.lt.s32.totalorder %v2515, 16
        %vm2556 = vcmp.lt.s32.totalorder %v2516, 16
        %vm2557 = vcmp.lt.s32.totalorder %v2517, 16
        %vm2558 = vcmp.lt.s32.totalorder %v2518, 16
        %vm2559 = vcmp.lt.s32.totalorder %v2519, 16
        %vm2560 = vcmp.lt.s32.totalorder %v2520, 16
        %vm2561 = vcmp.lt.s32.totalorder %v2521, 16
        %vm2562 = vcmp.lt.s32.totalorder %v2522, 16
        %vm2563 = vcmp.lt.s32.totalorder %v2523, 16
        %vm2564 = vcmp.lt.s32.totalorder %v2524, 16
        %vm2565 = vcmp.lt.s32.totalorder %v2525, 16
        %vm2566 = vcmp.lt.s32.totalorder %v2526, 16
        %vm2567 = vcmp.lt.s32.totalorder %v2527, 16
        %vm2568 = vcmp.lt.s32.totalorder %v2528, 16
        %vm2569 = vmand %vm2533, %vm2551
        %vm2570 = vmand %vm2534, %vm2552
        %vm2571 = vmand %vm2535, %vm2553
        %vm2572 = vmand %vm2536, %vm2554
        %vm2573 = vmand %vm2537, %vm2555
        %vm2574 = vmand %vm2538, %vm2556
        %vm2575 = vmand %vm2539, %vm2557
        %vm2576 = vmand %vm2540, %vm2558
        %vm2577 = vmand %vm2541, %vm2559
        %vm2578 = vmand %vm2542, %vm2560
        %vm2579 = vmand %vm2543, %vm2561
        %vm2580 = vmand %vm2544, %vm2562
        %vm2581 = vmand %vm2545, %vm2563
        %vm2582 = vmand %vm2546, %vm2564
        %vm2583 = vmand %vm2547, %vm2565
        %vm2584 = vmand %vm2548, %vm2566
        %vm2585 = vmand %vm2549, %vm2567
        %vm2586 = vmand %vm2550, %vm2568
        %vm2587 = vcmp.ge.s32.totalorder %v2530, 1
        %vm2588 = vcmp.ge.s32.totalorder %v2531, 1
        %vm2589 = vcmp.ge.s32.totalorder %v2532, 1
        %vm2590 = vmand %vm2569, %vm2587
        %vm2591 = vmand %vm2569, %vm2588
        %vm2592 = vmand %vm2569, %vm2589
        %vm2593 = vmand %vm2570, %vm2587
        %vm2594 = vmand %vm2570, %vm2588
        %vm2595 = vmand %vm2570, %vm2589
        %vm2596 = vmand %vm2571, %vm2587
        %vm2597 = vmand %vm2571, %vm2588
        %vm2598 = vmand %vm2571, %vm2589
        %vm2599 = vmand %vm2572, %vm2587
        %vm2600 = vmand %vm2572, %vm2588
        %vm2601 = vmand %vm2572, %vm2589
        %vm2602 = vmand %vm2573, %vm2587
        %vm2603 = vmand %vm2573, %vm2588
        %vm2604 = vmand %vm2573, %vm2589
        %vm2605 = vmand %vm2574, %vm2587
        %vm2606 = vmand %vm2574, %vm2588
        %vm2607 = vmand %vm2574, %vm2589
        %vm2608 = vmand %vm2575, %vm2587
        %vm2609 = vmand %vm2575, %vm2588
        %vm2610 = vmand %vm2575, %vm2589
        %vm2611 = vmand %vm2576, %vm2587
        %vm2612 = vmand %vm2576, %vm2588
        %vm2613 = vmand %vm2576, %vm2589
        %vm2614 = vmand %vm2577, %vm2587
        %vm2615 = vmand %vm2577, %vm2588
        %vm2616 = vmand %vm2577, %vm2589
        %vm2617 = vmand %vm2578, %vm2587
        %vm2618 = vmand %vm2578, %vm2588
        %vm2619 = vmand %vm2578, %vm2589
        %vm2620 = vmand %vm2579, %vm2587
        %vm2621 = vmand %vm2579, %vm2588
        %vm2622 = vmand %vm2579, %vm2589
        %vm2623 = vmand %vm2580, %vm2587
        %vm2624 = vmand %vm2580, %vm2588
        %vm2625 = vmand %vm2580, %vm2589
        %vm2626 = vmand %vm2581, %vm2587
        %vm2627 = vmand %vm2581, %vm2588
        %vm2628 = vmand %vm2581, %vm2589
        %vm2629 = vmand %vm2582, %vm2587
        %vm2630 = vmand %vm2582, %vm2588
        %vm2631 = vmand %vm2582, %vm2589
        %vm2632 = vmand %vm2583, %vm2587
        %vm2633 = vmand %vm2583, %vm2588
        %vm2634 = vmand %vm2583, %vm2589
        %vm2635 = vmand %vm2584, %vm2587
        %vm2636 = vmand %vm2584, %vm2588
        %vm2637 = vmand %vm2584, %vm2589
        %vm2638 = vmand %vm2585, %vm2587
        %vm2639 = vmand %vm2585, %vm2588
        %vm2640 = vmand %vm2585, %vm2589
        %vm2641 = vmand %vm2586, %vm2587
        %vm2642 = vmand %vm2586, %vm2588
        %vm2643 = vmand %vm2586, %vm2589
        %vm2644 = vcmp.le.s32.totalorder %v2530, 16
        %vm2645 = vcmp.le.s32.totalorder %v2531, 16
        %vm2646 = vcmp.le.s32.totalorder %v2532, 16
        %vm2647 = vmand %vm2590, %vm2644
        %vm2648 = vmand %vm2591, %vm2645
        %vm2649 = vmand %vm2592, %vm2646
        %vm2650 = vmand %vm2593, %vm2644
        %vm2651 = vmand %vm2594, %vm2645
        %vm2652 = vmand %vm2595, %vm2646
        %vm2653 = vmand %vm2596, %vm2644
        %vm2654 = vmand %vm2597, %vm2645
        %vm2655 = vmand %vm2598, %vm2646
        %vm2656 = vmand %vm2599, %vm2644
        %vm2657 = vmand %vm2600, %vm2645
        %vm2658 = vmand %vm2601, %vm2646
        %vm2659 = vmand %vm2602, %vm2644
        %vm2660 = vmand %vm2603, %vm2645
        %vm2661 = vmand %vm2604, %vm2646
        %vm2662 = vmand %vm2605, %vm2644
        %vm2663 = vmand %vm2606, %vm2645
        %vm2664 = vmand %vm2607, %vm2646
        %vm2665 = vmand %vm2608, %vm2644
        %vm2666 = vmand %vm2609, %vm2645
        %vm2667 = vmand %vm2610, %vm2646
        %vm2668 = vmand %vm2611, %vm2644
        %vm2669 = vmand %vm2612, %vm2645
        %vm2670 = vmand %vm2613, %vm2646
        %vm2671 = vmand %vm2614, %vm2644
        %vm2672 = vmand %vm2615, %vm2645
        %vm2673 = vmand %vm2616, %vm2646
        %vm2674 = vmand %vm2617, %vm2644
        %vm2675 = vmand %vm2618, %vm2645
        %vm2676 = vmand %vm2619, %vm2646
        %vm2677 = vmand %vm2620, %vm2644
        %vm2678 = vmand %vm2621, %vm2645
        %vm2679 = vmand %vm2622, %vm2646
        %vm2680 = vmand %vm2623, %vm2644
        %vm2681 = vmand %vm2624, %vm2645
        %vm2682 = vmand %vm2625, %vm2646
        %vm2683 = vmand %vm2626, %vm2644
        %vm2684 = vmand %vm2627, %vm2645
        %vm2685 = vmand %vm2628, %vm2646
        %vm2686 = vmand %vm2629, %vm2644
        %vm2687 = vmand %vm2630, %vm2645
        %vm2688 = vmand %vm2631, %vm2646
        %vm2689 = vmand %vm2632, %vm2644
        %vm2690 = vmand %vm2633, %vm2645
        %vm2691 = vmand %vm2634, %vm2646
        %vm2692 = vmand %vm2635, %vm2644
        %vm2693 = vmand %vm2636, %vm2645
        %vm2694 = vmand %vm2637, %vm2646
        %vm2695 = vmand %vm2638, %vm2644
        %vm2696 = vmand %vm2639, %vm2645
        %vm2697 = vmand %vm2640, %vm2646
        %vm2698 = vmand %vm2641, %vm2644
        %vm2699 = vmand %vm2642, %vm2645
        %vm2700 = vmand %vm2643, %vm2646
        %v2701 = vsel %vm2647, 1, 0
        %v2702 = vsel %vm2648, 1, 0
        %v2703 = vsel %vm2649, 1, 0
        %v2704 = vsel %vm2650, 1, 0
        %v2705 = vsel %vm2651, 1, 0
        %v2706 = vsel %vm2652, 1, 0
        %v2707 = vsel %vm2653, 1, 0
        %v2708 = vsel %vm2654, 1, 0
        %v2709 = vsel %vm2655, 1, 0
        %v2710 = vsel %vm2656, 1, 0
        %v2711 = vsel %vm2657, 1, 0
        %v2712 = vsel %vm2658, 1, 0
        %v2713 = vsel %vm2659, 1, 0
        %v2714 = vsel %vm2660, 1, 0
        %v2715 = vsel %vm2661, 1, 0
        %v2716 = vsel %vm2662, 1, 0
        %v2717 = vsel %vm2663, 1, 0
        %v2718 = vsel %vm2664, 1, 0
        %v2719 = vsel %vm2665, 1, 0
        %v2720 = vsel %vm2666, 1, 0
        %v2721 = vsel %vm2667, 1, 0
        %v2722 = vsel %vm2668, 1, 0
        %v2723 = vsel %vm2669, 1, 0
        %v2724 = vsel %vm2670, 1, 0
        %v2725 = vsel %vm2671, 1, 0
        %v2726 = vsel %vm2672, 1, 0
        %v2727 = vsel %vm2673, 1, 0
        %v2728 = vsel %vm2674, 1, 0
        %v2729 = vsel %vm2675, 1, 0
        %v2730 = vsel %vm2676, 1, 0
        %v2731 = vsel %vm2677, 1, 0
        %v2732 = vsel %vm2678, 1, 0
        %v2733 = vsel %vm2679, 1, 0
        %v2734 = vsel %vm2680, 1, 0
        %v2735 = vsel %vm2681, 1, 0
        %v2736 = vsel %vm2682, 1, 0
        %v2737 = vsel %vm2683, 1, 0
        %v2738 = vsel %vm2684, 1, 0
        %v2739 = vsel %vm2685, 1, 0
        %v2740 = vsel %vm2686, 1, 0
        %v2741 = vsel %vm2687, 1, 0
        %v2742 = vsel %vm2688, 1, 0
        %v2743 = vsel %vm2689, 1, 0
        %v2744 = vsel %vm2690, 1, 0
        %v2745 = vsel %vm2691, 1, 0
        %v2746 = vsel %vm2692, 1, 0
        %v2747 = vsel %vm2693, 1, 0
        %v2748 = vsel %vm2694, 1, 0
        %v2749 = vsel %vm2695, 1, 0
        %v2750 = vsel %vm2696, 1, 0
        %v2751 = vsel %vm2697, 1, 0
        %v2752 = vsel %vm2698, 1, 0
        %v2753 = vsel %vm2699, 1, 0
        %v2754 = vsel %vm2700, 1, 0
        %vm2755 = vcmp.eq.s32.totalorder %v2701, 1
        %vm2756 = vcmp.eq.s32.totalorder %v2702, 1
        %vm2757 = vcmp.eq.s32.totalorder %v2703, 1
        %vm2758 = vcmp.eq.s32.totalorder %v2704, 1
        %vm2759 = vcmp.eq.s32.totalorder %v2705, 1
        %vm2760 = vcmp.eq.s32.totalorder %v2706, 1
        %vm2761 = vcmp.eq.s32.totalorder %v2707, 1
        %vm2762 = vcmp.eq.s32.totalorder %v2708, 1
        %vm2763 = vcmp.eq.s32.totalorder %v2709, 1
        %vm2764 = vcmp.eq.s32.totalorder %v2710, 1
        %vm2765 = vcmp.eq.s32.totalorder %v2711, 1
        %vm2766 = vcmp.eq.s32.totalorder %v2712, 1
        %vm2767 = vcmp.eq.s32.totalorder %v2713, 1
        %vm2768 = vcmp.eq.s32.totalorder %v2714, 1
        %vm2769 = vcmp.eq.s32.totalorder %v2715, 1
        %vm2770 = vcmp.eq.s32.totalorder %v2716, 1
        %vm2771 = vcmp.eq.s32.totalorder %v2717, 1
        %vm2772 = vcmp.eq.s32.totalorder %v2718, 1
        %vm2773 = vcmp.eq.s32.totalorder %v2719, 1
        %vm2774 = vcmp.eq.s32.totalorder %v2720, 1
        %vm2775 = vcmp.eq.s32.totalorder %v2721, 1
        %vm2776 = vcmp.eq.s32.totalorder %v2722, 1
        %vm2777 = vcmp.eq.s32.totalorder %v2723, 1
        %vm2778 = vcmp.eq.s32.totalorder %v2724, 1
        %vm2779 = vcmp.eq.s32.totalorder %v2725, 1
        %vm2780 = vcmp.eq.s32.totalorder %v2726, 1
        %vm2781 = vcmp.eq.s32.totalorder %v2727, 1
        %vm2782 = vcmp.eq.s32.totalorder %v2728, 1
        %vm2783 = vcmp.eq.s32.totalorder %v2729, 1
        %vm2784 = vcmp.eq.s32.totalorder %v2730, 1
        %vm2785 = vcmp.eq.s32.totalorder %v2731, 1
        %vm2786 = vcmp.eq.s32.totalorder %v2732, 1
        %vm2787 = vcmp.eq.s32.totalorder %v2733, 1
        %vm2788 = vcmp.eq.s32.totalorder %v2734, 1
        %vm2789 = vcmp.eq.s32.totalorder %v2735, 1
        %vm2790 = vcmp.eq.s32.totalorder %v2736, 1
        %vm2791 = vcmp.eq.s32.totalorder %v2737, 1
        %vm2792 = vcmp.eq.s32.totalorder %v2738, 1
        %vm2793 = vcmp.eq.s32.totalorder %v2739, 1
        %vm2794 = vcmp.eq.s32.totalorder %v2740, 1
        %vm2795 = vcmp.eq.s32.totalorder %v2741, 1
        %vm2796 = vcmp.eq.s32.totalorder %v2742, 1
        %vm2797 = vcmp.eq.s32.totalorder %v2743, 1
        %vm2798 = vcmp.eq.s32.totalorder %v2744, 1
        %vm2799 = vcmp.eq.s32.totalorder %v2745, 1
        %vm2800 = vcmp.eq.s32.totalorder %v2746, 1
        %vm2801 = vcmp.eq.s32.totalorder %v2747, 1
        %vm2802 = vcmp.eq.s32.totalorder %v2748, 1
        %vm2803 = vcmp.eq.s32.totalorder %v2749, 1
        %vm2804 = vcmp.eq.s32.totalorder %v2750, 1
        %vm2805 = vcmp.eq.s32.totalorder %v2751, 1
        %vm2806 = vcmp.eq.s32.totalorder %v2752, 1
        %vm2807 = vcmp.eq.s32.totalorder %v2753, 1
        %vm2808 = vcmp.eq.s32.totalorder %v2754, 1
        %v2809 = vsel %vm2755, %v2455, 0.0
        %v2810 = vsel %vm2756, %v2456, 0.0
        %v2811 = vsel %vm2757, %v2457, 0.0
        %v2812 = vsel %vm2758, %v2458, 0.0
        %v2813 = vsel %vm2759, %v2459, 0.0
        %v2814 = vsel %vm2760, %v2460, 0.0
        %v2815 = vsel %vm2761, %v2461, 0.0
        %v2816 = vsel %vm2762, %v2462, 0.0
        %v2817 = vsel %vm2763, %v2463, 0.0
        %v2818 = vsel %vm2764, %v2464, 0.0
        %v2819 = vsel %vm2765, %v2465, 0.0
        %v2820 = vsel %vm2766, %v2466, 0.0
        %v2821 = vsel %vm2767, %v2467, 0.0
        %v2822 = vsel %vm2768, %v2468, 0.0
        %v2823 = vsel %vm2769, %v2469, 0.0
        %v2824 = vsel %vm2770, %v2470, 0.0
        %v2825 = vsel %vm2771, %v2471, 0.0
        %v2826 = vsel %vm2772, %v2472, 0.0
        %v2827 = vsel %vm2773, %v2473, 0.0
        %v2828 = vsel %vm2774, %v2474, 0.0
        %v2829 = vsel %vm2775, %v2475, 0.0
        %v2830 = vsel %vm2776, %v2476, 0.0
        %v2831 = vsel %vm2777, %v2477, 0.0
        %v2832 = vsel %vm2778, %v2478, 0.0
        %v2833 = vsel %vm2779, %v2479, 0.0
        %v2834 = vsel %vm2780, %v2480, 0.0
        %v2835 = vsel %vm2781, %v2481, 0.0
        %v2836 = vsel %vm2782, %v2482, 0.0
        %v2837 = vsel %vm2783, %v2483, 0.0
        %v2838 = vsel %vm2784, %v2484, 0.0
        %v2839 = vsel %vm2785, %v2485, 0.0
        %v2840 = vsel %vm2786, %v2486, 0.0
        %v2841 = vsel %vm2787, %v2487, 0.0
        %v2842 = vsel %vm2788, %v2488, 0.0
        %v2843 = vsel %vm2789, %v2489, 0.0
        %v2844 = vsel %vm2790, %v2490, 0.0
        %v2845 = vsel %vm2791, %v2491, 0.0
        %v2846 = vsel %vm2792, %v2492, 0.0
        %v2847 = vsel %vm2793, %v2493, 0.0
        %v2848 = vsel %vm2794, %v2494, 0.0
        %v2849 = vsel %vm2795, %v2495, 0.0
        %v2850 = vsel %vm2796, %v2496, 0.0
        %v2851 = vsel %vm2797, %v2497, 0.0
        %v2852 = vsel %vm2798, %v2498, 0.0
        %v2853 = vsel %vm2799, %v2499, 0.0
        %v2854 = vsel %vm2800, %v2500, 0.0
        %v2855 = vsel %vm2801, %v2501, 0.0
        %v2856 = vsel %vm2802, %v2502, 0.0
        %v2857 = vsel %vm2803, %v2503, 0.0
        %v2858 = vsel %vm2804, %v2504, 0.0
        %v2859 = vsel %vm2805, %v2505, 0.0
        %v2860 = vsel %vm2806, %v2506, 0.0
        %v2861 = vsel %vm2807, %v2507, 0.0
        %v2862 = vsel %vm2808, %v2508, 0.0
        %v2863 = vpack.c.bf16 %v2810, %v2809
        %v2864 = vpack.c.bf16 %v2811, %v2811
        %v2865 = vpack.c.bf16 %v2813, %v2812
        %v2866 = vpack.c.bf16 %v2814, %v2814
        %v2867 = vpack.c.bf16 %v2816, %v2815
        %v2868 = vpack.c.bf16 %v2817, %v2817
        %v2869 = vpack.c.bf16 %v2819, %v2818
        %v2870 = vpack.c.bf16 %v2820, %v2820
        %v2871 = vpack.c.bf16 %v2822, %v2821
        %v2872 = vpack.c.bf16 %v2823, %v2823
        %v2873 = vpack.c.bf16 %v2825, %v2824
        %v2874 = vpack.c.bf16 %v2826, %v2826
        %v2875 = vpack.c.bf16 %v2828, %v2827
        %v2876 = vpack.c.bf16 %v2829, %v2829
        %v2877 = vpack.c.bf16 %v2831, %v2830
        %v2878 = vpack.c.bf16 %v2832, %v2832
        %v2879 = vpack.c.bf16 %v2834, %v2833
        %v2880 = vpack.c.bf16 %v2835, %v2835
        %v2881 = vpack.c.bf16 %v2837, %v2836
        %v2882 = vpack.c.bf16 %v2838, %v2838
        %v2883 = vpack.c.bf16 %v2840, %v2839
        %v2884 = vpack.c.bf16 %v2841, %v2841
        %v2885 = vpack.c.bf16 %v2843, %v2842
        %v2886 = vpack.c.bf16 %v2844, %v2844
        %v2887 = vpack.c.bf16 %v2846, %v2845
        %v2888 = vpack.c.bf16 %v2847, %v2847
        %v2889 = vpack.c.bf16 %v2849, %v2848
        %v2890 = vpack.c.bf16 %v2850, %v2850
        %v2891 = vpack.c.bf16 %v2852, %v2851
        %v2892 = vpack.c.bf16 %v2853, %v2853
        %v2893 = vpack.c.bf16 %v2855, %v2854
        %v2894 = vpack.c.bf16 %v2856, %v2856
        %v2895 = vpack.c.bf16 %v2858, %v2857
        %v2896 = vpack.c.bf16 %v2859, %v2859
        %v2897 = vpack.c.bf16 %v2861, %v2860
        %v2898 = vpack.c.bf16 %v2862, %v2862
        %v2931 = vunpack.c.l.b16 %v2863
        %v2932 = vunpack.c.h.b16 %v2863
        %v2933 = vunpack.c.l.b16 %v2864
        %v2934 = vunpack.c.l.b16 %v2865
        %v2935 = vunpack.c.h.b16 %v2865
        %v2936 = vunpack.c.l.b16 %v2866
        %v2937 = vunpack.c.l.b16 %v2867
        %v2938 = vunpack.c.h.b16 %v2867
        %v2939 = vunpack.c.l.b16 %v2868
        %v2940 = vunpack.c.l.b16 %v2869
        %v2941 = vunpack.c.h.b16 %v2869
        %v2942 = vunpack.c.l.b16 %v2870
        %v2943 = vunpack.c.l.b16 %v2871
        %v2944 = vunpack.c.h.b16 %v2871
        %v2945 = vunpack.c.l.b16 %v2872
        %v2946 = vunpack.c.l.b16 %v2873
        %v2947 = vunpack.c.h.b16 %v2873
        %v2948 = vunpack.c.l.b16 %v2874
        %v2949 = vunpack.c.l.b16 %v2875
        %v2950 = vunpack.c.h.b16 %v2875
        %v2951 = vunpack.c.l.b16 %v2876
        %v2952 = vunpack.c.l.b16 %v2877
        %v2953 = vunpack.c.h.b16 %v2877
        %v2954 = vunpack.c.l.b16 %v2878
        %v2955 = vunpack.c.l.b16 %v2879
        %v2956 = vunpack.c.h.b16 %v2879
        %v2957 = vunpack.c.l.b16 %v2880
        %v2958 = vunpack.c.l.b16 %v2881
        %v2959 = vunpack.c.h.b16 %v2881
        %v2960 = vunpack.c.l.b16 %v2882
        %v2961 = vunpack.c.l.b16 %v2883
        %v2962 = vunpack.c.h.b16 %v2883
        %v2963 = vunpack.c.l.b16 %v2884
        %v2964 = vunpack.c.l.b16 %v2885
        %v2965 = vunpack.c.h.b16 %v2885
        %v2966 = vunpack.c.l.b16 %v2886
        %v2967 = vunpack.c.l.b16 %v2887
        %v2968 = vunpack.c.h.b16 %v2887
        %v2969 = vunpack.c.l.b16 %v2888
        %v2970 = vunpack.c.l.b16 %v2889
        %v2971 = vunpack.c.h.b16 %v2889
        %v2972 = vunpack.c.l.b16 %v2890
        %v2973 = vunpack.c.l.b16 %v2891
        %v2974 = vunpack.c.h.b16 %v2891
        %v2975 = vunpack.c.l.b16 %v2892
        %v2976 = vunpack.c.l.b16 %v2893
        %v2977 = vunpack.c.h.b16 %v2893
        %v2978 = vunpack.c.l.b16 %v2894
        %v2979 = vld [vmem:[#allocation7] sm:$0xf]
        %v2980 = vld [vmem:[#allocation7 + $0x4] sm:$0xf]
        %v2983 = vunpack.c.l.b16 %v2895
        %v2984 = vunpack.c.h.b16 %v2895
        %v2985 = vunpack.c.l.b16 %v2896
        %s2986 = scalar_lea.vmem [#allocation7], 8
        %v2987 = vld [vmem:[%s2986] sm:$0xf]
        %v2988 = vld [vmem:[%s2986 + $0x4] sm:$0xf]
        %v2989 = vpack.c.b16 %v2935, %v2934
        %v2990 = vpack.c.b16 %v2937, %v2936
        %v2991 = vpack.c.b16 %v2939, %v2938
        %v2992 = vpack.c.b16 %v2941, %v2940
        %v2993 = vpack.c.b16 %v2943, %v2942
        %v2994 = vpack.c.b16 %v2945, %v2944
        %v2995 = vpack.c.b16 %v2947, %v2946
        %v2996 = vpack.c.b16 %v2949, %v2948
        %v2997 = vpack.c.b16 %v2951, %v2950
        %v2998 = vpack.c.b16 %v2953, %v2952
        %v2999 = vpack.c.b16 %v2955, %v2954
        %v3000 = vpack.c.b16 %v2957, %v2956
        %v3001 = vpack.c.b16 %v2959, %v2958
        %v3002 = vpack.c.b16 %v2961, %v2960
        %v3003 = vpack.c.b16 %v2963, %v2962
        %v3004 = vpack.c.b16 %v2965, %v2964
        %v3005 = vpack.c.b16 %v2967, %v2966
        %v3006 = vpack.c.b16 %v2969, %v2968
        %v3007 = vpack.c.b16 %v2971, %v2970
        %v3008 = vpack.c.b16 %v2973, %v2972
        %v3009 = vpack.c.b16 %v2975, %v2974
        %v3010 = vpack.c.b16 %v2977, %v2976
        %v3011 = vpack.c.b16 %v2983, %v2978
        %v3012 = vpack.c.b16 %v2985, %v2984
        %3013 = vrot.lane.b32.xlu0 %v2989, 112
        %v3014 = vpop.permute.xlu0 %3013
        %3015 = vrot.lane.b32.xlu0 %v2990, 112
        %v3016 = vpop.permute.xlu0 %3015
        %3017 = vrot.lane.b32.xlu0 %v2991, 112
        %v3018 = vpop.permute.xlu0 %3017
        %3019 = vrot.lane.b32.xlu0 %v2992, 112
        %v3020 = vpop.permute.xlu0 %3019
        %3021 = vrot.lane.b32.xlu0 %v2993, 112
        %v3022 = vpop.permute.xlu0 %3021
        %3023 = vrot.lane.b32.xlu0 %v2994, 112
        %v3024 = vpop.permute.xlu0 %3023
        %3025 = vrot.lane.b32.xlu0 %v2995, 112
        %v3026 = vpop.permute.xlu0 %3025
        %3027 = vrot.lane.b32.xlu0 %v2996, 112
        %v3028 = vpop.permute.xlu0 %3027
        %3029 = vrot.lane.b32.xlu0 %v2997, 112
        %v3030 = vpop.permute.xlu0 %3029
        %3031 = vrot.lane.b32.xlu0 %v2998, 112
        %v3032 = vpop.permute.xlu0 %3031
        %3033 = vrot.lane.b32.xlu0 %v2999, 112
        %v3034 = vpop.permute.xlu0 %3033
        %3035 = vrot.lane.b32.xlu0 %v3000, 112
        %v3036 = vpop.permute.xlu0 %3035
        %3037 = vrot.lane.b32.xlu0 %v3001, 112
        %v3038 = vpop.permute.xlu0 %3037
        %3039 = vrot.lane.b32.xlu0 %v3002, 112
        %v3040 = vpop.permute.xlu0 %3039
        %3041 = vrot.lane.b32.xlu0 %v3003, 112
        %v3042 = vpop.permute.xlu0 %3041
        %3043 = vrot.lane.b32.xlu0 %v3004, 112
        %v3044 = vpop.permute.xlu0 %3043
        %3045 = vrot.lane.b32.xlu0 %v3005, 112
        %v3046 = vpop.permute.xlu0 %3045
        %3047 = vrot.lane.b32.xlu0 %v3006, 112
        %v3048 = vpop.permute.xlu0 %3047
        %3049 = vrot.lane.b32.xlu0 %v3007, 112
        %v3050 = vpop.permute.xlu0 %3049
        %3051 = vrot.lane.b32.xlu0 %v3008, 112
        %v3052 = vpop.permute.xlu0 %3051
        %3053 = vrot.lane.b32.xlu0 %v3009, 112
        %v3054 = vpop.permute.xlu0 %3053
        %3055 = vrot.lane.b32.xlu0 %v3010, 112
        %v3056 = vpop.permute.xlu0 %3055
        %3057 = vrot.lane.b32.xlu0 %v3011, 112
        %v3058 = vpop.permute.xlu0 %3057
        %3059 = vrot.lane.b32.xlu0 %v3012, 112
        %v3060 = vpop.permute.xlu0 %3059
        %v3063 = vunpack.c.l.b16 %v2987
        %v3064 = vunpack.c.l.b16 %v2988
        %v3065 = vpack.c.b16 %v3064, %v3063
        %vm3067 = vcmask 130048
        %v3069 = vsel %vm3067, %v3014, 0
        %v3072 = vsel %vm3067, %v3016, 0
        %v3075 = vsel %vm3067, %v3018, 0
        %v3078 = vsel %vm3067, %v3020, 0
        %v3081 = vsel %vm3067, %v3022, 0
        %v3084 = vsel %vm3067, %v3024, 0
        %v3087 = vsel %vm3067, %v3026, 0
        %v3090 = vsel %vm3067, %v3028, 0
        %v3093 = vsel %vm3067, %v3030, 0
        %v3096 = vsel %vm3067, %v3032, 0
        %v3099 = vsel %vm3067, %v3034, 0
        %v3102 = vsel %vm3067, %v3036, 0
        %v3105 = vsel %vm3067, %v3038, 0
        %v3108 = vsel %vm3067, %v3040, 0
        %v3111 = vsel %vm3067, %v3042, 0
        %v3114 = vsel %vm3067, %v3044, 0
        %v3117 = vsel %vm3067, %v3046, 0
        %v3120 = vsel %vm3067, %v3048, 0
        %v3123 = vsel %vm3067, %v3050, 0
        %v3126 = vsel %vm3067, %v3052, 0
        %v3129 = vsel %vm3067, %v3054, 0
        %v3132 = vsel %vm3067, %v3056, 0
        %v3135 = vsel %vm3067, %v3058, 0
        %v3138 = vsel %vm3067, %v3060, 0
        %3140 = vmatprep.subr.bf16.mxu0 0
        %3141 = vmatpush1.bf16.msra.mxu0 %v3065
        %3142 = vmatprep.subr.bf16.mxu0 0
        %3143 = vmatpush1.bf16.msra.mxu0 0
        %3144 = vmatprep.subr.bf16.mxu0 0
        %3145 = vmatpush1.bf16.msra.mxu0 0
        %3146 = vmatprep.subr.bf16.mxu0 0
        %3147 = vmatpush1.bf16.msra.mxu0 0
        %3148 = vmatprep.subr.bf16.mxu0 0
        %3149 = vmatpush1.bf16.msra.mxu0 0
        %3150 = vmatprep.subr.bf16.mxu0 0
        %3151 = vmatpush1.bf16.msra.mxu0 0
        %3152 = vmatprep.subr.bf16.mxu0 0
        %3153 = vmatpush1.bf16.msra.mxu0 0
        %3154 = vmatprep.subr.bf16.mxu0 0
        %3155 = vmatpush1.bf16.msra.mxu0 0
        %3156 = vmatprep.subr.bf16.mxu0 0
        %3157 = vmatpush1.bf16.msra.mxu0 0
        %3158 = vmatprep.subr.bf16.mxu0 0
        %3159 = vmatpush1.bf16.msra.mxu0 0
        %3160 = vmatprep.subr.bf16.mxu0 0
        %3161 = vmatpush1.bf16.msra.mxu0 0
        %3162 = vmatprep.subr.bf16.mxu0 0
        %3163 = vmatpush1.bf16.msra.mxu0 0
        %3164 = vmatprep.subr.bf16.mxu0 0
        %3165 = vmatpush1.bf16.msra.mxu0 0
        %3166 = vmatprep.subr.bf16.mxu0 0
        %3167 = vmatpush1.bf16.msra.mxu0 0
        %3168 = vmatprep.subr.bf16.mxu0 0
        %3169 = vmatpush1.bf16.msra.mxu0 0
        %3170 = vmatprep.subr.bf16.mxu0 0
        %3171 = vmatpush1.bf16.msra.mxu0 0
        %3172 = vmatprep.mubr.bf16.mxu0 0
        %3173 = vmatmul.mubr.bf16.gmra.mrb[0].mxu0 %v3069
        %v3174 = vpop.f32.mrb[0].mxu0
        %v3175 = vadd.f32 0.0, %v3174
        %v3176 = vpop.f32.mrb[0].mxu0
        %v3177 = vpop.f32.mrb[0].mxu0
        %v3178 = vadd.f32 0.0, %v3177
        %v3179 = vpop.f32.mrb[0].mxu0
        %3180 = vmatprep.mubr.bf16.mxu0 0
        %3181 = vmatmul.mubr.bf16.gmra.mrb[0].mxu0 %v3072
        %v3182 = vpop.f32.mrb[0].mxu0
        %v3183 = vadd.f32 0.0, %v3182
        %v3184 = vpop.f32.mrb[0].mxu0
        %v3185 = vpop.f32.mrb[0].mxu0
        %v3186 = vadd.f32 0.0, %v3185
        %v3187 = vpop.f32.mrb[0].mxu0
        %3188 = vmatprep.mubr.bf16.mxu0 0
        %3189 = vmatmul.mubr.bf16.gmra.mrb[0].mxu0 %v3075
        %v3190 = vpop.f32.mrb[0].mxu0
        %v3191 = vadd.f32 0.0, %v3190
        %v3192 = vpop.f32.mrb[0].mxu0
        %v3193 = vpop.f32.mrb[0].mxu0
        %v3194 = vadd.f32 0.0, %v3193
        %v3195 = vpop.f32.mrb[0].mxu0
        %3196 = vmatprep.mubr.bf16.mxu0 0
        %3197 = vmatmul.mubr.bf16.gmra.mrb[0].mxu0 %v3078
        %v3198 = vpop.f32.mrb[0].mxu0
        %v3199 = vadd.f32 0.0, %v3198
        %v3200 = vpop.f32.mrb[0].mxu0
        %v3201 = vpop.f32.mrb[0].mxu0
        %v3202 = vadd.f32 0.0, %v3201
        %v3203 = vpop.f32.mrb[0].mxu0
        %3204 = vmatprep.mubr.bf16.mxu0 0
        %3205 = vmatmul.mubr.bf16.gmra.mrb[0].mxu0 %v3081
        %v3206 = vpop.f32.mrb[0].mxu0
        %v3207 = vadd.f32 0.0, %v3206
        %v3208 = vpop.f32.mrb[0].mxu0
        %v3209 = vpop.f32.mrb[0].mxu0
        %v3210 = vadd.f32 0.0, %v3209
        %v3211 = vpop.f32.mrb[0].mxu0
        %3212 = vmatprep.mubr.bf16.mxu0 0
        %3213 = vmatmul.mubr.bf16.gmra.mrb[0].mxu0 %v3084
        %v3214 = vpop.f32.mrb[0].mxu0
        %v3215 = vadd.f32 0.0, %v3214
        %v3216 = vpop.f32.mrb[0].mxu0
        %v3217 = vpop.f32.mrb[0].mxu0
        %v3218 = vadd.f32 0.0, %v3217
        %v3219 = vpop.f32.mrb[0].mxu0
        %3220 = vmatprep.mubr.bf16.mxu0 0
        %3221 = vmatmul.mubr.bf16.gmra.mrb[0].mxu0 %v3087
        %v3222 = vpop.f32.mrb[0].mxu0
        %v3223 = vadd.f32 0.0, %v3222
        %v3224 = vpop.f32.mrb[0].mxu0
        %v3225 = vpop.f32.mrb[0].mxu0
        %v3226 = vadd.f32 0.0, %v3225
        %v3227 = vpop.f32.mrb[0].mxu0
        %3228 = vmatprep.mubr.bf16.mxu0 0
        %3229 = vmatmul.mubr.bf16.gmra.mrb[0].mxu0 %v3090
        %v3230 = vpop.f32.mrb[0].mxu0
        %v3231 = vadd.f32 0.0, %v3230
        %v3232 = vpop.f32.mrb[0].mxu0
        %v3233 = vpop.f32.mrb[0].mxu0
        %v3234 = vadd.f32 0.0, %v3233
        %v3235 = vpop.f32.mrb[0].mxu0
        %3236 = vmatprep.mubr.bf16.mxu0 0
        %3237 = vmatmul.mubr.bf16.gmra.mrb[0].mxu0 %v3093
        %v3238 = vpop.f32.mrb[0].mxu0
        %v3239 = vadd.f32 0.0, %v3238
        %v3240 = vpop.f32.mrb[0].mxu0
        %v3241 = vpop.f32.mrb[0].mxu0
        %v3242 = vadd.f32 0.0, %v3241
        %v3243 = vpop.f32.mrb[0].mxu0
        %3244 = vmatprep.mubr.bf16.mxu0 0
        %3245 = vmatmul.mubr.bf16.gmra.mrb[0].mxu0 %v3096
        %v3246 = vpop.f32.mrb[0].mxu0
        %v3247 = vadd.f32 0.0, %v3246
        %v3248 = vpop.f32.mrb[0].mxu0
        %v3249 = vpop.f32.mrb[0].mxu0
        %v3250 = vadd.f32 0.0, %v3249
        %v3251 = vpop.f32.mrb[0].mxu0
        %3252 = vmatprep.mubr.bf16.mxu0 0
        %3253 = vmatmul.mubr.bf16.gmra.mrb[0].mxu0 %v3099
        %v3254 = vpop.f32.mrb[0].mxu0
        %v3255 = vadd.f32 0.0, %v3254
        %v3256 = vpop.f32.mrb[0].mxu0
        %v3257 = vpop.f32.mrb[0].mxu0
        %v3258 = vadd.f32 0.0, %v3257
        %v3259 = vpop.f32.mrb[0].mxu0
        %3260 = vmatprep.mubr.bf16.mxu0 0
        %3261 = vmatmul.mubr.bf16.gmra.mrb[0].mxu0 %v3102
        %v3262 = vpop.f32.mrb[0].mxu0
        %v3263 = vadd.f32 0.0, %v3262
        %v3264 = vpop.f32.mrb[0].mxu0
        %v3265 = vpop.f32.mrb[0].mxu0
        %v3266 = vadd.f32 0.0, %v3265
        %v3267 = vpop.f32.mrb[0].mxu0
        %3268 = vmatprep.mubr.bf16.mxu0 0
        %3269 = vmatmul.mubr.bf16.gmra.mrb[0].mxu0 %v3105
        %v3270 = vpop.f32.mrb[0].mxu0
        %v3271 = vadd.f32 0.0, %v3270
        %v3272 = vpop.f32.mrb[0].mxu0
        %v3273 = vpop.f32.mrb[0].mxu0
        %v3274 = vadd.f32 0.0, %v3273
        %v3275 = vpop.f32.mrb[0].mxu0
        %3276 = vmatprep.mubr.bf16.mxu0 0
        %3277 = vmatmul.mubr.bf16.gmra.mrb[0].mxu0 %v3108
        %v3278 = vpop.f32.mrb[0].mxu0
        %v3279 = vadd.f32 0.0, %v3278
        %v3280 = vpop.f32.mrb[0].mxu0
        %v3281 = vpop.f32.mrb[0].mxu0
        %v3282 = vadd.f32 0.0, %v3281
        %v3283 = vpop.f32.mrb[0].mxu0
        %3284 = vmatprep.mubr.bf16.mxu0 0
        %3285 = vmatmul.mubr.bf16.gmra.mrb[0].mxu0 %v3111
        %v3286 = vpop.f32.mrb[0].mxu0
        %v3287 = vadd.f32 0.0, %v3286
        %v3288 = vpop.f32.mrb[0].mxu0
        %v3289 = vpop.f32.mrb[0].mxu0
        %v3290 = vadd.f32 0.0, %v3289
        %v3291 = vpop.f32.mrb[0].mxu0
        %3292 = vmatprep.mubr.bf16.mxu0 0
        %3293 = vmatmul.mubr.bf16.gmra.mrb[0].mxu0 %v3114
        %v3294 = vpop.f32.mrb[0].mxu0
        %v3295 = vadd.f32 0.0, %v3294
        %v3296 = vpop.f32.mrb[0].mxu0
        %v3297 = vpop.f32.mrb[0].mxu0
        %v3298 = vadd.f32 0.0, %v3297
        %v3299 = vpop.f32.mrb[0].mxu0
        %3300 = vmatprep.mubr.bf16.mxu0 0
        %3301 = vmatmul.mubr.bf16.gmra.mrb[0].mxu0 %v3117
        %v3302 = vpop.f32.mrb[0].mxu0
        %v3303 = vadd.f32 0.0, %v3302
        %v3304 = vpop.f32.mrb[0].mxu0
        %v3305 = vpop.f32.mrb[0].mxu0
        %v3306 = vadd.f32 0.0, %v3305
        %v3307 = vpop.f32.mrb[0].mxu0
        %3308 = vmatprep.mubr.bf16.mxu0 0
        %3309 = vmatmul.mubr.bf16.gmra.mrb[0].mxu0 %v3120
        %v3310 = vpop.f32.mrb[0].mxu0
        %v3311 = vadd.f32 0.0, %v3310
        %v3312 = vpop.f32.mrb[0].mxu0
        %v3313 = vpop.f32.mrb[0].mxu0
        %v3314 = vadd.f32 0.0, %v3313
        %v3315 = vpop.f32.mrb[0].mxu0
        %3316 = vmatprep.mubr.bf16.mxu0 0
        %3317 = vmatmul.mubr.bf16.gmra.mrb[0].mxu0 %v3123
        %v3318 = vpop.f32.mrb[0].mxu0
        %v3319 = vadd.f32 0.0, %v3318
        %v3320 = vpop.f32.mrb[0].mxu0
        %v3321 = vpop.f32.mrb[0].mxu0
        %v3322 = vadd.f32 0.0, %v3321
        %v3323 = vpop.f32.mrb[0].mxu0
        %3324 = vmatprep.mubr.bf16.mxu0 0
        %3325 = vmatmul.mubr.bf16.gmra.mrb[0].mxu0 %v3126
        %v3326 = vpop.f32.mrb[0].mxu0
        %v3327 = vadd.f32 0.0, %v3326
        %v3328 = vpop.f32.mrb[0].mxu0
        %v3329 = vpop.f32.mrb[0].mxu0
        %v3330 = vadd.f32 0.0, %v3329
        %v3331 = vpop.f32.mrb[0].mxu0
        %3332 = vmatprep.mubr.bf16.mxu0 0
        %3333 = vmatmul.mubr.bf16.gmra.mrb[0].mxu0 %v3129
        %v3334 = vpop.f32.mrb[0].mxu0
        %v3335 = vadd.f32 0.0, %v3334
        %v3336 = vpop.f32.mrb[0].mxu0
        %v3337 = vpop.f32.mrb[0].mxu0
        %v3338 = vadd.f32 0.0, %v3337
        %v3339 = vpop.f32.mrb[0].mxu0
        %3340 = vmatprep.mubr.bf16.mxu0 0
        %3341 = vmatmul.mubr.bf16.gmra.mrb[0].mxu0 %v3132
        %v3342 = vpop.f32.mrb[0].mxu0
        %v3343 = vadd.f32 0.0, %v3342
        %v3344 = vpop.f32.mrb[0].mxu0
        %v3345 = vpop.f32.mrb[0].mxu0
        %v3346 = vadd.f32 0.0, %v3345
        %v3347 = vpop.f32.mrb[0].mxu0
        %3348 = vmatprep.mubr.bf16.mxu0 0
        %3349 = vmatmul.mubr.bf16.gmra.mrb[0].mxu0 %v3135
        %v3350 = vpop.f32.mrb[0].mxu0
        %v3351 = vadd.f32 0.0, %v3350
        %v3352 = vpop.f32.mrb[0].mxu0
        %v3353 = vpop.f32.mrb[0].mxu0
        %v3354 = vadd.f32 0.0, %v3353
        %v3355 = vpop.f32.mrb[0].mxu0
        %3356 = vmatprep.mubr.bf16.mxu0 0
        %3357 = vmatmul.mubr.bf16.gmra.mrb[0].mxu0 %v3138
        %v3358 = vpop.f32.mrb[0].mxu0
        %v3359 = vadd.f32 0.0, %v3358
        %v3360 = vpop.f32.mrb[0].mxu0
        %v3361 = vpop.f32.mrb[0].mxu0
        %v3362 = vadd.f32 0.0, %v3361
        %v3363 = vpop.f32.mrb[0].mxu0
        %3364 = vdwg.mxu0
        %v3365 = vpack.c.b16 %v2932, %v2931
        %v3366 = vpack.c.b16 %v2934, %v2933
        %v3367 = vpack.c.b16 %v2936, %v2935
        %v3368 = vpack.c.b16 %v2938, %v2937
        %v3369 = vpack.c.b16 %v2940, %v2939
        %v3370 = vpack.c.b16 %v2942, %v2941
        %v3371 = vpack.c.b16 %v2944, %v2943
        %v3372 = vpack.c.b16 %v2946, %v2945
        %v3373 = vpack.c.b16 %v2948, %v2947
        %v3374 = vpack.c.b16 %v2950, %v2949
        %v3375 = vpack.c.b16 %v2952, %v2951
        %v3376 = vpack.c.b16 %v2954, %v2953
        %v3377 = vpack.c.b16 %v2956, %v2955
        %v3378 = vpack.c.b16 %v2958, %v2957
        %v3379 = vpack.c.b16 %v2960, %v2959
        %v3380 = vpack.c.b16 %v2962, %v2961
        %v3381 = vpack.c.b16 %v2964, %v2963
        %v3382 = vpack.c.b16 %v2966, %v2965
        %v3383 = vpack.c.b16 %v2968, %v2967
        %v3384 = vpack.c.b16 %v2970, %v2969
        %v3385 = vpack.c.b16 %v2972, %v2971
        %v3386 = vpack.c.b16 %v2974, %v2973
        %v3387 = vpack.c.b16 %v2976, %v2975
        %v3388 = vpack.c.b16 %v2978, %v2977
        %3389 = vrot.lane.b32.xlu0 %v3365, 112
        %v3390 = vpop.permute.xlu0 %3389
        %3391 = vrot.lane.b32.xlu0 %v3366, 112
        %v3392 = vpop.permute.xlu0 %3391
        %3393 = vrot.lane.b32.xlu0 %v3367, 112
        %v3394 = vpop.permute.xlu0 %3393
        %3395 = vrot.lane.b32.xlu0 %v3368, 112
        %v3396 = vpop.permute.xlu0 %3395
        %3397 = vrot.lane.b32.xlu0 %v3369, 112
        %v3398 = vpop.permute.xlu0 %3397
        %3399 = vrot.lane.b32.xlu0 %v3370, 112
        %v3400 = vpop.permute.xlu0 %3399
        %3401 = vrot.lane.b32.xlu0 %v3371, 112
        %v3402 = vpop.permute.xlu0 %3401
        %3403 = vrot.lane.b32.xlu0 %v3372, 112
        %v3404 = vpop.permute.xlu0 %3403
        %3405 = vrot.lane.b32.xlu0 %v3373, 112
        %v3406 = vpop.permute.xlu0 %3405
        %3407 = vrot.lane.b32.xlu0 %v3374, 112
        %v3408 = vpop.permute.xlu0 %3407
        %3409 = vrot.lane.b32.xlu0 %v3375, 112
        %v3410 = vpop.permute.xlu0 %3409
        %3411 = vrot.lane.b32.xlu0 %v3376, 112
        %v3412 = vpop.permute.xlu0 %3411
        %3413 = vrot.lane.b32.xlu0 %v3377, 112
        %v3414 = vpop.permute.xlu0 %3413
        %3415 = vrot.lane.b32.xlu0 %v3378, 112
        %v3416 = vpop.permute.xlu0 %3415
        %3417 = vrot.lane.b32.xlu0 %v3379, 112
        %v3418 = vpop.permute.xlu0 %3417
        %3419 = vrot.lane.b32.xlu0 %v3380, 112
        %v3420 = vpop.permute.xlu0 %3419
        %3421 = vrot.lane.b32.xlu0 %v3381, 112
        %v3422 = vpop.permute.xlu0 %3421
        %3423 = vrot.lane.b32.xlu0 %v3382, 112
        %v3424 = vpop.permute.xlu0 %3423
        %3425 = vrot.lane.b32.xlu0 %v3383, 112
        %v3426 = vpop.permute.xlu0 %3425
        %3427 = vrot.lane.b32.xlu0 %v3384, 112
        %v3428 = vpop.permute.xlu0 %3427
        %3429 = vrot.lane.b32.xlu0 %v3385, 112
        %v3430 = vpop.permute.xlu0 %3429
        %3431 = vrot.lane.b32.xlu0 %v3386, 112
        %v3432 = vpop.permute.xlu0 %3431
        %3433 = vrot.lane.b32.xlu0 %v3387, 112
        %v3434 = vpop.permute.xlu0 %3433
        %3435 = vrot.lane.b32.xlu0 %v3388, 112
        %v3436 = vpop.permute.xlu0 %3435
        %v3439 = vunpack.c.l.b16 %v2979
        %v3440 = vunpack.c.l.b16 %v2980
        %v3441 = vpack.c.b16 %v3440, %v3439
        %v3444 = vsel %vm3067, %v3390, 0
        %v3447 = vsel %vm3067, %v3392, 0
        %v3450 = vsel %vm3067, %v3394, 0
        %v3453 = vsel %vm3067, %v3396, 0
        %v3456 = vsel %vm3067, %v3398, 0
        %v3459 = vsel %vm3067, %v3400, 0
        %v3462 = vsel %vm3067, %v3402, 0
        %v3465 = vsel %vm3067, %v3404, 0
        %v3468 = vsel %vm3067, %v3406, 0
        %v3471 = vsel %vm3067, %v3408, 0
        %v3474 = vsel %vm3067, %v3410, 0
        %v3477 = vsel %vm3067, %v3412, 0
        %v3480 = vsel %vm3067, %v3414, 0
        %v3483 = vsel %vm3067, %v3416, 0
        %v3486 = vsel %vm3067, %v3418, 0
        %v3489 = vsel %vm3067, %v3420, 0
        %v3492 = vsel %vm3067, %v3422, 0
        %v3495 = vsel %vm3067, %v3424, 0
        %v3498 = vsel %vm3067, %v3426, 0
        %v3501 = vsel %vm3067, %v3428, 0
        %v3504 = vsel %vm3067, %v3430, 0
        %v3507 = vsel %vm3067, %v3432, 0
        %v3510 = vsel %vm3067, %v3434, 0
        %v3513 = vsel %vm3067, %v3436, 0
        %3515 = vmatprep.subr.bf16.mxu0 0
        %3516 = vmatpush1.bf16.msra.mxu0 %v3441
        %3517 = vmatprep.subr.bf16.mxu0 0
        %3518 = vmatpush1.bf16.msra.mxu0 0
        %3519 = vmatprep.subr.bf16.mxu0 0
        %3520 = vmatpush1.bf16.msra.mxu0 0
        %3521 = vmatprep.subr.bf16.mxu0 0
        %3522 = vmatpush1.bf16.msra.mxu0 0
        %3523 = vmatprep.subr.bf16.mxu0 0
        %3524 = vmatpush1.bf16.msra.mxu0 0
        %3525 = vmatprep.subr.bf16.mxu0 0
        %3526 = vmatpush1.bf16.msra.mxu0 0
        %3527 = vmatprep.subr.bf16.mxu0 0
        %3528 = vmatpush1.bf16.msra.mxu0 0
        %3529 = vmatprep.subr.bf16.mxu0 0
        %3530 = vmatpush1.bf16.msra.mxu0 0
        %3531 = vmatprep.subr.bf16.mxu0 0
        %3532 = vmatpush1.bf16.msra.mxu0 0
        %3533 = vmatprep.subr.bf16.mxu0 0
        %3534 = vmatpush1.bf16.msra.mxu0 0
        %3535 = vmatprep.subr.bf16.mxu0 0
        %3536 = vmatpush1.bf16.msra.mxu0 0
        %3537 = vmatprep.subr.bf16.mxu0 0
        %3538 = vmatpush1.bf16.msra.mxu0 0
        %3539 = vmatprep.subr.bf16.mxu0 0
        %3540 = vmatpush1.bf16.msra.mxu0 0
        %3541 = vmatprep.subr.bf16.mxu0 0
        %3542 = vmatpush1.bf16.msra.mxu0 0
        %3543 = vmatprep.subr.bf16.mxu0 0
        %3544 = vmatpush1.bf16.msra.mxu0 0
        %3545 = vmatprep.subr.bf16.mxu0 0
        %3546 = vmatpush1.bf16.msra.mxu0 0
        %3547 = vmatprep.mubr.bf16.mxu0 0
        %3548 = vmatmul.mubr.bf16.gmra.mrb[0].mxu0 %v3444
        %v3549 = vpop.f32.mrb[0].mxu0
        %v3550 = vadd.f32 %v3175, %v3549
        %v3551 = vpop.f32.mrb[0].mxu0
        %v3552 = vpop.f32.mrb[0].mxu0
        %v3553 = vadd.f32 %v3178, %v3552
        %v3554 = vpop.f32.mrb[0].mxu0
        %3555 = vmatprep.mubr.bf16.mxu0 0
        %3556 = vmatmul.mubr.bf16.gmra.mrb[0].mxu0 %v3447
        %v3557 = vpop.f32.mrb[0].mxu0
        %v3558 = vadd.f32 %v3183, %v3557
        %v3559 = vpop.f32.mrb[0].mxu0
        %v3560 = vpop.f32.mrb[0].mxu0
        %v3561 = vadd.f32 %v3186, %v3560
        %v3562 = vpop.f32.mrb[0].mxu0
        %3563 = vmatprep.mubr.bf16.mxu0 0
        %3564 = vmatmul.mubr.bf16.gmra.mrb[0].mxu0 %v3450
        %v3565 = vpop.f32.mrb[0].mxu0
        %v3566 = vadd.f32 %v3191, %v3565
        %v3567 = vpop.f32.mrb[0].mxu0
        %v3568 = vpop.f32.mrb[0].mxu0
        %v3569 = vadd.f32 %v3194, %v3568
        %v3570 = vpop.f32.mrb[0].mxu0
        %3571 = vmatprep.mubr.bf16.mxu0 0
        %3572 = vmatmul.mubr.bf16.gmra.mrb[0].mxu0 %v3453
        %v3573 = vpop.f32.mrb[0].mxu0
        %v3574 = vadd.f32 %v3199, %v3573
        %v3575 = vpop.f32.mrb[0].mxu0
        %v3576 = vpop.f32.mrb[0].mxu0
        %v3577 = vadd.f32 %v3202, %v3576
        %v3578 = vpop.f32.mrb[0].mxu0
        %3579 = vmatprep.mubr.bf16.mxu0 0
        %3580 = vmatmul.mubr.bf16.gmra.mrb[0].mxu0 %v3456
        %v3581 = vpop.f32.mrb[0].mxu0
        %v3582 = vadd.f32 %v3207, %v3581
        %v3583 = vpop.f32.mrb[0].mxu0
        %v3584 = vpop.f32.mrb[0].mxu0
        %v3585 = vadd.f32 %v3210, %v3584
        %v3586 = vpop.f32.mrb[0].mxu0
        %3587 = vmatprep.mubr.bf16.mxu0 0
        %3588 = vmatmul.mubr.bf16.gmra.mrb[0].mxu0 %v3459
        %v3589 = vpop.f32.mrb[0].mxu0
        %v3590 = vadd.f32 %v3215, %v3589
        %v3591 = vpop.f32.mrb[0].mxu0
        %v3592 = vpop.f32.mrb[0].mxu0
        %v3593 = vadd.f32 %v3218, %v3592
        %v3594 = vpop.f32.mrb[0].mxu0
        %3595 = vmatprep.mubr.bf16.mxu0 0
        %3596 = vmatmul.mubr.bf16.gmra.mrb[0].mxu0 %v3462
        %v3597 = vpop.f32.mrb[0].mxu0
        %v3598 = vadd.f32 %v3223, %v3597
        %v3599 = vpop.f32.mrb[0].mxu0
        %v3600 = vpop.f32.mrb[0].mxu0
        %v3601 = vadd.f32 %v3226, %v3600
        %v3602 = vpop.f32.mrb[0].mxu0
        %3603 = vmatprep.mubr.bf16.mxu0 0
        %3604 = vmatmul.mubr.bf16.gmra.mrb[0].mxu0 %v3465
        %v3605 = vpop.f32.mrb[0].mxu0
        %v3606 = vadd.f32 %v3231, %v3605
        %v3607 = vpop.f32.mrb[0].mxu0
        %v3608 = vpop.f32.mrb[0].mxu0
        %v3609 = vadd.f32 %v3234, %v3608
        %v3610 = vpop.f32.mrb[0].mxu0
        %3611 = vmatprep.mubr.bf16.mxu0 0
        %3612 = vmatmul.mubr.bf16.gmra.mrb[0].mxu0 %v3468
        %v3613 = vpop.f32.mrb[0].mxu0
        %v3614 = vadd.f32 %v3239, %v3613
        %v3615 = vpop.f32.mrb[0].mxu0
        %v3616 = vpop.f32.mrb[0].mxu0
        %v3617 = vadd.f32 %v3242, %v3616
        %v3618 = vpop.f32.mrb[0].mxu0
        %3619 = vmatprep.mubr.bf16.mxu0 0
        %3620 = vmatmul.mubr.bf16.gmra.mrb[0].mxu0 %v3471
        %v3621 = vpop.f32.mrb[0].mxu0
        %v3622 = vadd.f32 %v3247, %v3621
        %v3623 = vpop.f32.mrb[0].mxu0
        %v3624 = vpop.f32.mrb[0].mxu0
        %v3625 = vadd.f32 %v3250, %v3624
        %v3626 = vpop.f32.mrb[0].mxu0
        %3627 = vmatprep.mubr.bf16.mxu0 0
        %3628 = vmatmul.mubr.bf16.gmra.mrb[0].mxu0 %v3474
        %v3629 = vpop.f32.mrb[0].mxu0
        %v3630 = vadd.f32 %v3255, %v3629
        %v3631 = vpop.f32.mrb[0].mxu0
        %v3632 = vpop.f32.mrb[0].mxu0
        %v3633 = vadd.f32 %v3258, %v3632
        %v3634 = vpop.f32.mrb[0].mxu0
        %3635 = vmatprep.mubr.bf16.mxu0 0
        %3636 = vmatmul.mubr.bf16.gmra.mrb[0].mxu0 %v3477
        %v3637 = vpop.f32.mrb[0].mxu0
        %v3638 = vadd.f32 %v3263, %v3637
        %v3639 = vpop.f32.mrb[0].mxu0
        %v3640 = vpop.f32.mrb[0].mxu0
        %v3641 = vadd.f32 %v3266, %v3640
        %v3642 = vpop.f32.mrb[0].mxu0
        %3643 = vmatprep.mubr.bf16.mxu0 0
        %3644 = vmatmul.mubr.bf16.gmra.mrb[0].mxu0 %v3480
        %v3645 = vpop.f32.mrb[0].mxu0
        %v3646 = vadd.f32 %v3271, %v3645
        %v3647 = vpop.f32.mrb[0].mxu0
        %v3648 = vpop.f32.mrb[0].mxu0
        %v3649 = vadd.f32 %v3274, %v3648
        %v3650 = vpop.f32.mrb[0].mxu0
        %3651 = vmatprep.mubr.bf16.mxu0 0
        %3652 = vmatmul.mubr.bf16.gmra.mrb[0].mxu0 %v3483
        %v3653 = vpop.f32.mrb[0].mxu0
        %v3654 = vadd.f32 %v3279, %v3653
        %v3655 = vpop.f32.mrb[0].mxu0
        %v3656 = vpop.f32.mrb[0].mxu0
        %v3657 = vadd.f32 %v3282, %v3656
        %v3658 = vpop.f32.mrb[0].mxu0
        %3659 = vmatprep.mubr.bf16.mxu0 0
        %3660 = vmatmul.mubr.bf16.gmra.mrb[0].mxu0 %v3486
        %v3661 = vpop.f32.mrb[0].mxu0
        %v3662 = vadd.f32 %v3287, %v3661
        %v3663 = vpop.f32.mrb[0].mxu0
        %v3664 = vpop.f32.mrb[0].mxu0
        %v3665 = vadd.f32 %v3290, %v3664
        %v3666 = vpop.f32.mrb[0].mxu0
        %3667 = vmatprep.mubr.bf16.mxu0 0
        %3668 = vmatmul.mubr.bf16.gmra.mrb[0].mxu0 %v3489
        %v3669 = vpop.f32.mrb[0].mxu0
        %v3670 = vadd.f32 %v3295, %v3669
        %v3671 = vpop.f32.mrb[0].mxu0
        %v3672 = vpop.f32.mrb[0].mxu0
        %v3673 = vadd.f32 %v3298, %v3672
        %v3674 = vpop.f32.mrb[0].mxu0
        %3675 = vmatprep.mubr.bf16.mxu0 0
        %3676 = vmatmul.mubr.bf16.gmra.mrb[0].mxu0 %v3492
        %v3677 = vpop.f32.mrb[0].mxu0
        %v3678 = vadd.f32 %v3303, %v3677
        %v3679 = vpop.f32.mrb[0].mxu0
        %v3680 = vpop.f32.mrb[0].mxu0
        %v3681 = vadd.f32 %v3306, %v3680
        %v3682 = vpop.f32.mrb[0].mxu0
        %3683 = vmatprep.mubr.bf16.mxu0 0
        %3684 = vmatmul.mubr.bf16.gmra.mrb[0].mxu0 %v3495
        %v3685 = vpop.f32.mrb[0].mxu0
        %v3686 = vadd.f32 %v3311, %v3685
        %v3687 = vpop.f32.mrb[0].mxu0
        %v3688 = vpop.f32.mrb[0].mxu0
        %v3689 = vadd.f32 %v3314, %v3688
        %v3690 = vpop.f32.mrb[0].mxu0
        %3691 = vmatprep.mubr.bf16.mxu0 0
        %3692 = vmatmul.mubr.bf16.gmra.mrb[0].mxu0 %v3498
        %v3693 = vpop.f32.mrb[0].mxu0
        %v3694 = vadd.f32 %v3319, %v3693
        %v3695 = vpop.f32.mrb[0].mxu0
        %v3696 = vpop.f32.mrb[0].mxu0
        %v3697 = vadd.f32 %v3322, %v3696
        %v3698 = vpop.f32.mrb[0].mxu0
        %3699 = vmatprep.mubr.bf16.mxu0 0
        %3700 = vmatmul.mubr.bf16.gmra.mrb[0].mxu0 %v3501
        %v3701 = vpop.f32.mrb[0].mxu0
        %v3702 = vadd.f32 %v3327, %v3701
        %v3703 = vpop.f32.mrb[0].mxu0
        %v3704 = vpop.f32.mrb[0].mxu0
        %v3705 = vadd.f32 %v3330, %v3704
        %v3706 = vpop.f32.mrb[0].mxu0
        %3707 = vmatprep.mubr.bf16.mxu0 0
        %3708 = vmatmul.mubr.bf16.gmra.mrb[0].mxu0 %v3504
        %v3709 = vpop.f32.mrb[0].mxu0
        %v3710 = vadd.f32 %v3335, %v3709
        %v3711 = vpop.f32.mrb[0].mxu0
        %v3712 = vpop.f32.mrb[0].mxu0
        %v3713 = vadd.f32 %v3338, %v3712
        %v3714 = vpop.f32.mrb[0].mxu0
        %3715 = vmatprep.mubr.bf16.mxu0 0
        %3716 = vmatmul.mubr.bf16.gmra.mrb[0].mxu0 %v3507
        %v3717 = vpop.f32.mrb[0].mxu0
        %v3718 = vadd.f32 %v3343, %v3717
        %v3719 = vpop.f32.mrb[0].mxu0
        %v3720 = vpop.f32.mrb[0].mxu0
        %v3721 = vadd.f32 %v3346, %v3720
        %v3722 = vpop.f32.mrb[0].mxu0
        %3723 = vmatprep.mubr.bf16.mxu0 0
        %3724 = vmatmul.mubr.bf16.gmra.mrb[0].mxu0 %v3510
        %v3725 = vpop.f32.mrb[0].mxu0
        %v3726 = vadd.f32 %v3351, %v3725
        %v3727 = vpop.f32.mrb[0].mxu0
        %v3728 = vpop.f32.mrb[0].mxu0
        %v3729 = vadd.f32 %v3354, %v3728
        %v3730 = vpop.f32.mrb[0].mxu0
        %3731 = vmatprep.mubr.bf16.mxu0 0
        %3732 = vmatmul.mubr.bf16.gmra.mrb[0].mxu0 %v3513
        %v3733 = vpop.f32.mrb[0].mxu0
        %v3734 = vadd.f32 %v3359, %v3733
        %v3735 = vpop.f32.mrb[0].mxu0
        %v3736 = vpop.f32.mrb[0].mxu0
        %v3737 = vadd.f32 %v3362, %v3736
        %v3738 = vpop.f32.mrb[0].mxu0
        %3739 = vdwg.mxu0
        %v3742 = vunpack.c.l.b16 %v2897
        %v3743 = vunpack.c.h.b16 %v2897
        %v3744 = vunpack.c.l.b16 %v2898
        %s3745 = scalar_lea.vmem [#allocation7], 16
        %v3746 = vld [vmem:[%s3745] sm:$0xf]
        %v3747 = vld [vmem:[%s3745 + $0x4] sm:$0xf]
        %v3748 = vpack.c.b16 %v2984, %v2983
        %v3749 = vpack.c.b16 %v3742, %v2985
        %v3750 = vpack.c.b16 %v3744, %v3743
        %3751 = vrot.lane.b32.xlu0 %v3748, 112
        %v3752 = vpop.permute.xlu0 %3751
        %3753 = vrot.lane.b32.xlu0 %v3749, 112
        %v3754 = vpop.permute.xlu0 %3753
        %3755 = vrot.lane.b32.xlu0 %v3750, 112
        %v3756 = vpop.permute.xlu0 %3755
        %v3759 = vunpack.c.l.b16 %v3746
        %v3760 = vunpack.c.l.b16 %v3747
        %v3761 = vpack.c.b16 %v3760, %v3759
        %v3764 = vsel %vm3067, %v3752, 0
        %v3767 = vsel %vm3067, %v3754, 0
        %v3770 = vsel %vm3067, %v3756, 0
        %3772 = vmatprep.subr.bf16.mxu0 0
        %3773 = vmatpush1.bf16.msra.mxu0 %v3761
        %3774 = vmatprep.subr.bf16.mxu0 0
        %3775 = vmatpush1.bf16.msra.mxu0 0
        %3776 = vmatprep.subr.bf16.mxu0 0
        %3777 = vmatpush1.bf16.msra.mxu0 0
        %3778 = vmatprep.subr.bf16.mxu0 0
        %3779 = vmatpush1.bf16.msra.mxu0 0
        %3780 = vmatprep.subr.bf16.mxu0 0
        %3781 = vmatpush1.bf16.msra.mxu0 0
        %3782 = vmatprep.subr.bf16.mxu0 0
        %3783 = vmatpush1.bf16.msra.mxu0 0
        %3784 = vmatprep.subr.bf16.mxu0 0
        %3785 = vmatpush1.bf16.msra.mxu0 0
        %3786 = vmatprep.subr.bf16.mxu0 0
        %3787 = vmatpush1.bf16.msra.mxu0 0
        %3788 = vmatprep.subr.bf16.mxu0 0
        %3789 = vmatpush1.bf16.msra.mxu0 0
        %3790 = vmatprep.subr.bf16.mxu0 0
        %3791 = vmatpush1.bf16.msra.mxu0 0
        %3792 = vmatprep.subr.bf16.mxu0 0
        %3793 = vmatpush1.bf16.msra.mxu0 0
        %3794 = vmatprep.subr.bf16.mxu0 0
        %3795 = vmatpush1.bf16.msra.mxu0 0
        %3796 = vmatprep.subr.bf16.mxu0 0
        %3797 = vmatpush1.bf16.msra.mxu0 0
        %3798 = vmatprep.subr.bf16.mxu0 0
        %3799 = vmatpush1.bf16.msra.mxu0 0
        %3800 = vmatprep.subr.bf16.mxu0 0
        %3801 = vmatpush1.bf16.msra.mxu0 0
        %3802 = vmatprep.subr.bf16.mxu0 0
        %3803 = vmatpush1.bf16.msra.mxu0 0
        %3804 = vmatprep.mubr.bf16.mxu0 0
        %3805 = vmatmul.mubr.bf16.gmra.mrb[0].mxu0 %v3453
        %v3806 = vpop.f32.mrb[0].mxu0
        %v3807 = vadd.f32 0.0, %v3806
        %v3808 = vpop.f32.mrb[0].mxu0
        %v3809 = vpop.f32.mrb[0].mxu0
        %v3810 = vadd.f32 0.0, %v3809
        %v3811 = vpop.f32.mrb[0].mxu0
        %3812 = vmatprep.mubr.bf16.mxu0 0
        %3813 = vmatmul.mubr.bf16.gmra.mrb[0].mxu0 %v3456
        %v3814 = vpop.f32.mrb[0].mxu0
        %v3815 = vadd.f32 0.0, %v3814
        %v3816 = vpop.f32.mrb[0].mxu0
        %v3817 = vpop.f32.mrb[0].mxu0
        %v3818 = vadd.f32 0.0, %v3817
        %v3819 = vpop.f32.mrb[0].mxu0
        %3820 = vmatprep.mubr.bf16.mxu0 0
        %3821 = vmatmul.mubr.bf16.gmra.mrb[0].mxu0 %v3459
        %v3822 = vpop.f32.mrb[0].mxu0
        %v3823 = vadd.f32 0.0, %v3822
        %v3824 = vpop.f32.mrb[0].mxu0
        %v3825 = vpop.f32.mrb[0].mxu0
        %v3826 = vadd.f32 0.0, %v3825
        %v3827 = vpop.f32.mrb[0].mxu0
        %3828 = vmatprep.mubr.bf16.mxu0 0
        %3829 = vmatmul.mubr.bf16.gmra.mrb[0].mxu0 %v3462
        %v3830 = vpop.f32.mrb[0].mxu0
        %v3831 = vadd.f32 0.0, %v3830
        %v3832 = vpop.f32.mrb[0].mxu0
        %v3833 = vpop.f32.mrb[0].mxu0
        %v3834 = vadd.f32 0.0, %v3833
        %v3835 = vpop.f32.mrb[0].mxu0
        %3836 = vmatprep.mubr.bf16.mxu0 0
        %3837 = vmatmul.mubr.bf16.gmra.mrb[0].mxu0 %v3465
        %v3838 = vpop.f32.mrb[0].mxu0
        %v3839 = vadd.f32 0.0, %v3838
        %v3840 = vpop.f32.mrb[0].mxu0
        %v3841 = vpop.f32.mrb[0].mxu0
        %v3842 = vadd.f32 0.0, %v3841
        %v3843 = vpop.f32.mrb[0].mxu0
        %3844 = vmatprep.mubr.bf16.mxu0 0
        %3845 = vmatmul.mubr.bf16.gmra.mrb[0].mxu0 %v3468
        %v3846 = vpop.f32.mrb[0].mxu0
        %v3847 = vadd.f32 0.0, %v3846
        %v3848 = vpop.f32.mrb[0].mxu0
        %v3849 = vpop.f32.mrb[0].mxu0
        %v3850 = vadd.f32 0.0, %v3849
        %v3851 = vpop.f32.mrb[0].mxu0
        %3852 = vmatprep.mubr.bf16.mxu0 0
        %3853 = vmatmul.mubr.bf16.gmra.mrb[0].mxu0 %v3471
        %v3854 = vpop.f32.mrb[0].mxu0
        %v3855 = vadd.f32 0.0, %v3854
        %v3856 = vpop.f32.mrb[0].mxu0
        %v3857 = vpop.f32.mrb[0].mxu0
        %v3858 = vadd.f32 0.0, %v3857
        %v3859 = vpop.f32.mrb[0].mxu0
        %3860 = vmatprep.mubr.bf16.mxu0 0
        %3861 = vmatmul.mubr.bf16.gmra.mrb[0].mxu0 %v3474
        %v3862 = vpop.f32.mrb[0].mxu0
        %v3863 = vadd.f32 0.0, %v3862
        %v3864 = vpop.f32.mrb[0].mxu0
        %v3865 = vpop.f32.mrb[0].mxu0
        %v3866 = vadd.f32 0.0, %v3865
        %v3867 = vpop.f32.mrb[0].mxu0
        %3868 = vmatprep.mubr.bf16.mxu0 0
        %3869 = vmatmul.mubr.bf16.gmra.mrb[0].mxu0 %v3477
        %v3870 = vpop.f32.mrb[0].mxu0
        %v3871 = vadd.f32 0.0, %v3870
        %v3872 = vpop.f32.mrb[0].mxu0
        %v3873 = vpop.f32.mrb[0].mxu0
        %v3874 = vadd.f32 0.0, %v3873
        %v3875 = vpop.f32.mrb[0].mxu0
        %3876 = vmatprep.mubr.bf16.mxu0 0
        %3877 = vmatmul.mubr.bf16.gmra.mrb[0].mxu0 %v3480
        %v3878 = vpop.f32.mrb[0].mxu0
        %v3879 = vadd.f32 0.0, %v3878
        %v3880 = vpop.f32.mrb[0].mxu0
        %v3881 = vpop.f32.mrb[0].mxu0
        %v3882 = vadd.f32 0.0, %v3881
        %v3883 = vpop.f32.mrb[0].mxu0
        %3884 = vmatprep.mubr.bf16.mxu0 0
        %3885 = vmatmul.mubr.bf16.gmra.mrb[0].mxu0 %v3483
        %v3886 = vpop.f32.mrb[0].mxu0
        %v3887 = vadd.f32 0.0, %v3886
        %v3888 = vpop.f32.mrb[0].mxu0
        %v3889 = vpop.f32.mrb[0].mxu0
        %v3890 = vadd.f32 0.0, %v3889
        %v3891 = vpop.f32.mrb[0].mxu0
        %3892 = vmatprep.mubr.bf16.mxu0 0
        %3893 = vmatmul.mubr.bf16.gmra.mrb[0].mxu0 %v3486
        %v3894 = vpop.f32.mrb[0].mxu0
        %v3895 = vadd.f32 0.0, %v3894
        %v3896 = vpop.f32.mrb[0].mxu0
        %v3897 = vpop.f32.mrb[0].mxu0
        %v3898 = vadd.f32 0.0, %v3897
        %v3899 = vpop.f32.mrb[0].mxu0
        %3900 = vmatprep.mubr.bf16.mxu0 0
        %3901 = vmatmul.mubr.bf16.gmra.mrb[0].mxu0 %v3489
        %v3902 = vpop.f32.mrb[0].mxu0
        %v3903 = vadd.f32 0.0, %v3902
        %v3904 = vpop.f32.mrb[0].mxu0
        %v3905 = vpop.f32.mrb[0].mxu0
        %v3906 = vadd.f32 0.0, %v3905
        %v3907 = vpop.f32.mrb[0].mxu0
        %3908 = vmatprep.mubr.bf16.mxu0 0
        %3909 = vmatmul.mubr.bf16.gmra.mrb[0].mxu0 %v3492
        %v3910 = vpop.f32.mrb[0].mxu0
        %v3911 = vadd.f32 0.0, %v3910
        %v3912 = vpop.f32.mrb[0].mxu0
        %v3913 = vpop.f32.mrb[0].mxu0
        %v3914 = vadd.f32 0.0, %v3913
        %v3915 = vpop.f32.mrb[0].mxu0
        %3916 = vmatprep.mubr.bf16.mxu0 0
        %3917 = vmatmul.mubr.bf16.gmra.mrb[0].mxu0 %v3495
        %v3918 = vpop.f32.mrb[0].mxu0
        %v3919 = vadd.f32 0.0, %v3918
        %v3920 = vpop.f32.mrb[0].mxu0
        %v3921 = vpop.f32.mrb[0].mxu0
        %v3922 = vadd.f32 0.0, %v3921
        %v3923 = vpop.f32.mrb[0].mxu0
        %3924 = vmatprep.mubr.bf16.mxu0 0
        %3925 = vmatmul.mubr.bf16.gmra.mrb[0].mxu0 %v3498
        %v3926 = vpop.f32.mrb[0].mxu0
        %v3927 = vadd.f32 0.0, %v3926
        %v3928 = vpop.f32.mrb[0].mxu0
        %v3929 = vpop.f32.mrb[0].mxu0
        %v3930 = vadd.f32 0.0, %v3929
        %v3931 = vpop.f32.mrb[0].mxu0
        %3932 = vmatprep.mubr.bf16.mxu0 0
        %3933 = vmatmul.mubr.bf16.gmra.mrb[0].mxu0 %v3501
        %v3934 = vpop.f32.mrb[0].mxu0
        %v3935 = vadd.f32 0.0, %v3934
        %v3936 = vpop.f32.mrb[0].mxu0
        %v3937 = vpop.f32.mrb[0].mxu0
        %v3938 = vadd.f32 0.0, %v3937
        %v3939 = vpop.f32.mrb[0].mxu0
        %3940 = vmatprep.mubr.bf16.mxu0 0
        %3941 = vmatmul.mubr.bf16.gmra.mrb[0].mxu0 %v3504
        %v3942 = vpop.f32.mrb[0].mxu0
        %v3943 = vadd.f32 0.0, %v3942
        %v3944 = vpop.f32.mrb[0].mxu0
        %v3945 = vpop.f32.mrb[0].mxu0
        %v3946 = vadd.f32 0.0, %v3945
        %v3947 = vpop.f32.mrb[0].mxu0
        %3948 = vmatprep.mubr.bf16.mxu0 0
        %3949 = vmatmul.mubr.bf16.gmra.mrb[0].mxu0 %v3507
        %v3950 = vpop.f32.mrb[0].mxu0
        %v3951 = vadd.f32 0.0, %v3950
        %v3952 = vpop.f32.mrb[0].mxu0
        %v3953 = vpop.f32.mrb[0].mxu0
        %v3954 = vadd.f32 0.0, %v3953
        %v3955 = vpop.f32.mrb[0].mxu0
        %3956 = vmatprep.mubr.bf16.mxu0 0
        %3957 = vmatmul.mubr.bf16.gmra.mrb[0].mxu0 %v3510
        %v3958 = vpop.f32.mrb[0].mxu0
        %v3959 = vadd.f32 0.0, %v3958
        %v3960 = vpop.f32.mrb[0].mxu0
        %v3961 = vpop.f32.mrb[0].mxu0
        %v3962 = vadd.f32 0.0, %v3961
        %v3963 = vpop.f32.mrb[0].mxu0
        %3964 = vmatprep.mubr.bf16.mxu0 0
        %3965 = vmatmul.mubr.bf16.gmra.mrb[0].mxu0 %v3513
        %v3966 = vpop.f32.mrb[0].mxu0
        %v3967 = vadd.f32 0.0, %v3966
        %v3968 = vpop.f32.mrb[0].mxu0
        %v3969 = vpop.f32.mrb[0].mxu0
        %v3970 = vadd.f32 0.0, %v3969
        %v3971 = vpop.f32.mrb[0].mxu0
        %3972 = vmatprep.mubr.bf16.mxu0 0
        %3973 = vmatmul.mubr.bf16.gmra.mrb[0].mxu0 %v3764
        %v3974 = vpop.f32.mrb[0].mxu0
        %v3975 = vadd.f32 0.0, %v3974
        %v3976 = vpop.f32.mrb[0].mxu0
        %v3977 = vpop.f32.mrb[0].mxu0
        %v3978 = vadd.f32 0.0, %v3977
        %v3979 = vpop.f32.mrb[0].mxu0
        %3980 = vmatprep.mubr.bf16.mxu0 0
        %3981 = vmatmul.mubr.bf16.gmra.mrb[0].mxu0 %v3767
        %v3982 = vpop.f32.mrb[0].mxu0
        %v3983 = vadd.f32 0.0, %v3982
        %v3984 = vpop.f32.mrb[0].mxu0
        %v3985 = vpop.f32.mrb[0].mxu0
        %v3986 = vadd.f32 0.0, %v3985
        %v3987 = vpop.f32.mrb[0].mxu0
        %3988 = vmatprep.mubr.bf16.mxu0 0
        %3989 = vmatmul.mubr.bf16.gmra.mrb[0].mxu0 %v3770
        %v3990 = vpop.f32.mrb[0].mxu0
        %v3991 = vadd.f32 0.0, %v3990
        %v3992 = vpop.f32.mrb[0].mxu0
        %v3993 = vpop.f32.mrb[0].mxu0
        %v3994 = vadd.f32 0.0, %v3993
        %v3995 = vpop.f32.mrb[0].mxu0
        %3996 = vdwg.mxu0
        %v3997 = vadd.f32 %v3550, %v3807
        %v3998 = vadd.f32 %v3553, %v3810
        %v3999 = vadd.f32 %v3558, %v3815
        %v4000 = vadd.f32 %v3561, %v3818
        %v4001 = vadd.f32 %v3566, %v3823
        %v4002 = vadd.f32 %v3569, %v3826
        %v4003 = vadd.f32 %v3574, %v3831
        %v4004 = vadd.f32 %v3577, %v3834
        %v4005 = vadd.f32 %v3582, %v3839
        %v4006 = vadd.f32 %v3585, %v3842
        %v4007 = vadd.f32 %v3590, %v3847
        %v4008 = vadd.f32 %v3593, %v3850
        %v4009 = vadd.f32 %v3598, %v3855
        %v4010 = vadd.f32 %v3601, %v3858
        %v4011 = vadd.f32 %v3606, %v3863
        %v4012 = vadd.f32 %v3609, %v3866
        %v4013 = vadd.f32 %v3614, %v3871
        %v4014 = vadd.f32 %v3617, %v3874
        %v4015 = vadd.f32 %v3622, %v3879
        %v4016 = vadd.f32 %v3625, %v3882
        %v4017 = vadd.f32 %v3630, %v3887
        %v4018 = vadd.f32 %v3633, %v3890
        %v4019 = vadd.f32 %v3638, %v3895
        %v4020 = vadd.f32 %v3641, %v3898
        %v4021 = vadd.f32 %v3646, %v3903
        %v4022 = vadd.f32 %v3649, %v3906
        %v4023 = vadd.f32 %v3654, %v3911
        %v4024 = vadd.f32 %v3657, %v3914
        %v4025 = vadd.f32 %v3662, %v3919
        %v4026 = vadd.f32 %v3665, %v3922
        %v4027 = vadd.f32 %v3670, %v3927
        %v4028 = vadd.f32 %v3673, %v3930
        %v4029 = vadd.f32 %v3678, %v3935
        %v4030 = vadd.f32 %v3681, %v3938
        %v4031 = vadd.f32 %v3686, %v3943
        %v4032 = vadd.f32 %v3689, %v3946
        %v4033 = vadd.f32 %v3694, %v3951
        %v4034 = vadd.f32 %v3697, %v3954
        %v4035 = vadd.f32 %v3702, %v3959
        %v4036 = vadd.f32 %v3705, %v3962
        %v4037 = vadd.f32 %v3710, %v3967
        %v4038 = vadd.f32 %v3713, %v3970
        %v4039 = vadd.f32 %v3718, %v3975
        %v4040 = vadd.f32 %v3721, %v3978
        %v4041 = vadd.f32 %v3726, %v3983
        %v4042 = vadd.f32 %v3729, %v3986
        %v4043 = vadd.f32 %v3734, %v3991
        %v4044 = vadd.f32 %v3737, %v3994
        %v4093 = vrot.slane %v3997, 1
        %v4094 = vrot.slane %v3998, 1
        %v4095 = vsel %vm1823, %v4093, %v4094
        %v4096 = vrot.slane %v3999, 1
        %v4097 = vsel %vm1823, %v4094, %v4096
        %v4098 = vrot.slane %v4000, 1
        %v4099 = vrot.slane %v4001, 1
        %v4100 = vsel %vm1823, %v4098, %v4099
        %v4101 = vrot.slane %v4002, 1
        %v4102 = vsel %vm1823, %v4099, %v4101
        %v4103 = vrot.slane %v4003, 1
        %v4104 = vrot.slane %v4004, 1
        %v4105 = vsel %vm1823, %v4103, %v4104
        %v4106 = vrot.slane %v4005, 1
        %v4107 = vsel %vm1823, %v4104, %v4106
        %v4108 = vrot.slane %v4006, 1
        %v4109 = vrot.slane %v4007, 1
        %v4110 = vsel %vm1823, %v4108, %v4109
        %v4111 = vrot.slane %v4008, 1
        %v4112 = vsel %vm1823, %v4109, %v4111
        %v4113 = vrot.slane %v4009, 1
        %v4114 = vrot.slane %v4010, 1
        %v4115 = vsel %vm1823, %v4113, %v4114
        %v4116 = vrot.slane %v4011, 1
        %v4117 = vsel %vm1823, %v4114, %v4116
        %v4118 = vrot.slane %v4012, 1
        %v4119 = vrot.slane %v4013, 1
        %v4120 = vsel %vm1823, %v4118, %v4119
        %v4121 = vrot.slane %v4014, 1
        %v4122 = vsel %vm1823, %v4119, %v4121
        %v4123 = vrot.slane %v4015, 1
        %v4124 = vrot.slane %v4016, 1
        %v4125 = vsel %vm1823, %v4123, %v4124
        %v4126 = vrot.slane %v4017, 1
        %v4127 = vsel %vm1823, %v4124, %v4126
        %v4128 = vrot.slane %v4018, 1
        %v4129 = vrot.slane %v4019, 1
        %v4130 = vsel %vm1823, %v4128, %v4129
        %v4131 = vrot.slane %v4020, 1
        %v4132 = vsel %vm1823, %v4129, %v4131
        %v4133 = vrot.slane %v4021, 1
        %v4134 = vrot.slane %v4022, 1
        %v4135 = vsel %vm1823, %v4133, %v4134
        %v4136 = vrot.slane %v4023, 1
        %v4137 = vsel %vm1823, %v4134, %v4136
        %v4138 = vrot.slane %v4024, 1
        %v4139 = vrot.slane %v4025, 1
        %v4140 = vsel %vm1823, %v4138, %v4139
        %v4141 = vrot.slane %v4026, 1
        %v4142 = vsel %vm1823, %v4139, %v4141
        %v4143 = vrot.slane %v4027, 1
        %v4144 = vrot.slane %v4028, 1
        %v4145 = vsel %vm1823, %v4143, %v4144
        %v4146 = vrot.slane %v4029, 1
        %v4147 = vsel %vm1823, %v4144, %v4146
        %v4148 = vrot.slane %v4030, 1
        %v4149 = vrot.slane %v4031, 1
        %v4150 = vsel %vm1823, %v4148, %v4149
        %v4151 = vrot.slane %v4032, 1
        %v4152 = vsel %vm1823, %v4149, %v4151
        %v4153 = vrot.slane %v4033, 1
        %v4154 = vrot.slane %v4034, 1
        %v4155 = vsel %vm1823, %v4153, %v4154
        %v4156 = vrot.slane %v4035, 1
        %v4157 = vsel %vm1823, %v4154, %v4156
        %v4158 = vrot.slane %v4036, 1
        %v4159 = vrot.slane %v4037, 1
        %v4160 = vsel %vm1823, %v4158, %v4159
        %v4161 = vrot.slane %v4038, 1
        %v4162 = vsel %vm1823, %v4159, %v4161
        %v4163 = vrot.slane %v4039, 1
        %v4164 = vrot.slane %v4040, 1
        %v4165 = vsel %vm1823, %v4163, %v4164
        %v4166 = vrot.slane %v4041, 1
        %v4167 = vsel %vm1823, %v4164, %v4166
        %v4168 = vrot.slane %v4042, 1
        %v4169 = vrot.slane %v4043, 1
        %v4170 = vsel %vm1823, %v4168, %v4169
        %v4171 = vrot.slane %v4044, 1
        %v4172 = vsel %vm1823, %v4169, %v4171
        %4173 = vrot.lane.b32.xlu0 %v4095, 112
        %v4174 = vpop.permute.xlu0 %4173
        %4175 = vrot.lane.b32.xlu0 %v4097, 112
        %v4176 = vpop.permute.xlu0 %4175
        %4177 = vrot.lane.b32.xlu0 %v4100, 112
        %v4178 = vpop.permute.xlu0 %4177
        %4179 = vrot.lane.b32.xlu0 %v4102, 112
        %v4180 = vpop.permute.xlu0 %4179
        %4181 = vrot.lane.b32.xlu0 %v4105, 112
        %v4182 = vpop.permute.xlu0 %4181
        %4183 = vrot.lane.b32.xlu0 %v4107, 112
        %v4184 = vpop.permute.xlu0 %4183
        %4185 = vrot.lane.b32.xlu0 %v4110, 112
        %v4186 = vpop.permute.xlu0 %4185
        %4187 = vrot.lane.b32.xlu0 %v4112, 112
        %v4188 = vpop.permute.xlu0 %4187
        %4189 = vrot.lane.b32.xlu0 %v4115, 112
        %v4190 = vpop.permute.xlu0 %4189
        %4191 = vrot.lane.b32.xlu0 %v4117, 112
        %v4192 = vpop.permute.xlu0 %4191
        %4193 = vrot.lane.b32.xlu0 %v4120, 112
        %v4194 = vpop.permute.xlu0 %4193
        %4195 = vrot.lane.b32.xlu0 %v4122, 112
        %v4196 = vpop.permute.xlu0 %4195
        %4197 = vrot.lane.b32.xlu0 %v4125, 112
        %v4198 = vpop.permute.xlu0 %4197
        %4199 = vrot.lane.b32.xlu0 %v4127, 112
        %v4200 = vpop.permute.xlu0 %4199
        %4201 = vrot.lane.b32.xlu0 %v4130, 112
        %v4202 = vpop.permute.xlu0 %4201
        %4203 = vrot.lane.b32.xlu0 %v4132, 112
        %v4204 = vpop.permute.xlu0 %4203
        %4205 = vrot.lane.b32.xlu0 %v4135, 112
        %v4206 = vpop.permute.xlu0 %4205
        %4207 = vrot.lane.b32.xlu0 %v4137, 112
        %v4208 = vpop.permute.xlu0 %4207
        %4209 = vrot.lane.b32.xlu0 %v4140, 112
        %v4210 = vpop.permute.xlu0 %4209
        %4211 = vrot.lane.b32.xlu0 %v4142, 112
        %v4212 = vpop.permute.xlu0 %4211
        %4213 = vrot.lane.b32.xlu0 %v4145, 112
        %v4214 = vpop.permute.xlu0 %4213
        %4215 = vrot.lane.b32.xlu0 %v4147, 112
        %v4216 = vpop.permute.xlu0 %4215
        %4217 = vrot.lane.b32.xlu0 %v4150, 112
        %v4218 = vpop.permute.xlu0 %4217
        %4219 = vrot.lane.b32.xlu0 %v4152, 112
        %v4220 = vpop.permute.xlu0 %4219
        %4221 = vrot.lane.b32.xlu0 %v4155, 112
        %v4222 = vpop.permute.xlu0 %4221
        %4223 = vrot.lane.b32.xlu0 %v4157, 112
        %v4224 = vpop.permute.xlu0 %4223
        %4225 = vrot.lane.b32.xlu0 %v4160, 112
        %v4226 = vpop.permute.xlu0 %4225
        %4227 = vrot.lane.b32.xlu0 %v4162, 112
        %v4228 = vpop.permute.xlu0 %4227
        %4229 = vrot.lane.b32.xlu0 %v4165, 112
        %v4230 = vpop.permute.xlu0 %4229
        %4231 = vrot.lane.b32.xlu0 %v4167, 112
        %v4232 = vpop.permute.xlu0 %4231
        %4233 = vrot.lane.b32.xlu0 %v4170, 112
        %v4234 = vpop.permute.xlu0 %4233
        %4235 = vrot.lane.b32.xlu0 %v4172, 112
        %v4236 = vpop.permute.xlu0 %4235
        %v4269 = vadd.f32 %v3997, %v4174
        %v4270 = vadd.f32 %v3998, %v4176
        %v4271 = vadd.f32 %v4000, %v4178
        %v4272 = vadd.f32 %v4001, %v4180
        %v4273 = vadd.f32 %v4003, %v4182
        %v4274 = vadd.f32 %v4004, %v4184
        %v4275 = vadd.f32 %v4006, %v4186
        %v4276 = vadd.f32 %v4007, %v4188
        %v4277 = vadd.f32 %v4009, %v4190
        %v4278 = vadd.f32 %v4010, %v4192
        %v4279 = vadd.f32 %v4012, %v4194
        %v4280 = vadd.f32 %v4013, %v4196
        %v4281 = vadd.f32 %v4015, %v4198
        %v4282 = vadd.f32 %v4016, %v4200
        %v4283 = vadd.f32 %v4018, %v4202
        %v4284 = vadd.f32 %v4019, %v4204
        %v4285 = vadd.f32 %v4021, %v4206
        %v4286 = vadd.f32 %v4022, %v4208
        %v4287 = vadd.f32 %v4024, %v4210
        %v4288 = vadd.f32 %v4025, %v4212
        %v4289 = vadd.f32 %v4027, %v4214
        %v4290 = vadd.f32 %v4028, %v4216
        %v4291 = vadd.f32 %v4030, %v4218
        %v4292 = vadd.f32 %v4031, %v4220
        %v4293 = vadd.f32 %v4033, %v4222
        %v4294 = vadd.f32 %v4034, %v4224
        %v4295 = vadd.f32 %v4036, %v4226
        %v4296 = vadd.f32 %v4037, %v4228
        %v4297 = vadd.f32 %v4039, %v4230
        %v4298 = vadd.f32 %v4040, %v4232
        %v4299 = vadd.f32 %v4042, %v4234
        %v4300 = vadd.f32 %v4043, %v4236
        %v4301 = vrot.slane %v3997, 2
        %v4302 = vrot.slane %v3998, 2
        %v4303 = vsel %vm2166, %v4301, %v4302
        %v4304 = vrot.slane %v3999, 2
        %v4305 = vsel %vm2166, %v4302, %v4304
        %v4306 = vrot.slane %v4000, 2
        %v4307 = vrot.slane %v4001, 2
        %v4308 = vsel %vm2166, %v4306, %v4307
        %v4309 = vrot.slane %v4002, 2
        %v4310 = vsel %vm2166, %v4307, %v4309
        %v4311 = vrot.slane %v4003, 2
        %v4312 = vrot.slane %v4004, 2
        %v4313 = vsel %vm2166, %v4311, %v4312
        %v4314 = vrot.slane %v4005, 2
        %v4315 = vsel %vm2166, %v4312, %v4314
        %v4316 = vrot.slane %v4006, 2
        %v4317 = vrot.slane %v4007, 2
        %v4318 = vsel %vm2166, %v4316, %v4317
        %v4319 = vrot.slane %v4008, 2
        %v4320 = vsel %vm2166, %v4317, %v4319
        %v4321 = vrot.slane %v4009, 2
        %v4322 = vrot.slane %v4010, 2
        %v4323 = vsel %vm2166, %v4321, %v4322
        %v4324 = vrot.slane %v4011, 2
        %v4325 = vsel %vm2166, %v4322, %v4324
        %v4326 = vrot.slane %v4012, 2
        %v4327 = vrot.slane %v4013, 2
        %v4328 = vsel %vm2166, %v4326, %v4327
        %v4329 = vrot.slane %v4014, 2
        %v4330 = vsel %vm2166, %v4327, %v4329
        %v4331 = vrot.slane %v4015, 2
        %v4332 = vrot.slane %v4016, 2
        %v4333 = vsel %vm2166, %v4331, %v4332
        %v4334 = vrot.slane %v4017, 2
        %v4335 = vsel %vm2166, %v4332, %v4334
        %v4336 = vrot.slane %v4018, 2
        %v4337 = vrot.slane %v4019, 2
        %v4338 = vsel %vm2166, %v4336, %v4337
        %v4339 = vrot.slane %v4020, 2
        %v4340 = vsel %vm2166, %v4337, %v4339
        %v4341 = vrot.slane %v4021, 2
        %v4342 = vrot.slane %v4022, 2
        %v4343 = vsel %vm2166, %v4341, %v4342
        %v4344 = vrot.slane %v4023, 2
        %v4345 = vsel %vm2166, %v4342, %v4344
        %v4346 = vrot.slane %v4024, 2
        %v4347 = vrot.slane %v4025, 2
        %v4348 = vsel %vm2166, %v4346, %v4347
        %v4349 = vrot.slane %v4026, 2
        %v4350 = vsel %vm2166, %v4347, %v4349
        %v4351 = vrot.slane %v4027, 2
        %v4352 = vrot.slane %v4028, 2
        %v4353 = vsel %vm2166, %v4351, %v4352
        %v4354 = vrot.slane %v4029, 2
        %v4355 = vsel %vm2166, %v4352, %v4354
        %v4356 = vrot.slane %v4030, 2
        %v4357 = vrot.slane %v4031, 2
        %v4358 = vsel %vm2166, %v4356, %v4357
        %v4359 = vrot.slane %v4032, 2
        %v4360 = vsel %vm2166, %v4357, %v4359
        %v4361 = vrot.slane %v4033, 2
        %v4362 = vrot.slane %v4034, 2
        %v4363 = vsel %vm2166, %v4361, %v4362
        %v4364 = vrot.slane %v4035, 2
        %v4365 = vsel %vm2166, %v4362, %v4364
        %v4366 = vrot.slane %v4036, 2
        %v4367 = vrot.slane %v4037, 2
        %v4368 = vsel %vm2166, %v4366, %v4367
        %v4369 = vrot.slane %v4038, 2
        %v4370 = vsel %vm2166, %v4367, %v4369
        %v4371 = vrot.slane %v4039, 2
        %v4372 = vrot.slane %v4040, 2
        %v4373 = vsel %vm2166, %v4371, %v4372
        %v4374 = vrot.slane %v4041, 2
        %v4375 = vsel %vm2166, %v4372, %v4374
        %v4376 = vrot.slane %v4042, 2
        %v4377 = vrot.slane %v4043, 2
        %v4378 = vsel %vm2166, %v4376, %v4377
        %v4379 = vrot.slane %v4044, 2
        %v4380 = vsel %vm2166, %v4377, %v4379
        %4381 = vrot.lane.b32.xlu0 %v4303, 96
        %v4382 = vpop.permute.xlu0 %4381
        %4383 = vrot.lane.b32.xlu0 %v4305, 96
        %v4384 = vpop.permute.xlu0 %4383
        %4385 = vrot.lane.b32.xlu0 %v4308, 96
        %v4386 = vpop.permute.xlu0 %4385
        %4387 = vrot.lane.b32.xlu0 %v4310, 96
        %v4388 = vpop.permute.xlu0 %4387
        %4389 = vrot.lane.b32.xlu0 %v4313, 96
        %v4390 = vpop.permute.xlu0 %4389
        %4391 = vrot.lane.b32.xlu0 %v4315, 96
        %v4392 = vpop.permute.xlu0 %4391
        %4393 = vrot.lane.b32.xlu0 %v4318, 96
        %v4394 = vpop.permute.xlu0 %4393
        %4395 = vrot.lane.b32.xlu0 %v4320, 96
        %v4396 = vpop.permute.xlu0 %4395
        %4397 = vrot.lane.b32.xlu0 %v4323, 96
        %v4398 = vpop.permute.xlu0 %4397
        %4399 = vrot.lane.b32.xlu0 %v4325, 96
        %v4400 = vpop.permute.xlu0 %4399
        %4401 = vrot.lane.b32.xlu0 %v4328, 96
        %v4402 = vpop.permute.xlu0 %4401
        %4403 = vrot.lane.b32.xlu0 %v4330, 96
        %v4404 = vpop.permute.xlu0 %4403
        %4405 = vrot.lane.b32.xlu0 %v4333, 96
        %v4406 = vpop.permute.xlu0 %4405
        %4407 = vrot.lane.b32.xlu0 %v4335, 96
        %v4408 = vpop.permute.xlu0 %4407
        %4409 = vrot.lane.b32.xlu0 %v4338, 96
        %v4410 = vpop.permute.xlu0 %4409
        %4411 = vrot.lane.b32.xlu0 %v4340, 96
        %v4412 = vpop.permute.xlu0 %4411
        %4413 = vrot.lane.b32.xlu0 %v4343, 96
        %v4414 = vpop.permute.xlu0 %4413
        %4415 = vrot.lane.b32.xlu0 %v4345, 96
        %v4416 = vpop.permute.xlu0 %4415
        %4417 = vrot.lane.b32.xlu0 %v4348, 96
        %v4418 = vpop.permute.xlu0 %4417
        %4419 = vrot.lane.b32.xlu0 %v4350, 96
        %v4420 = vpop.permute.xlu0 %4419
        %4421 = vrot.lane.b32.xlu0 %v4353, 96
        %v4422 = vpop.permute.xlu0 %4421
        %4423 = vrot.lane.b32.xlu0 %v4355, 96
        %v4424 = vpop.permute.xlu0 %4423
        %4425 = vrot.lane.b32.xlu0 %v4358, 96
        %v4426 = vpop.permute.xlu0 %4425
        %4427 = vrot.lane.b32.xlu0 %v4360, 96
        %v4428 = vpop.permute.xlu0 %4427
        %4429 = vrot.lane.b32.xlu0 %v4363, 96
        %v4430 = vpop.permute.xlu0 %4429
        %4431 = vrot.lane.b32.xlu0 %v4365, 96
        %v4432 = vpop.permute.xlu0 %4431
        %4433 = vrot.lane.b32.xlu0 %v4368, 96
        %v4434 = vpop.permute.xlu0 %4433
        %4435 = vrot.lane.b32.xlu0 %v4370, 96
        %v4436 = vpop.permute.xlu0 %4435
        %4437 = vrot.lane.b32.xlu0 %v4373, 96
        %v4438 = vpop.permute.xlu0 %4437
        %4439 = vrot.lane.b32.xlu0 %v4375, 96
        %v4440 = vpop.permute.xlu0 %4439
        %4441 = vrot.lane.b32.xlu0 %v4378, 96
        %v4442 = vpop.permute.xlu0 %4441
        %4443 = vrot.lane.b32.xlu0 %v4380, 96
        %v4444 = vpop.permute.xlu0 %4443
        %v4477 = vadd.f32 %v4269, %v4382
        %v4478 = vadd.f32 %v4270, %v4384
        %v4479 = vadd.f32 %v4271, %v4386
        %v4480 = vadd.f32 %v4272, %v4388
        %v4481 = vadd.f32 %v4273, %v4390
        %v4482 = vadd.f32 %v4274, %v4392
        %v4483 = vadd.f32 %v4275, %v4394
        %v4484 = vadd.f32 %v4276, %v4396
        %v4485 = vadd.f32 %v4277, %v4398
        %v4486 = vadd.f32 %v4278, %v4400
        %v4487 = vadd.f32 %v4279, %v4402
        %v4488 = vadd.f32 %v4280, %v4404
        %v4489 = vadd.f32 %v4281, %v4406
        %v4490 = vadd.f32 %v4282, %v4408
        %v4491 = vadd.f32 %v4283, %v4410
        %v4492 = vadd.f32 %v4284, %v4412
        %v4493 = vadd.f32 %v4285, %v4414
        %v4494 = vadd.f32 %v4286, %v4416
        %v4495 = vadd.f32 %v4287, %v4418
        %v4496 = vadd.f32 %v4288, %v4420
        %v4497 = vadd.f32 %v4289, %v4422
        %v4498 = vadd.f32 %v4290, %v4424
        %v4499 = vadd.f32 %v4291, %v4426
        %v4500 = vadd.f32 %v4292, %v4428
        %v4501 = vadd.f32 %v4293, %v4430
        %v4502 = vadd.f32 %v4294, %v4432
        %v4503 = vadd.f32 %v4295, %v4434
        %v4504 = vadd.f32 %v4296, %v4436
        %v4505 = vadd.f32 %v4297, %v4438
        %v4506 = vadd.f32 %v4298, %v4440
        %v4507 = vadd.f32 %v4299, %v4442
        %v4508 = vadd.f32 %v4300, %v4444
        %v4557 = vrot.slane %v2458, 1
        %v4558 = vrot.slane %v2459, 1
        %v4559 = vsel %vm1823, %v4557, %v4558
        %v4560 = vrot.slane %v2460, 1
        %v4561 = vsel %vm1823, %v4558, %v4560
        %v4562 = vrot.slane %v2461, 1
        %v4563 = vrot.slane %v2462, 1
        %v4564 = vsel %vm1823, %v4562, %v4563
        %v4565 = vrot.slane %v2463, 1
        %v4566 = vsel %vm1823, %v4563, %v4565
        %v4567 = vrot.slane %v2464, 1
        %v4568 = vrot.slane %v2465, 1
        %v4569 = vsel %vm1823, %v4567, %v4568
        %v4570 = vrot.slane %v2466, 1
        %v4571 = vsel %vm1823, %v4568, %v4570
        %v4572 = vrot.slane %v2467, 1
        %v4573 = vrot.slane %v2468, 1
        %v4574 = vsel %vm1823, %v4572, %v4573
        %v4575 = vrot.slane %v2469, 1
        %v4576 = vsel %vm1823, %v4573, %v4575
        %v4577 = vrot.slane %v2470, 1
        %v4578 = vrot.slane %v2471, 1
        %v4579 = vsel %vm1823, %v4577, %v4578
        %v4580 = vrot.slane %v2472, 1
        %v4581 = vsel %vm1823, %v4578, %v4580
        %v4582 = vrot.slane %v2473, 1
        %v4583 = vrot.slane %v2474, 1
        %v4584 = vsel %vm1823, %v4582, %v4583
        %v4585 = vrot.slane %v2475, 1
        %v4586 = vsel %vm1823, %v4583, %v4585
        %v4587 = vrot.slane %v2476, 1
        %v4588 = vrot.slane %v2477, 1
        %v4589 = vsel %vm1823, %v4587, %v4588
        %v4590 = vrot.slane %v2478, 1
        %v4591 = vsel %vm1823, %v4588, %v4590
        %v4592 = vrot.slane %v2479, 1
        %v4593 = vrot.slane %v2480, 1
        %v4594 = vsel %vm1823, %v4592, %v4593
        %v4595 = vrot.slane %v2481, 1
        %v4596 = vsel %vm1823, %v4593, %v4595
        %v4597 = vrot.slane %v2482, 1
        %v4598 = vrot.slane %v2483, 1
        %v4599 = vsel %vm1823, %v4597, %v4598
        %v4600 = vrot.slane %v2484, 1
        %v4601 = vsel %vm1823, %v4598, %v4600
        %v4602 = vrot.slane %v2485, 1
        %v4603 = vrot.slane %v2486, 1
        %v4604 = vsel %vm1823, %v4602, %v4603
        %v4605 = vrot.slane %v2487, 1
        %v4606 = vsel %vm1823, %v4603, %v4605
        %v4607 = vrot.slane %v2488, 1
        %v4608 = vrot.slane %v2489, 1
        %v4609 = vsel %vm1823, %v4607, %v4608
        %v4610 = vrot.slane %v2490, 1
        %v4611 = vsel %vm1823, %v4608, %v4610
        %v4612 = vrot.slane %v2491, 1
        %v4613 = vrot.slane %v2492, 1
        %v4614 = vsel %vm1823, %v4612, %v4613
        %v4615 = vrot.slane %v2493, 1
        %v4616 = vsel %vm1823, %v4613, %v4615
        %v4617 = vrot.slane %v2494, 1
        %v4618 = vrot.slane %v2495, 1
        %v4619 = vsel %vm1823, %v4617, %v4618
        %v4620 = vrot.slane %v2496, 1
        %v4621 = vsel %vm1823, %v4618, %v4620
        %v4622 = vrot.slane %v2497, 1
        %v4623 = vrot.slane %v2498, 1
        %v4624 = vsel %vm1823, %v4622, %v4623
        %v4625 = vrot.slane %v2499, 1
        %v4626 = vsel %vm1823, %v4623, %v4625
        %v4627 = vrot.slane %v2500, 1
        %v4628 = vrot.slane %v2501, 1
        %v4629 = vsel %vm1823, %v4627, %v4628
        %v4630 = vrot.slane %v2502, 1
        %v4631 = vsel %vm1823, %v4628, %v4630
        %v4632 = vrot.slane %v2503, 1
        %v4633 = vrot.slane %v2504, 1
        %v4634 = vsel %vm1823, %v4632, %v4633
        %v4635 = vrot.slane %v2505, 1
        %v4636 = vsel %vm1823, %v4633, %v4635
        %v4669 = vadd.f32 %v4477, %v4559
        %v4670 = vadd.f32 %v4478, %v4561
        %v4671 = vadd.f32 %v4479, %v4564
        %v4672 = vadd.f32 %v4480, %v4566
        %v4673 = vadd.f32 %v4481, %v4569
        %v4674 = vadd.f32 %v4482, %v4571
        %v4675 = vadd.f32 %v4483, %v4574
        %v4676 = vadd.f32 %v4484, %v4576
        %v4677 = vadd.f32 %v4485, %v4579
        %v4678 = vadd.f32 %v4486, %v4581
        %v4679 = vadd.f32 %v4487, %v4584
        %v4680 = vadd.f32 %v4488, %v4586
        %v4681 = vadd.f32 %v4489, %v4589
        %v4682 = vadd.f32 %v4490, %v4591
        %v4683 = vadd.f32 %v4491, %v4594
        %v4684 = vadd.f32 %v4492, %v4596
        %v4685 = vadd.f32 %v4493, %v4599
        %v4686 = vadd.f32 %v4494, %v4601
        %v4687 = vadd.f32 %v4495, %v4604
        %v4688 = vadd.f32 %v4496, %v4606
        %v4689 = vadd.f32 %v4497, %v4609
        %v4690 = vadd.f32 %v4498, %v4611
        %v4691 = vadd.f32 %v4499, %v4614
        %v4692 = vadd.f32 %v4500, %v4616
        %v4693 = vadd.f32 %v4501, %v4619
        %v4694 = vadd.f32 %v4502, %v4621
        %v4695 = vadd.f32 %v4503, %v4624
        %v4696 = vadd.f32 %v4504, %v4626
        %v4697 = vadd.f32 %v4505, %v4629
        %v4698 = vadd.f32 %v4506, %v4631
        %v4699 = vadd.f32 %v4507, %v4634
        %v4700 = vadd.f32 %v4508, %v4636
        %v4701 = vld [vmem:[%s3] sm:$0x1]
        %v4703 = vlaneseq
        %v4704 = vshrl.u32 %v4703, 7
        %v4705 = vsub.s32 0, %v4704
        %v4706 = vrot.slane %v4701, %v4705
        %v4708 = vadd.f32 %v4669, %v4706
        %v4709 = vadd.f32 %v4670, %v4706
        %v4710 = vadd.f32 %v4671, %v4706
        %v4711 = vadd.f32 %v4672, %v4706
        %v4712 = vadd.f32 %v4673, %v4706
        %v4713 = vadd.f32 %v4674, %v4706
        %v4714 = vadd.f32 %v4675, %v4706
        %v4715 = vadd.f32 %v4676, %v4706
        %v4716 = vadd.f32 %v4677, %v4706
        %v4717 = vadd.f32 %v4678, %v4706
        %v4718 = vadd.f32 %v4679, %v4706
        %v4719 = vadd.f32 %v4680, %v4706
        %v4720 = vadd.f32 %v4681, %v4706
        %v4721 = vadd.f32 %v4682, %v4706
        %v4722 = vadd.f32 %v4683, %v4706
        %v4723 = vadd.f32 %v4684, %v4706
        %v4724 = vadd.f32 %v4685, %v4706
        %v4725 = vadd.f32 %v4686, %v4706
        %v4726 = vadd.f32 %v4687, %v4706
        %v4727 = vadd.f32 %v4688, %v4706
        %v4728 = vadd.f32 %v4689, %v4706
        %v4729 = vadd.f32 %v4690, %v4706
        %v4730 = vadd.f32 %v4691, %v4706
        %v4731 = vadd.f32 %v4692, %v4706
        %v4732 = vadd.f32 %v4693, %v4706
        %v4733 = vadd.f32 %v4694, %v4706
        %v4734 = vadd.f32 %v4695, %v4706
        %v4735 = vadd.f32 %v4696, %v4706
        %v4736 = vadd.f32 %v4697, %v4706
        %v4737 = vadd.f32 %v4698, %v4706
        %v4738 = vadd.f32 %v4699, %v4706
        %v4739 = vadd.f32 %v4700, %v4706
        %v4740 = vmax.f32 %v4708, 0.0
        %v4741 = vmax.f32 %v4709, 0.0
        %v4742 = vmax.f32 %v4710, 0.0
        %v4743 = vmax.f32 %v4711, 0.0
        %v4744 = vmax.f32 %v4712, 0.0
        %v4745 = vmax.f32 %v4713, 0.0
        %v4746 = vmax.f32 %v4714, 0.0
        %v4747 = vmax.f32 %v4715, 0.0
        %v4748 = vmax.f32 %v4716, 0.0
        %v4749 = vmax.f32 %v4717, 0.0
        %v4750 = vmax.f32 %v4718, 0.0
        %v4751 = vmax.f32 %v4719, 0.0
        %v4752 = vmax.f32 %v4720, 0.0
        %v4753 = vmax.f32 %v4721, 0.0
        %v4754 = vmax.f32 %v4722, 0.0
        %v4755 = vmax.f32 %v4723, 0.0
        %v4756 = vmax.f32 %v4724, 0.0
        %v4757 = vmax.f32 %v4725, 0.0
        %v4758 = vmax.f32 %v4726, 0.0
        %v4759 = vmax.f32 %v4727, 0.0
        %v4760 = vmax.f32 %v4728, 0.0
        %v4761 = vmax.f32 %v4729, 0.0
        %v4762 = vmax.f32 %v4730, 0.0
        %v4763 = vmax.f32 %v4731, 0.0
        %v4764 = vmax.f32 %v4732, 0.0
        %v4765 = vmax.f32 %v4733, 0.0
        %v4766 = vmax.f32 %v4734, 0.0
        %v4767 = vmax.f32 %v4735, 0.0
        %v4768 = vmax.f32 %v4736, 0.0
        %v4769 = vmax.f32 %v4737, 0.0
        %v4770 = vmax.f32 %v4738, 0.0
        %v4771 = vmax.f32 %v4739, 0.0
        %v4772 = vcombine.low %v4740, %v4744
        %v4773 = vcombine.high %v4740, %v4744
        %v4775 = vunpack.c.l.s4 1983009808
        %v4776 = vunpack.c.0.s8 %v4775
        %v4777 = vlaneseq
        %v4778 = vshrl.u32 %v4777, 7
        %v4779 = vsub.s32 %v4776, %v4778
        %v4780 = vrot.slane %v4772, %v4779
        %v4782 = vunpack.c.l.s4 1983009808
        %v4783 = vunpack.c.0.s8 %v4782
        %v4784 = vlaneseq
        %v4785 = vshrl.u32 %v4784, 7
        %v4786 = vsub.s32 %v4783, %v4785
        %v4787 = vrot.slane %v4773, %v4786
        %v4788 = vcombine.low %v4742, %v4746
        %v4789 = vcombine.high %v4742, %v4746
        %v4791 = vunpack.c.l.s4 1983009808
        %v4792 = vunpack.c.0.s8 %v4791
        %v4793 = vlaneseq
        %v4794 = vshrl.u32 %v4793, 7
        %v4795 = vsub.s32 %v4792, %v4794
        %v4796 = vrot.slane %v4788, %v4795
        %v4798 = vunpack.c.l.s4 1983009808
        %v4799 = vunpack.c.0.s8 %v4798
        %v4800 = vlaneseq
        %v4801 = vshrl.u32 %v4800, 7
        %v4802 = vsub.s32 %v4799, %v4801
        %v4803 = vrot.slane %v4789, %v4802
        %v4804 = vcombine.low %v4748, %v4752
        %v4805 = vcombine.high %v4748, %v4752
        %v4807 = vunpack.c.l.s4 1983009808
        %v4808 = vunpack.c.0.s8 %v4807
        %v4809 = vlaneseq
        %v4810 = vshrl.u32 %v4809, 7
        %v4811 = vsub.s32 %v4808, %v4810
        %v4812 = vrot.slane %v4804, %v4811
        %v4814 = vunpack.c.l.s4 1983009808
        %v4815 = vunpack.c.0.s8 %v4814
        %v4816 = vlaneseq
        %v4817 = vshrl.u32 %v4816, 7
        %v4818 = vsub.s32 %v4815, %v4817
        %v4819 = vrot.slane %v4805, %v4818
        %v4820 = vcombine.low %v4750, %v4754
        %v4821 = vcombine.high %v4750, %v4754
        %v4823 = vunpack.c.l.s4 1983009808
        %v4824 = vunpack.c.0.s8 %v4823
        %v4825 = vlaneseq
        %v4826 = vshrl.u32 %v4825, 7
        %v4827 = vsub.s32 %v4824, %v4826
        %v4828 = vrot.slane %v4820, %v4827
        %v4830 = vunpack.c.l.s4 1983009808
        %v4831 = vunpack.c.0.s8 %v4830
        %v4832 = vlaneseq
        %v4833 = vshrl.u32 %v4832, 7
        %v4834 = vsub.s32 %v4831, %v4833
        %v4835 = vrot.slane %v4821, %v4834
        %v4836 = vcombine.low %v4780, %v4796
        %v4837 = vcombine.high %v4780, %v4796
        %v4839 = vunpack.c.l.s4 1934713408
        %v4840 = vunpack.c.0.s8 %v4839
        %v4841 = vlaneseq
        %v4842 = vshrl.u32 %v4841, 7
        %v4843 = vsub.s32 %v4840, %v4842
        %v4844 = vrot.slane %v4836, %v4843
        %v4846 = vunpack.c.l.s4 1934713408
        %v4847 = vunpack.c.0.s8 %v4846
        %v4848 = vlaneseq
        %v4849 = vshrl.u32 %v4848, 7
        %v4850 = vsub.s32 %v4847, %v4849
        %v4851 = vrot.slane %v4837, %v4850
        %v4852 = vcombine.low %v4787, %v4803
        %v4853 = vcombine.high %v4787, %v4803
        %v4855 = vunpack.c.l.s4 1934713408
        %v4856 = vunpack.c.0.s8 %v4855
        %v4857 = vlaneseq
        %v4858 = vshrl.u32 %v4857, 7
        %v4859 = vsub.s32 %v4856, %v4858
        %v4860 = vrot.slane %v4852, %v4859
        %v4862 = vunpack.c.l.s4 1934713408
        %v4863 = vunpack.c.0.s8 %v4862
        %v4864 = vlaneseq
        %v4865 = vshrl.u32 %v4864, 7
        %v4866 = vsub.s32 %v4863, %v4865
        %v4867 = vrot.slane %v4853, %v4866
        %v4868 = vcombine.low %v4812, %v4828
        %v4869 = vcombine.high %v4812, %v4828
        %v4871 = vunpack.c.l.s4 1934713408
        %v4872 = vunpack.c.0.s8 %v4871
        %v4873 = vlaneseq
        %v4874 = vshrl.u32 %v4873, 7
        %v4875 = vsub.s32 %v4872, %v4874
        %v4876 = vrot.slane %v4868, %v4875
        %v4878 = vunpack.c.l.s4 1934713408
        %v4879 = vunpack.c.0.s8 %v4878
        %v4880 = vlaneseq
        %v4881 = vshrl.u32 %v4880, 7
        %v4882 = vsub.s32 %v4879, %v4881
        %v4883 = vrot.slane %v4869, %v4882
        %v4884 = vcombine.low %v4819, %v4835
        %v4885 = vcombine.high %v4819, %v4835
        %v4887 = vunpack.c.l.s4 1934713408
        %v4888 = vunpack.c.0.s8 %v4887
        %v4889 = vlaneseq
        %v4890 = vshrl.u32 %v4889, 7
        %v4891 = vsub.s32 %v4888, %v4890
        %v4892 = vrot.slane %v4884, %v4891
        %v4894 = vunpack.c.l.s4 1934713408
        %v4895 = vunpack.c.0.s8 %v4894
        %v4896 = vlaneseq
        %v4897 = vshrl.u32 %v4896, 7
        %v4898 = vsub.s32 %v4895, %v4897
        %v4899 = vrot.slane %v4885, %v4898
        %v4900 = vcombine.low %v4844, %v4876
        %v4901 = vcombine.high %v4844, %v4876
        %v4902 = vcombine.low %v4851, %v4883
        %v4903 = vcombine.high %v4851, %v4883
        %v4904 = vcombine.low %v4860, %v4892
        %v4905 = vcombine.high %v4860, %v4892
        %v4906 = vcombine.low %v4867, %v4899
        %v4907 = vcombine.high %v4867, %v4899
        %v4908 = vcombine.low %v4756, %v4760
        %v4909 = vcombine.high %v4756, %v4760
        %v4911 = vunpack.c.l.s4 1983009808
        %v4912 = vunpack.c.0.s8 %v4911
        %v4913 = vlaneseq
        %v4914 = vshrl.u32 %v4913, 7
        %v4915 = vsub.s32 %v4912, %v4914
        %v4916 = vrot.slane %v4908, %v4915
        %v4918 = vunpack.c.l.s4 1983009808
        %v4919 = vunpack.c.0.s8 %v4918
        %v4920 = vlaneseq
        %v4921 = vshrl.u32 %v4920, 7
        %v4922 = vsub.s32 %v4919, %v4921
        %v4923 = vrot.slane %v4909, %v4922
        %v4924 = vcombine.low %v4758, %v4762
        %v4925 = vcombine.high %v4758, %v4762
        %v4927 = vunpack.c.l.s4 1983009808
        %v4928 = vunpack.c.0.s8 %v4927
        %v4929 = vlaneseq
        %v4930 = vshrl.u32 %v4929, 7
        %v4931 = vsub.s32 %v4928, %v4930
        %v4932 = vrot.slane %v4924, %v4931
        %v4934 = vunpack.c.l.s4 1983009808
        %v4935 = vunpack.c.0.s8 %v4934
        %v4936 = vlaneseq
        %v4937 = vshrl.u32 %v4936, 7
        %v4938 = vsub.s32 %v4935, %v4937
        %v4939 = vrot.slane %v4925, %v4938
        %v4940 = vcombine.low %v4764, %v4768
        %v4941 = vcombine.high %v4764, %v4768
        %v4943 = vunpack.c.l.s4 1983009808
        %v4944 = vunpack.c.0.s8 %v4943
        %v4945 = vlaneseq
        %v4946 = vshrl.u32 %v4945, 7
        %v4947 = vsub.s32 %v4944, %v4946
        %v4948 = vrot.slane %v4940, %v4947
        %v4950 = vunpack.c.l.s4 1983009808
        %v4951 = vunpack.c.0.s8 %v4950
        %v4952 = vlaneseq
        %v4953 = vshrl.u32 %v4952, 7
        %v4954 = vsub.s32 %v4951, %v4953
        %v4955 = vrot.slane %v4941, %v4954
        %v4956 = vcombine.low %v4766, %v4770
        %v4957 = vcombine.high %v4766, %v4770
        %v4959 = vunpack.c.l.s4 1983009808
        %v4960 = vunpack.c.0.s8 %v4959
        %v4961 = vlaneseq
        %v4962 = vshrl.u32 %v4961, 7
        %v4963 = vsub.s32 %v4960, %v4962
        %v4964 = vrot.slane %v4956, %v4963
        %v4966 = vunpack.c.l.s4 1983009808
        %v4967 = vunpack.c.0.s8 %v4966
        %v4968 = vlaneseq
        %v4969 = vshrl.u32 %v4968, 7
        %v4970 = vsub.s32 %v4967, %v4969
        %v4971 = vrot.slane %v4957, %v4970
        %v4972 = vcombine.low %v4916, %v4932
        %v4973 = vcombine.high %v4916, %v4932
        %v4975 = vunpack.c.l.s4 1934713408
        %v4976 = vunpack.c.0.s8 %v4975
        %v4977 = vlaneseq
        %v4978 = vshrl.u32 %v4977, 7
        %v4979 = vsub.s32 %v4976, %v4978
        %v4980 = vrot.slane %v4972, %v4979
        %v4982 = vunpack.c.l.s4 1934713408
        %v4983 = vunpack.c.0.s8 %v4982
        %v4984 = vlaneseq
        %v4985 = vshrl.u32 %v4984, 7
        %v4986 = vsub.s32 %v4983, %v4985
        %v4987 = vrot.slane %v4973, %v4986
        %v4988 = vcombine.low %v4923, %v4939
        %v4989 = vcombine.high %v4923, %v4939
        %v4991 = vunpack.c.l.s4 1934713408
        %v4992 = vunpack.c.0.s8 %v4991
        %v4993 = vlaneseq
        %v4994 = vshrl.u32 %v4993, 7
        %v4995 = vsub.s32 %v4992, %v4994
        %v4996 = vrot.slane %v4988, %v4995
        %v4998 = vunpack.c.l.s4 1934713408
        %v4999 = vunpack.c.0.s8 %v4998
        %v5000 = vlaneseq
        %v5001 = vshrl.u32 %v5000, 7
        %v5002 = vsub.s32 %v4999, %v5001
        %v5003 = vrot.slane %v4989, %v5002
        %v5004 = vcombine.low %v4948, %v4964
        %v5005 = vcombine.high %v4948, %v4964
        %v5007 = vunpack.c.l.s4 1934713408
        %v5008 = vunpack.c.0.s8 %v5007
        %v5009 = vlaneseq
        %v5010 = vshrl.u32 %v5009, 7
        %v5011 = vsub.s32 %v5008, %v5010
        %v5012 = vrot.slane %v5004, %v5011
        %v5014 = vunpack.c.l.s4 1934713408
        %v5015 = vunpack.c.0.s8 %v5014
        %v5016 = vlaneseq
        %v5017 = vshrl.u32 %v5016, 7
        %v5018 = vsub.s32 %v5015, %v5017
        %v5019 = vrot.slane %v5005, %v5018
        %v5020 = vcombine.low %v4955, %v4971
        %v5021 = vcombine.high %v4955, %v4971
        %v5023 = vunpack.c.l.s4 1934713408
        %v5024 = vunpack.c.0.s8 %v5023
        %v5025 = vlaneseq
        %v5026 = vshrl.u32 %v5025, 7
        %v5027 = vsub.s32 %v5024, %v5026
        %v5028 = vrot.slane %v5020, %v5027
        %v5030 = vunpack.c.l.s4 1934713408
        %v5031 = vunpack.c.0.s8 %v5030
        %v5032 = vlaneseq
        %v5033 = vshrl.u32 %v5032, 7
        %v5034 = vsub.s32 %v5031, %v5033
        %v5035 = vrot.slane %v5021, %v5034
        %v5036 = vcombine.low %v4980, %v5012
        %v5037 = vcombine.high %v4980, %v5012
        %v5038 = vcombine.low %v4987, %v5019
        %v5039 = vcombine.high %v4987, %v5019
        %v5040 = vcombine.low %v4996, %v5028
        %v5041 = vcombine.high %v4996, %v5028
        %v5042 = vcombine.low %v5003, %v5035
        %v5043 = vcombine.high %v5003, %v5035
        %v5044 = vcombine.low %v4741, %v4745
        %v5045 = vcombine.high %v4741, %v4745
        %v5047 = vunpack.c.l.s4 1983009808
        %v5048 = vunpack.c.0.s8 %v5047
        %v5049 = vlaneseq
        %v5050 = vshrl.u32 %v5049, 7
        %v5051 = vsub.s32 %v5048, %v5050
        %v5052 = vrot.slane %v5044, %v5051
        %v5054 = vunpack.c.l.s4 1983009808
        %v5055 = vunpack.c.0.s8 %v5054
        %v5056 = vlaneseq
        %v5057 = vshrl.u32 %v5056, 7
        %v5058 = vsub.s32 %v5055, %v5057
        %v5059 = vrot.slane %v5045, %v5058
        %v5060 = vcombine.low %v4743, %v4747
        %v5061 = vcombine.high %v4743, %v4747
        %v5063 = vunpack.c.l.s4 1983009808
        %v5064 = vunpack.c.0.s8 %v5063
        %v5065 = vlaneseq
        %v5066 = vshrl.u32 %v5065, 7
        %v5067 = vsub.s32 %v5064, %v5066
        %v5068 = vrot.slane %v5060, %v5067
        %v5070 = vunpack.c.l.s4 1983009808
        %v5071 = vunpack.c.0.s8 %v5070
        %v5072 = vlaneseq
        %v5073 = vshrl.u32 %v5072, 7
        %v5074 = vsub.s32 %v5071, %v5073
        %v5075 = vrot.slane %v5061, %v5074
        %v5076 = vcombine.low %v4749, %v4753
        %v5077 = vcombine.high %v4749, %v4753
        %v5079 = vunpack.c.l.s4 1983009808
        %v5080 = vunpack.c.0.s8 %v5079
        %v5081 = vlaneseq
        %v5082 = vshrl.u32 %v5081, 7
        %v5083 = vsub.s32 %v5080, %v5082
        %v5084 = vrot.slane %v5076, %v5083
        %v5086 = vunpack.c.l.s4 1983009808
        %v5087 = vunpack.c.0.s8 %v5086
        %v5088 = vlaneseq
        %v5089 = vshrl.u32 %v5088, 7
        %v5090 = vsub.s32 %v5087, %v5089
        %v5091 = vrot.slane %v5077, %v5090
        %v5092 = vcombine.low %v4751, %v4755
        %v5093 = vcombine.high %v4751, %v4755
        %v5095 = vunpack.c.l.s4 1983009808
        %v5096 = vunpack.c.0.s8 %v5095
        %v5097 = vlaneseq
        %v5098 = vshrl.u32 %v5097, 7
        %v5099 = vsub.s32 %v5096, %v5098
        %v5100 = vrot.slane %v5092, %v5099
        %v5102 = vunpack.c.l.s4 1983009808
        %v5103 = vunpack.c.0.s8 %v5102
        %v5104 = vlaneseq
        %v5105 = vshrl.u32 %v5104, 7
        %v5106 = vsub.s32 %v5103, %v5105
        %v5107 = vrot.slane %v5093, %v5106
        %v5108 = vcombine.low %v5052, %v5068
        %v5109 = vcombine.high %v5052, %v5068
        %v5111 = vunpack.c.l.s4 1934713408
        %v5112 = vunpack.c.0.s8 %v5111
        %v5113 = vlaneseq
        %v5114 = vshrl.u32 %v5113, 7
        %v5115 = vsub.s32 %v5112, %v5114
        %v5116 = vrot.slane %v5108, %v5115
        %v5118 = vunpack.c.l.s4 1934713408
        %v5119 = vunpack.c.0.s8 %v5118
        %v5120 = vlaneseq
        %v5121 = vshrl.u32 %v5120, 7
        %v5122 = vsub.s32 %v5119, %v5121
        %v5123 = vrot.slane %v5109, %v5122
        %v5124 = vcombine.low %v5059, %v5075
        %v5125 = vcombine.high %v5059, %v5075
        %v5127 = vunpack.c.l.s4 1934713408
        %v5128 = vunpack.c.0.s8 %v5127
        %v5129 = vlaneseq
        %v5130 = vshrl.u32 %v5129, 7
        %v5131 = vsub.s32 %v5128, %v5130
        %v5132 = vrot.slane %v5124, %v5131
        %v5134 = vunpack.c.l.s4 1934713408
        %v5135 = vunpack.c.0.s8 %v5134
        %v5136 = vlaneseq
        %v5137 = vshrl.u32 %v5136, 7
        %v5138 = vsub.s32 %v5135, %v5137
        %v5139 = vrot.slane %v5125, %v5138
        %v5140 = vcombine.low %v5084, %v5100
        %v5141 = vcombine.high %v5084, %v5100
        %v5143 = vunpack.c.l.s4 1934713408
        %v5144 = vunpack.c.0.s8 %v5143
        %v5145 = vlaneseq
        %v5146 = vshrl.u32 %v5145, 7
        %v5147 = vsub.s32 %v5144, %v5146
        %v5148 = vrot.slane %v5140, %v5147
        %v5150 = vunpack.c.l.s4 1934713408
        %v5151 = vunpack.c.0.s8 %v5150
        %v5152 = vlaneseq
        %v5153 = vshrl.u32 %v5152, 7
        %v5154 = vsub.s32 %v5151, %v5153
        %v5155 = vrot.slane %v5141, %v5154
        %v5156 = vcombine.low %v5091, %v5107
        %v5157 = vcombine.high %v5091, %v5107
        %v5159 = vunpack.c.l.s4 1934713408
        %v5160 = vunpack.c.0.s8 %v5159
        %v5161 = vlaneseq
        %v5162 = vshrl.u32 %v5161, 7
        %v5163 = vsub.s32 %v5160, %v5162
        %v5164 = vrot.slane %v5156, %v5163
        %v5166 = vunpack.c.l.s4 1934713408
        %v5167 = vunpack.c.0.s8 %v5166
        %v5168 = vlaneseq
        %v5169 = vshrl.u32 %v5168, 7
        %v5170 = vsub.s32 %v5167, %v5169
        %v5171 = vrot.slane %v5157, %v5170
        %v5172 = vcombine.low %v5116, %v5148
        %v5173 = vcombine.high %v5116, %v5148
        %v5174 = vcombine.low %v5123, %v5155
        %v5175 = vcombine.high %v5123, %v5155
        %v5176 = vcombine.low %v5132, %v5164
        %v5177 = vcombine.high %v5132, %v5164
        %v5178 = vcombine.low %v5139, %v5171
        %v5179 = vcombine.high %v5139, %v5171
        %v5180 = vcombine.low %v4757, %v4761
        %v5181 = vcombine.high %v4757, %v4761
        %v5183 = vunpack.c.l.s4 1983009808
        %v5184 = vunpack.c.0.s8 %v5183
        %v5185 = vlaneseq
        %v5186 = vshrl.u32 %v5185, 7
        %v5187 = vsub.s32 %v5184, %v5186
        %v5188 = vrot.slane %v5180, %v5187
        %v5190 = vunpack.c.l.s4 1983009808
        %v5191 = vunpack.c.0.s8 %v5190
        %v5192 = vlaneseq
        %v5193 = vshrl.u32 %v5192, 7
        %v5194 = vsub.s32 %v5191, %v5193
        %v5195 = vrot.slane %v5181, %v5194
        %v5196 = vcombine.low %v4759, %v4763
        %v5197 = vcombine.high %v4759, %v4763
        %v5199 = vunpack.c.l.s4 1983009808
        %v5200 = vunpack.c.0.s8 %v5199
        %v5201 = vlaneseq
        %v5202 = vshrl.u32 %v5201, 7
        %v5203 = vsub.s32 %v5200, %v5202
        %v5204 = vrot.slane %v5196, %v5203
        %v5206 = vunpack.c.l.s4 1983009808
        %v5207 = vunpack.c.0.s8 %v5206
        %v5208 = vlaneseq
        %v5209 = vshrl.u32 %v5208, 7
        %v5210 = vsub.s32 %v5207, %v5209
        %v5211 = vrot.slane %v5197, %v5210
        %v5212 = vcombine.low %v4765, %v4769
        %v5213 = vcombine.high %v4765, %v4769
        %v5215 = vunpack.c.l.s4 1983009808
        %v5216 = vunpack.c.0.s8 %v5215
        %v5217 = vlaneseq
        %v5218 = vshrl.u32 %v5217, 7
        %v5219 = vsub.s32 %v5216, %v5218
        %v5220 = vrot.slane %v5212, %v5219
        %v5222 = vunpack.c.l.s4 1983009808
        %v5223 = vunpack.c.0.s8 %v5222
        %v5224 = vlaneseq
        %v5225 = vshrl.u32 %v5224, 7
        %v5226 = vsub.s32 %v5223, %v5225
        %v5227 = vrot.slane %v5213, %v5226
        %v5228 = vcombine.low %v4767, %v4771
        %v5229 = vcombine.high %v4767, %v4771
        %v5231 = vunpack.c.l.s4 1983009808
        %v5232 = vunpack.c.0.s8 %v5231
        %v5233 = vlaneseq
        %v5234 = vshrl.u32 %v5233, 7
        %v5235 = vsub.s32 %v5232, %v5234
        %v5236 = vrot.slane %v5228, %v5235
        %v5238 = vunpack.c.l.s4 1983009808
        %v5239 = vunpack.c.0.s8 %v5238
        %v5240 = vlaneseq
        %v5241 = vshrl.u32 %v5240, 7
        %v5242 = vsub.s32 %v5239, %v5241
        %v5243 = vrot.slane %v5229, %v5242
        %v5244 = vcombine.low %v5188, %v5204
        %v5245 = vcombine.high %v5188, %v5204
        %v5247 = vunpack.c.l.s4 1934713408
        %v5248 = vunpack.c.0.s8 %v5247
        %v5249 = vlaneseq
        %v5250 = vshrl.u32 %v5249, 7
        %v5251 = vsub.s32 %v5248, %v5250
        %v5252 = vrot.slane %v5244, %v5251
        %v5254 = vunpack.c.l.s4 1934713408
        %v5255 = vunpack.c.0.s8 %v5254
        %v5256 = vlaneseq
        %v5257 = vshrl.u32 %v5256, 7
        %v5258 = vsub.s32 %v5255, %v5257
        %v5259 = vrot.slane %v5245, %v5258
        %v5260 = vcombine.low %v5195, %v5211
        %v5261 = vcombine.high %v5195, %v5211
        %v5263 = vunpack.c.l.s4 1934713408
        %v5264 = vunpack.c.0.s8 %v5263
        %v5265 = vlaneseq
        %v5266 = vshrl.u32 %v5265, 7
        %v5267 = vsub.s32 %v5264, %v5266
        %v5268 = vrot.slane %v5260, %v5267
        %v5270 = vunpack.c.l.s4 1934713408
        %v5271 = vunpack.c.0.s8 %v5270
        %v5272 = vlaneseq
        %v5273 = vshrl.u32 %v5272, 7
        %v5274 = vsub.s32 %v5271, %v5273
        %v5275 = vrot.slane %v5261, %v5274
        %v5276 = vcombine.low %v5220, %v5236
        %v5277 = vcombine.high %v5220, %v5236
        %v5279 = vunpack.c.l.s4 1934713408
        %v5280 = vunpack.c.0.s8 %v5279
        %v5281 = vlaneseq
        %v5282 = vshrl.u32 %v5281, 7
        %v5283 = vsub.s32 %v5280, %v5282
        %v5284 = vrot.slane %v5276, %v5283
        %v5286 = vunpack.c.l.s4 1934713408
        %v5287 = vunpack.c.0.s8 %v5286
        %v5288 = vlaneseq
        %v5289 = vshrl.u32 %v5288, 7
        %v5290 = vsub.s32 %v5287, %v5289
        %v5291 = vrot.slane %v5277, %v5290
        %v5292 = vcombine.low %v5227, %v5243
        %v5293 = vcombine.high %v5227, %v5243
        %v5295 = vunpack.c.l.s4 1934713408
        %v5296 = vunpack.c.0.s8 %v5295
        %v5297 = vlaneseq
        %v5298 = vshrl.u32 %v5297, 7
        %v5299 = vsub.s32 %v5296, %v5298
        %v5300 = vrot.slane %v5292, %v5299
        %v5302 = vunpack.c.l.s4 1934713408
        %v5303 = vunpack.c.0.s8 %v5302
        %v5304 = vlaneseq
        %v5305 = vshrl.u32 %v5304, 7
        %v5306 = vsub.s32 %v5303, %v5305
        %v5307 = vrot.slane %v5293, %v5306
        %v5308 = vcombine.low %v5252, %v5284
        %v5309 = vcombine.high %v5252, %v5284
        %v5310 = vcombine.low %v5259, %v5291
        %v5311 = vcombine.high %v5259, %v5291
        %v5312 = vcombine.low %v5268, %v5300
        %v5313 = vcombine.high %v5268, %v5300
        %v5314 = vcombine.low %v5275, %v5307
        %v5315 = vcombine.high %v5275, %v5307
        %5318 = vrot.lane.b32.xlu0 %v4901, 16
        %v5319 = vpop.permute.xlu0 %5318
        %5320 = vrot.lane.b32.xlu0 %v5037, 16
        %v5321 = vpop.permute.xlu0 %5320
        %5326 = vrot.lane.b32.xlu0 %v4902, 32
        %v5327 = vpop.permute.xlu0 %5326
        %5328 = vrot.lane.b32.xlu0 %v5038, 32
        %v5329 = vpop.permute.xlu0 %5328
        %5334 = vrot.lane.b32.xlu0 %v4903, 48
        %v5335 = vpop.permute.xlu0 %5334
        %5336 = vrot.lane.b32.xlu0 %v5039, 48
        %v5337 = vpop.permute.xlu0 %5336
        %5342 = vrot.lane.b32.xlu0 %v4904, 64
        %v5343 = vpop.permute.xlu0 %5342
        %5344 = vrot.lane.b32.xlu0 %v5040, 64
        %v5345 = vpop.permute.xlu0 %5344
        %5350 = vrot.lane.b32.xlu0 %v4905, 80
        %v5351 = vpop.permute.xlu0 %5350
        %5352 = vrot.lane.b32.xlu0 %v5041, 80
        %v5353 = vpop.permute.xlu0 %5352
        %5358 = vrot.lane.b32.xlu0 %v4906, 96
        %v5359 = vpop.permute.xlu0 %5358
        %5360 = vrot.lane.b32.xlu0 %v5042, 96
        %v5361 = vpop.permute.xlu0 %5360
        %5366 = vrot.lane.b32.xlu0 %v4907, 112
        %v5367 = vpop.permute.xlu0 %5366
        %5368 = vrot.lane.b32.xlu0 %v5043, 112
        %v5369 = vpop.permute.xlu0 %5368
        %5374 = vrot.lane.b32.xlu0 %v5173, 16
        %v5375 = vpop.permute.xlu0 %5374
        %5376 = vrot.lane.b32.xlu0 %v5309, 16
        %v5377 = vpop.permute.xlu0 %5376
        %5382 = vrot.lane.b32.xlu0 %v5174, 32
        %v5383 = vpop.permute.xlu0 %5382
        %5384 = vrot.lane.b32.xlu0 %v5310, 32
        %v5385 = vpop.permute.xlu0 %5384
        %5390 = vrot.lane.b32.xlu0 %v5175, 48
        %v5391 = vpop.permute.xlu0 %5390
        %5392 = vrot.lane.b32.xlu0 %v5311, 48
        %v5393 = vpop.permute.xlu0 %5392
        %5398 = vrot.lane.b32.xlu0 %v5176, 64
        %v5399 = vpop.permute.xlu0 %5398
        %5400 = vrot.lane.b32.xlu0 %v5312, 64
        %v5401 = vpop.permute.xlu0 %5400
        %5406 = vrot.lane.b32.xlu0 %v5177, 80
        %v5407 = vpop.permute.xlu0 %5406
        %5408 = vrot.lane.b32.xlu0 %v5313, 80
        %v5409 = vpop.permute.xlu0 %5408
        %5414 = vrot.lane.b32.xlu0 %v5178, 96
        %v5415 = vpop.permute.xlu0 %5414
        %5416 = vrot.lane.b32.xlu0 %v5314, 96
        %v5417 = vpop.permute.xlu0 %5416
        %5422 = vrot.lane.b32.xlu0 %v5179, 112
        %v5423 = vpop.permute.xlu0 %5422
        %5424 = vrot.lane.b32.xlu0 %v5315, 112
        %v5425 = vpop.permute.xlu0 %5424
        %v5428 = vsel %vm3067, %v4900, %v5319
        %v5429 = vsel %vm3067, %v5036, %v5321
        %v5430 = vsel %vm546, %v5428, %v5327
        %v5431 = vsel %vm546, %v5429, %v5329
        %vm5432 = vcmask 392192
        %v5433 = vsel %vm5432, %v5430, %v5335
        %v5434 = vsel %vm5432, %v5431, %v5337
        %vm5435 = vcmask 523264
        %v5436 = vsel %vm5435, %v5433, %v5343
        %v5437 = vsel %vm5435, %v5434, %v5345
        %vm5438 = vcmask 654336
        %v5439 = vsel %vm5438, %v5436, %v5351
        %v5440 = vsel %vm5438, %v5437, %v5353
        %vm5441 = vcmask 785408
        %v5442 = vsel %vm5441, %v5439, %v5359
        %v5443 = vsel %vm5441, %v5440, %v5361
        %vm5444 = vcmask 916480
        %v5445 = vsel %vm5444, %v5442, %v5367
        %v5446 = vsel %vm5444, %v5443, %v5369
        %v5447 = vsel %vm3067, %v5172, %v5375
        %v5448 = vsel %vm3067, %v5308, %v5377
        %v5449 = vsel %vm546, %v5447, %v5383
        %v5450 = vsel %vm546, %v5448, %v5385
        %v5451 = vsel %vm5432, %v5449, %v5391
        %v5452 = vsel %vm5432, %v5450, %v5393
        %v5453 = vsel %vm5435, %v5451, %v5399
        %v5454 = vsel %vm5435, %v5452, %v5401
        %v5455 = vsel %vm5438, %v5453, %v5407
        %v5456 = vsel %vm5438, %v5454, %v5409
        %v5457 = vsel %vm5441, %v5455, %v5415
        %v5458 = vsel %vm5441, %v5456, %v5417
        %v5459 = vsel %vm5444, %v5457, %v5423
        %v5460 = vsel %vm5444, %v5458, %v5425
        %v5461 = vpack.c.bf16 %v5446, %v5445
        %v5462 = vpack.c.bf16 %v5460, %v5459
        %v5465 = vunpack.c.l.b16 %v5461
        %v5466 = vunpack.c.l.b16 %v5462
        %v5467 = vunpack.c.h.b16 %v5461
        %v5468 = vunpack.c.h.b16 %v5462
        %v5469 = vpack.c.b16 %v5466, %v5465
        %v5470 = vpack.c.b16 %v5468, %v5467
        %5473 = vst [vmem:[%s261] sm:$0xff] %v5469
        %5474 = vst [vmem:[%s261 + $0x8] sm:$0xff] %v5470
        %s5475 = sand.u32 %s135, 1
        %s5476 = scalar_lea.sflag [#allocation4], %s5475
        %s5477 = sand.u32 %s135, 1
        %s5478 = smul.addr %s5477, 16
        %s5479 = scalar_lea.vmem [#allocation8], %s5478
        // Predicated region
        $region49: #{tpu_custom_call.1} parent=35 // pred_check
          %p5480 = pneg %p145
        $region50: #{tpu_custom_call.1} parent=35 // pred_check_branch
          %5482 = sbr.rel (%p5480) target = $region52
        $region51: #{tpu_custom_call.1} parent=35 // pred_region
          %s5483 = smul.u32 2, %s27
          %s5485 = ssub.s32 256, 256
          %5486 = vsyncadd %s5476, %s5485
          %s5487 = smul.addr %s5483, 2
          %s5488 = smul.addr %s26, 4
          %s5489 = sadd.s32 %s5487, %s5488
          %s5490 = smul.addr %s5489, 64
          %s5491 = scalar_lea.hbm %s4, %s5490
          %s5492 = sshll.u32 %s5479, 4
          %s5493 = int_to_ptr.vmem [resolvable:$true] %s5492
          %5498 = dma.vmem_to_hbm [thread:$0]  %s5493, 256, %s5491, %s5476, 128, 128, 8
        $region52: #{tpu_custom_call.1} parent=35 // pred_fallthru
          _
      $region36: #{tpu_custom_call.1} parent=5 // pred_fallthru
        _
      %p5499 = scmp.le.s32.totalorder 2, %s17
      // Predicated region
      $region53: #{tpu_custom_call.1} parent=5 // pred_check
        %p5500 = pneg %p5499
      $region54: #{tpu_custom_call.1} parent=5 // pred_check_branch
        %5502 = sbr.rel (%p5500) target = $region56
      $region55: #{tpu_custom_call.1} parent=5 // pred_region
        %s5503 = ssub.s32 %s17, 2
        // Predicated region
        $region57: #{tpu_custom_call.1} parent=55 // pred_check
          %p5504 = pneg %p151
        $region58: #{tpu_custom_call.1} parent=55 // pred_check_branch
          %5506 = sbr.rel (%p5504) target = $region60
        $region59: #{tpu_custom_call.1} parent=55 // pred_region
          %s5507 = sand.u32 %s136, 1
          %s5508 = scalar_lea.sflag [#allocation4], %s5507
          %s5509 = sand.u32 %s136, 1
          %s5510 = smul.addr %s5509, 16
          %s5511 = scalar_lea.vmem [#allocation8], %s5510
          %5512 = dma.done %s5508, 256
        $region60: #{tpu_custom_call.1} parent=55 // pred_fallthru
          _
      $region56: #{tpu_custom_call.1} parent=5 // pred_fallthru
        _
    $region6: #{tpu_custom_call.1} parent=1 // loop_footer
      %s21 = sadd.s32 1, %s17
    $region7: #{tpu_custom_call.1} parent=1 // loop_footer_branch
      %16 = sbr.rel target = $region3
    $region8: #{tpu_custom_call.1} parent=1 // loop_exit
      _
    %5513 = vsyncpa [#allocation3], 1
    %s5514 = scalar_lea.sflag [#allocation3], 1
    %5515 = vsyncpa %s5514, 1
    %5516 = vsyncpa [#allocation6], 1
    %5517 = vsyncpa [#allocation4], 1
    %s5518 = scalar_lea.sflag [#allocation4], 1
    %5519 = vsyncpa %s5518, 1

</llo_original>
